<compile_context>
chip_gen: v6e
topology: v6e:2x2x1
jax: 0.10.0
libtpu: 0.0.40
codegen_flags: <defaults>
</compile_context>

<pallas_src>
import functools

import jax
import jax.numpy as jnp
import numpy as np
from jax import lax
from jax.experimental import pallas as pl
from jax.experimental.pallas import tpu as pltpu

KSIZE = 4
STRIDES = (2, 2, 3, 2)          # conv strides of the 4 classifier blocks
C_LANES = 128                   # lane-dense channel padding
EPS = 1e-5
NEG_SLOPE = 0.2
VMEM_LIMIT = 32 * 1024 * 1024   # v7x-safe scoped VMEM budget


def _round_up(x, m):
    return (x + m - 1) // m * m


# --------------------------------------------------------------------------
# Kernels
# --------------------------------------------------------------------------

def _fused_conv_bn_lrelu_kernel(x_ref, w_ref, gamma_ref, beta_ref, o_ref,
                                sum_ref, sq_ref, scale_ref, shift_ref,
                                *, m_total, neg_slope):
    """Two-phase fused conv(GEMM) + train-mode BN + LeakyReLU.

    grid = (2, num_m_tiles):
      phase 0: accumulate per-channel sum / sum-of-squares of the f32 GEMM output in VMEM
               scratch; at the last tile fold them into per-channel scale/shift.
      phase 1: recompute the GEMM tile and apply scale/shift + LeakyReLU, store bf16.
    """
    phase = pl.program_id(0)
    i = pl.program_id(1)
    nt = pl.num_programs(1)

    y = jnp.dot(x_ref[...], w_ref[...], preferred_element_type=jnp.float32)

    @pl.when(phase == 0)
    def _():
        s1 = jnp.sum(y, axis=0, keepdims=True)          # (1, C_pad) f32
        s2 = jnp.sum(y * y, axis=0, keepdims=True)      # (1, C_pad) f32

        @pl.when(i == 0)
        def _():
            sum_ref[...] = jnp.zeros_like(sum_ref)
            sq_ref[...] = jnp.zeros_like(sq_ref)

        sum_ref[...] += s1
        sq_ref[...] += s2

        @pl.when(i == nt - 1)
        def _():
            inv_m = jnp.float32(1.0 / m_total)
            mean = sum_ref[...] * inv_m
            var = jnp.maximum(sq_ref[...] * inv_m - mean * mean, 0.0)   # biased (train-mode BN)
            inv_std = lax.rsqrt(var + EPS)
            sc = gamma_ref[...] * inv_std
            scale_ref[...] = sc
            shift_ref[...] = beta_ref[...] - mean * sc

    @pl.when(phase == 1)
    def _():
        z = y * scale_ref[...] + shift_ref[...]
        o_ref[...] = jnp.where(z >= 0.0, z, neg_slope * z).astype(o_ref.dtype)


def _gemm_bias_kernel(x_ref, w_ref, b_ref, y_ref):
    """Final layer: conv-as-GEMM + bias, no BN / activation."""
    y = jnp.dot(x_ref[...], w_ref[...], preferred_element_type=jnp.float32)
    y_ref[...] = y + b_ref[...]


# --------------------------------------------------------------------------
# pallas_call wrappers
# --------------------------------------------------------------------------

def fused_conv_bn_lrelu(patches, w2, gamma, beta, *, m_total, tile_m):
    """patches: (M_pad, K) bf16, w2: (K, C_pad) bf16, gamma/beta: (1, C_pad) f32
       -> (M_pad, C_pad) bf16 activation."""
    m_pad, k = patches.shape
    c_pad = w2.shape[1]
    num_tiles = m_pad // tile_m
    kern = functools.partial(_fused_conv_bn_lrelu_kernel,
                             m_total=float(m_total), neg_slope=NEG_SLOPE)
    return pl.pallas_call(
        kern,
        grid=(2, num_tiles),
        in_specs=[pl.BlockSpec((tile_m, k), lambda p, i: (i, 0)),
                  pl.BlockSpec((k, c_pad), lambda p, i: (0, 0)),      # weights stay resident
                  pl.BlockSpec((1, c_pad), lambda p, i: (0, 0)),
                  pl.BlockSpec((1, c_pad), lambda p, i: (0, 0))],
        # phase 0 -> block 0 (stays resident, never written); phase 1 -> block i.
        out_specs=pl.BlockSpec((tile_m, c_pad), lambda p, i: (i * p, 0)),
        out_shape=jax.ShapeDtypeStruct((m_pad, c_pad), jnp.bfloat16),
        scratch_shapes=[pltpu.VMEM((1, c_pad), jnp.float32),   # sum
                        pltpu.VMEM((1, c_pad), jnp.float32),   # sum of squares
                        pltpu.VMEM((1, c_pad), jnp.float32),   # folded scale
                        pltpu.VMEM((1, c_pad), jnp.float32)],  # folded shift
        compiler_params=pltpu.CompilerParams(
            dimension_semantics=("arbitrary", "arbitrary"),
            vmem_limit_bytes=VMEM_LIMIT),
    )(patches, w2, gamma, beta)


def conv_gemm_bias(patches, w2, bias, *, tile_m):
    """Final layer GEMM: patches (M_pad, K) bf16, w2 (K, C_pad) bf16, bias (1, C_pad) f32."""
    m_pad, k = patches.shape
    c_pad = w2.shape[1]
    num_tiles = m_pad // tile_m
    return pl.pallas_call(
        _gemm_bias_kernel,
        grid=(num_tiles,),
        in_specs=[pl.BlockSpec((tile_m, k), lambda i: (i, 0)),
                  pl.BlockSpec((k, c_pad), lambda i: (0, 0)),
                  pl.BlockSpec((1, c_pad), lambda i: (0, 0))],
        out_specs=pl.BlockSpec((tile_m, c_pad), lambda i: (i, 0)),
        out_shape=jax.ShapeDtypeStruct((m_pad, c_pad), jnp.float32),
        compiler_params=pltpu.CompilerParams(
            dimension_semantics=("parallel",),
            vmem_limit_bytes=VMEM_LIMIT),
    )(patches, w2, bias)


# --------------------------------------------------------------------------
# im2col (NHWC, no transposes) and the forward pass
# --------------------------------------------------------------------------

def im2col_nhwc(x, k, stride):
    """x: (N, H, W, C) -> (N*Ho*Wo, k*k*C); column order is (kh, kw, c)."""
    n, h, w, c = x.shape
    ho = (h - k) // stride + 1
    wo = (w - k) // stride + 1
    cols = []
    for i in range(k):
        for j in range(k):
            cols.append(x[:, i:i + stride * ho:stride, j:j + stride * wo:stride, :])
    p = jnp.stack(cols, axis=3)                       # (N, Ho, Wo, k*k, C)
    p = p.reshape(n, ho, wo, k * k * c).reshape(n * ho * wo, k * k * c)
    return p, ho, wo


@jax.jit
def classifier_forward(image, params):
    """image: (N, C_in, H, W) f32 -> (N, n_classes) f32 (PyTorch-equivalent forward)."""
    n = image.shape[0]
    x = jnp.transpose(image, (0, 2, 3, 1))            # NCHW -> NHWC once at the boundary
    n_layers = len(params)
    out = None
    for idx, layer in enumerate(params):
        w, b = layer["w"], layer["b"]
        gamma, beta = layer["gamma"], layer["beta"]
        stride = STRIDES[idx]
        final = idx == n_layers - 1

        cout, cin, kh, kw = w.shape
        c_pad = _round_up(cout, C_LANES)

        # weights: OIHW -> (kh, kw, cin, cout) -> (K, C_out), zero-pad C to 128 lanes, bf16 operand
        w2 = jnp.transpose(w, (2, 3, 1, 0)).reshape(kh * kw * cin, cout)
        w2 = jnp.pad(w2, ((0, 0), (0, c_pad - cout))).astype(jnp.bfloat16)

        # im2col on the bf16 activation (halves patch HBM traffic).
        patches, ho, wo = im2col_nhwc(x.astype(jnp.bfloat16), kh, stride)
        m = n * ho * wo
        tile_m = min(512, _round_up(m, 64))
        m_pad = _round_up(m, tile_m)
        patches = jnp.pad(patches, ((0, m_pad - m), (0, 0)))   # zero rows: no effect on stats

        if final:
            b_pad = jnp.pad(b, (0, c_pad - cout)).reshape(1, c_pad).astype(jnp.float32)
            y = conv_gemm_bias(patches, w2, b_pad, tile_m=tile_m)
            out = y[:m, :cout].reshape(n, ho, wo, cout)
        else:
            # Bias skipped (cancelled by BN mean subtraction).
            gamma_pad = jnp.pad(gamma, (0, c_pad - cout)).reshape(1, c_pad).astype(jnp.float32)
            beta_pad = jnp.pad(beta, (0, c_pad - cout)).reshape(1, c_pad).astype(jnp.float32)
            act = fused_conv_bn_lrelu(patches, w2, gamma_pad, beta_pad,
                                      m_total=m, tile_m=tile_m)
            x = act[:m, :cout].reshape(n, ho, wo, cout)        # NHWC bf16 for the next layer

    # flatten in PyTorch (N, C, H, W) order only at the module boundary
    return jnp.transpose(out, (0, 3, 1, 2)).reshape(n, -1)


# --------------------------------------------------------------------------
# Parameters and plain-JAX reference (for the correctness self-check)
# --------------------------------------------------------------------------

def init_params(key, im_chan=3, n_classes=2, hidden_dim=16):
    cfgs = [(im_chan, hidden_dim), (hidden_dim, hidden_dim * 2),
            (hidden_dim * 2, hidden_dim * 4), (hidden_dim * 4, n_classes)]
    params = []
    for cin, cout in cfgs:
        key, kw_, kb_ = jax.random.split(key, 3)
        params.append(dict(
            w=0.05 * jax.random.normal(kw_, (cout, cin, KSIZE, KSIZE), jnp.float32),
            b=0.05 * jax.random.normal(kb_, (cout,), jnp.float32),
            gamma=jnp.ones((cout,), jnp.float32),
            beta=jnp.zeros((cout,), jnp.float32)))
    return params


def reference_forward(image, params):
    """lax.conv reference with the same bf16-operand / f32-accumulate numerics."""
    out = image
    n_layers = len(params)
    for idx, layer in enumerate(params):
        w, b = layer["w"], layer["b"]
        stride = STRIDES[idx]
        final = idx == n_layers - 1
        out = lax.conv_general_dilated(
            out.astype(jnp.bfloat16), w.astype(jnp.bfloat16),
            (stride, stride), "VALID",
            dimension_numbers=("NCHW", "OIHW", "NCHW"),
            preferred_element_type=jnp.float32)
        out = out + b.reshape(1, -1, 1, 1).astype(jnp.float32)
        if not final:
            mean = out.mean(axis=(0, 2, 3), keepdims=True)
            var = ((out - mean) ** 2).mean(axis=(0, 2, 3), keepdims=True)
            out = (out - mean) * lax.rsqrt(var + EPS)
            out = out * layer["gamma"].reshape(1, -1, 1, 1) \
                + layer["beta"].reshape(1, -1, 1, 1)
            out = jnp.where(out >= 0.0, out, NEG_SLOPE * out)
    return out.reshape(out.shape[0], -1)


if __name__ == "__main__":
    # Architecture (k=4 convs, strides 2,2,3,2) needs 64x64 spatial input to reach a 1x1
    # final feature map (CelebA-style). Small batch / hidden_dim keeps the example tiny.
    N, IM_CHAN, H, W = 2, 3, 64, 64
    N_CLASSES, HIDDEN = 2, 16

    key = jax.random.PRNGKey(0)
    key_x, key_p = jax.random.split(key)
    image = jax.random.normal(key_x, (N, IM_CHAN, H, W), jnp.float32)
    params = init_params(key_p, im_chan=IM_CHAN, n_classes=N_CLASSES, hidden_dim=HIDDEN)

    out = jax.block_until_ready(classifier_forward(image, params))
    ref = jax.block_until_ready(reference_forward(image, params))

    assert out.shape == (N, N_CLASSES), out.shape
    if not np.allclose(np.asarray(out), np.asarray(ref), atol=2e-2, rtol=2e-2):
        raise AssertionError("Pallas output does not match JAX reference")

    print("KERNEL_OK")
</pallas_src>

<mosaic_0001>
module attributes {stable_mosaic.version = 11 : i64} {
  func.func @_fused_conv_bn_lrelu_kernel(%arg0: i32, %arg1: i32, %arg2: memref<512x48xbf16, #tpu.memory_space<vmem>>, %arg3: memref<48x128xbf16, #tpu.memory_space<vmem>>, %arg4: memref<1x128xf32, #tpu.memory_space<vmem>>, %arg5: memref<1x128xf32, #tpu.memory_space<vmem>>, %arg6: memref<512x128xbf16, #tpu.memory_space<vmem>>, %arg7: memref<1x128xf32, #tpu.memory_space<vmem>>, %arg8: memref<1x128xf32, #tpu.memory_space<vmem>>, %arg9: memref<1x128xf32, #tpu.memory_space<vmem>>, %arg10: memref<1x128xf32, #tpu.memory_space<vmem>>) attributes {dimension_semantics = [#tpu.dimension_semantics<arbitrary>, #tpu.dimension_semantics<arbitrary>], iteration_bounds = array<i64: 2, 4>, scalar_prefetch = 0 : i64, scratch_operands = 4 : i64, tpu.core_type = #tpu.core_type<tc>, window_params = [{transform_indices = @transform_0, window_bounds = array<i64: 512, 48>}, {pipeline_mode = #tpu.pipeline_mode<synchronous>, transform_indices = @transform_1, window_bounds = array<i64: 48, 128>}, {pipeline_mode = #tpu.pipeline_mode<synchronous>, transform_indices = @transform_2, window_bounds = array<i64: 1, 128>}, {pipeline_mode = #tpu.pipeline_mode<synchronous>, transform_indices = @transform_3, window_bounds = array<i64: 1, 128>}, {transform_indices = @transform_4, window_bounds = array<i64: 512, 128>}]} {
    %c0 = arith.constant 0 : index
    %c0_0 = arith.constant 0 : index
    %0 = vector.load %arg2[%c0, %c0_0] : memref<512x48xbf16, #tpu.memory_space<vmem>>, vector<512x48xbf16>
    %c0_1 = arith.constant 0 : index
    %c0_2 = arith.constant 0 : index
    %1 = vector.load %arg3[%c0_1, %c0_2] : memref<48x128xbf16, #tpu.memory_space<vmem>>, vector<48x128xbf16>
    %cst = arith.constant dense<0.000000e+00> : vector<512x128xf32>
    %2 = tpu.matmul %0, %1, %cst {dimension_numbers = #tpu.dot_dimension_numbers<[1], [0], [0], [1], [0, 0, 1, 1], [], []>} : vector<512x48xbf16>, vector<48x128xbf16>, vector<512x128xf32> -> vector<512x128xf32>
    %c0_i32 = arith.constant 0 : i32
    %3 = arith.cmpi eq, %arg0, %c0_i32 : i32
    %4 = arith.extui %3 : i1 to i32
    %c0_i32_3 = arith.constant 0 : i32
    %5 = arith.cmpi ne, %4, %c0_i32_3 : i32
    scf.if %5 {
      %cst_5 = arith.constant dense<0.000000e+00> : vector<128xf32>
      %9 = vector.multi_reduction <add>, %2, %cst_5 [0] : vector<512x128xf32> to vector<128xf32>
      %10 = vector.shape_cast %9 : vector<128xf32> to vector<1x128xf32>
      %11 = arith.mulf %2, %2 : vector<512x128xf32>
      %cst_6 = arith.constant dense<0.000000e+00> : vector<128xf32>
      %12 = vector.multi_reduction <add>, %11, %cst_6 [0] : vector<512x128xf32> to vector<128xf32>
      %13 = vector.shape_cast %12 : vector<128xf32> to vector<1x128xf32>
      %c0_i32_7 = arith.constant 0 : i32
      %14 = arith.cmpi eq, %arg1, %c0_i32_7 : i32
      %15 = arith.extui %14 : i1 to i32
      %c0_i32_8 = arith.constant 0 : i32
      %16 = arith.cmpi ne, %15, %c0_i32_8 : i32
      scf.if %16 {
        %cst_18 = arith.constant 0.000000e+00 : f32
        %26 = vector.broadcast %cst_18 : f32 to vector<1x128xf32>
        %c0_19 = arith.constant 0 : index
        %c0_20 = arith.constant 0 : index
        %27 = vector.load %arg7[%c0_19, %c0_20] : memref<1x128xf32, #tpu.memory_space<vmem>>, vector<1x128xf32>
        tpu.vector_store %arg7[%c0_19, %c0_20], %26 {strides = array<i32>} : memref<1x128xf32, #tpu.memory_space<vmem>>, vector<1x128xf32>,
        %cst_21 = arith.constant 0.000000e+00 : f32
        %28 = vector.broadcast %cst_21 : f32 to vector<1x128xf32>
        %c0_22 = arith.constant 0 : index
        %c0_23 = arith.constant 0 : index
        %29 = vector.load %arg8[%c0_22, %c0_23] : memref<1x128xf32, #tpu.memory_space<vmem>>, vector<1x128xf32>
        tpu.vector_store %arg8[%c0_22, %c0_23], %28 {strides = array<i32>} : memref<1x128xf32, #tpu.memory_space<vmem>>, vector<1x128xf32>,
      } else {
      }
      %c0_9 = arith.constant 0 : index
      %c0_10 = arith.constant 0 : index
      %17 = vector.load %arg7[%c0_9, %c0_10] : memref<1x128xf32, #tpu.memory_space<vmem>>, vector<1x128xf32>
      %18 = arith.addf %17, %10 : vector<1x128xf32>
      %c0_11 = arith.constant 0 : index
      %c0_12 = arith.constant 0 : index
      %19 = vector.load %arg7[%c0_11, %c0_12] : memref<1x128xf32, #tpu.memory_space<vmem>>, vector<1x128xf32>
      tpu.vector_store %arg7[%c0_11, %c0_12], %18 {strides = array<i32>} : memref<1x128xf32, #tpu.memory_space<vmem>>, vector<1x128xf32>,
      %c0_13 = arith.constant 0 : index
      %c0_14 = arith.constant 0 : index
      %20 = vector.load %arg8[%c0_13, %c0_14] : memref<1x128xf32, #tpu.memory_space<vmem>>, vector<1x128xf32>
      %21 = arith.addf %20, %13 : vector<1x128xf32>
      %c0_15 = arith.constant 0 : index
      %c0_16 = arith.constant 0 : index
      %22 = vector.load %arg8[%c0_15, %c0_16] : memref<1x128xf32, #tpu.memory_space<vmem>>, vector<1x128xf32>
      tpu.vector_store %arg8[%c0_15, %c0_16], %21 {strides = array<i32>} : memref<1x128xf32, #tpu.memory_space<vmem>>, vector<1x128xf32>,
      %c3_i32 = arith.constant 3 : i32
      %23 = arith.cmpi eq, %arg1, %c3_i32 : i32
      %24 = arith.extui %23 : i1 to i32
      %c0_i32_17 = arith.constant 0 : i32
      %25 = arith.cmpi ne, %24, %c0_i32_17 : i32
      scf.if %25 {
        %c0_18 = arith.constant 0 : index
        %c0_19 = arith.constant 0 : index
        %26 = vector.load %arg7[%c0_18, %c0_19] : memref<1x128xf32, #tpu.memory_space<vmem>>, vector<1x128xf32>
        %cst_20 = arith.constant 5.20291389E-4 : f32
        %27 = vector.broadcast %cst_20 : f32 to vector<1x128xf32>
        %28 = arith.mulf %26, %27 : vector<1x128xf32>
        %c0_21 = arith.constant 0 : index
        %c0_22 = arith.constant 0 : index
        %29 = vector.load %arg8[%c0_21, %c0_22] : memref<1x128xf32, #tpu.memory_space<vmem>>, vector<1x128xf32>
        %cst_23 = arith.constant 5.20291389E-4 : f32
        %30 = vector.broadcast %cst_23 : f32 to vector<1x128xf32>
        %31 = arith.mulf %29, %30 : vector<1x128xf32>
        %32 = arith.mulf %28, %28 : vector<1x128xf32>
        %33 = arith.subf %31, %32 : vector<1x128xf32>
        %cst_24 = arith.constant 0.000000e+00 : f32
        %34 = vector.broadcast %cst_24 : f32 to vector<1x128xf32>
        %35 = arith.maximumf %33, %34 : vector<1x128xf32>
        %cst_25 = arith.constant 9.99999974E-6 : f32
        %36 = vector.broadcast %cst_25 : f32 to vector<1x128xf32>
        %37 = arith.addf %35, %36 : vector<1x128xf32>
        %38 = math.rsqrt %37 : vector<1x128xf32>
        %c0_26 = arith.constant 0 : index
        %c0_27 = arith.constant 0 : index
        %39 = vector.load %arg4[%c0_26, %c0_27] : memref<1x128xf32, #tpu.memory_space<vmem>>, vector<1x128xf32>
        %40 = arith.mulf %39, %38 : vector<1x128xf32>
        %c0_28 = arith.constant 0 : index
        %c0_29 = arith.constant 0 : index
        %41 = vector.load %arg9[%c0_28, %c0_29] : memref<1x128xf32, #tpu.memory_space<vmem>>, vector<1x128xf32>
        tpu.vector_store %arg9[%c0_28, %c0_29], %40 {strides = array<i32>} : memref<1x128xf32, #tpu.memory_space<vmem>>, vector<1x128xf32>,
        %c0_30 = arith.constant 0 : index
        %c0_31 = arith.constant 0 : index
        %42 = vector.load %arg5[%c0_30, %c0_31] : memref<1x128xf32, #tpu.memory_space<vmem>>, vector<1x128xf32>
        %43 = arith.mulf %28, %40 : vector<1x128xf32>
        %44 = arith.subf %42, %43 : vector<1x128xf32>
        %c0_32 = arith.constant 0 : index
        %c0_33 = arith.constant 0 : index
        %45 = vector.load %arg10[%c0_32, %c0_33] : memref<1x128xf32, #tpu.memory_space<vmem>>, vector<1x128xf32>
        tpu.vector_store %arg10[%c0_32, %c0_33], %44 {strides = array<i32>} : memref<1x128xf32, #tpu.memory_space<vmem>>, vector<1x128xf32>,
      } else {
      }
    } else {
    }
    %c1_i32 = arith.constant 1 : i32
    %6 = arith.cmpi eq, %arg0, %c1_i32 : i32
    %7 = arith.extui %6 : i1 to i32
    %c0_i32_4 = arith.constant 0 : i32
    %8 = arith.cmpi ne, %7, %c0_i32_4 : i32
    scf.if %8 {
      %c0_5 = arith.constant 0 : index
      %c0_6 = arith.constant 0 : index
      %9 = vector.load %arg9[%c0_5, %c0_6] : memref<1x128xf32, #tpu.memory_space<vmem>>, vector<1x128xf32>
      %10 = vector.broadcast %9 : vector<1x128xf32> to vector<512x128xf32>
      %11 = arith.mulf %2, %10 : vector<512x128xf32>
      %c0_7 = arith.constant 0 : index
      %c0_8 = arith.constant 0 : index
      %12 = vector.load %arg10[%c0_7, %c0_8] : memref<1x128xf32, #tpu.memory_space<vmem>>, vector<1x128xf32>
      %13 = vector.broadcast %12 : vector<1x128xf32> to vector<512x128xf32>
      %14 = arith.addf %11, %13 : vector<512x128xf32>
      %cst_9 = arith.constant 0.000000e+00 : f32
      %15 = vector.broadcast %cst_9 : f32 to vector<512x128xf32>
      %16 = arith.cmpf oge, %14, %15 : vector<512x128xf32>
      %cst_10 = arith.constant 2.000000e-01 : f32
      %17 = vector.broadcast %cst_10 : f32 to vector<512x128xf32>
      %18 = arith.mulf %17, %14 : vector<512x128xf32>
      %19 = arith.select %16, %14, %18 : vector<512x128xi1>, vector<512x128xf32>
      %20 = arith.truncf %19 : vector<512x128xf32> to vector<512x128xbf16>
      %c0_11 = arith.constant 0 : index
      %c0_12 = arith.constant 0 : index
      %21 = vector.load %arg6[%c0_11, %c0_12] : memref<512x128xbf16, #tpu.memory_space<vmem>>, vector<512x128xbf16>
      tpu.vector_store %arg6[%c0_11, %c0_12], %20 {strides = array<i32>} : memref<512x128xbf16, #tpu.memory_space<vmem>>, vector<512x128xbf16>,
    } else {
    }
    return
  }
  func.func @transform_0(%arg0: i32, %arg1: i32) -> (i32, i32) {
    %c0_i32 = arith.constant 0 : i32
    %c0_i32_0 = arith.constant 0 : i32
    return %arg1, %c0_i32 : i32, i32
  }
  func.func @transform_1(%arg0: i32, %arg1: i32) -> (i32, i32) {
    %c0_i32 = arith.constant 0 : i32
    %c0_i32_0 = arith.constant 0 : i32
    %c0_i32_1 = arith.constant 0 : i32
    return %c0_i32, %c0_i32_0 : i32, i32
  }
  func.func @transform_2(%arg0: i32, %arg1: i32) -> (i32, i32) {
    %c0_i32 = arith.constant 0 : i32
    %c0_i32_0 = arith.constant 0 : i32
    %c0_i32_1 = arith.constant 0 : i32
    return %c0_i32, %c0_i32_0 : i32, i32
  }
  func.func @transform_3(%arg0: i32, %arg1: i32) -> (i32, i32) {
    %c0_i32 = arith.constant 0 : i32
    %c0_i32_0 = arith.constant 0 : i32
    %c0_i32_1 = arith.constant 0 : i32
    return %c0_i32, %c0_i32_0 : i32, i32
  }
  func.func @transform_4(%arg0: i32, %arg1: i32) -> (i32, i32) {
    %0 = arith.muli %arg1, %arg0 : i32
    %c0_i32 = arith.constant 0 : i32
    %c0_i32_0 = arith.constant 0 : i32
    return %0, %c0_i32 : i32, i32
  }
}

module attributes {stable_mosaic.version = 11 : i64} {
  func.func @_fused_conv_bn_lrelu_kernel(%arg0: i32, %arg1: i32, %arg2: memref<448x256xbf16, #tpu.memory_space<vmem>>, %arg3: memref<256x128xbf16, #tpu.memory_space<vmem>>, %arg4: memref<1x128xf32, #tpu.memory_space<vmem>>, %arg5: memref<1x128xf32, #tpu.memory_space<vmem>>, %arg6: memref<448x128xbf16, #tpu.memory_space<vmem>>, %arg7: memref<1x128xf32, #tpu.memory_space<vmem>>, %arg8: memref<1x128xf32, #tpu.memory_space<vmem>>, %arg9: memref<1x128xf32, #tpu.memory_space<vmem>>, %arg10: memref<1x128xf32, #tpu.memory_space<vmem>>) attributes {dimension_semantics = [#tpu.dimension_semantics<arbitrary>, #tpu.dimension_semantics<arbitrary>], iteration_bounds = array<i64: 2, 1>, scalar_prefetch = 0 : i64, scratch_operands = 4 : i64, tpu.core_type = #tpu.core_type<tc>, window_params = [{transform_indices = @transform_0, window_bounds = array<i64: 448, 256>}, {pipeline_mode = #tpu.pipeline_mode<synchronous>, transform_indices = @transform_1, window_bounds = array<i64: 256, 128>}, {pipeline_mode = #tpu.pipeline_mode<synchronous>, transform_indices = @transform_2, window_bounds = array<i64: 1, 128>}, {pipeline_mode = #tpu.pipeline_mode<synchronous>, transform_indices = @transform_3, window_bounds = array<i64: 1, 128>}, {transform_indices = @transform_4, window_bounds = array<i64: 448, 128>}]} {
    %c0 = arith.constant 0 : index
    %c0_0 = arith.constant 0 : index
    %0 = vector.load %arg2[%c0, %c0_0] : memref<448x256xbf16, #tpu.memory_space<vmem>>, vector<448x256xbf16>
    %c0_1 = arith.constant 0 : index
    %c0_2 = arith.constant 0 : index
    %1 = vector.load %arg3[%c0_1, %c0_2] : memref<256x128xbf16, #tpu.memory_space<vmem>>, vector<256x128xbf16>
    %cst = arith.constant dense<0.000000e+00> : vector<448x128xf32>
    %2 = tpu.matmul %0, %1, %cst {dimension_numbers = #tpu.dot_dimension_numbers<[1], [0], [0], [1], [0, 0, 1, 1], [], []>} : vector<448x256xbf16>, vector<256x128xbf16>, vector<448x128xf32> -> vector<448x128xf32>
    %c0_i32 = arith.constant 0 : i32
    %3 = arith.cmpi eq, %arg0, %c0_i32 : i32
    %4 = arith.extui %3 : i1 to i32
    %c0_i32_3 = arith.constant 0 : i32
    %5 = arith.cmpi ne, %4, %c0_i32_3 : i32
    scf.if %5 {
      %cst_5 = arith.constant dense<0.000000e+00> : vector<128xf32>
      %9 = vector.multi_reduction <add>, %2, %cst_5 [0] : vector<448x128xf32> to vector<128xf32>
      %10 = vector.shape_cast %9 : vector<128xf32> to vector<1x128xf32>
      %11 = arith.mulf %2, %2 : vector<448x128xf32>
      %cst_6 = arith.constant dense<0.000000e+00> : vector<128xf32>
      %12 = vector.multi_reduction <add>, %11, %cst_6 [0] : vector<448x128xf32> to vector<128xf32>
      %13 = vector.shape_cast %12 : vector<128xf32> to vector<1x128xf32>
      %c0_i32_7 = arith.constant 0 : i32
      %14 = arith.cmpi eq, %arg1, %c0_i32_7 : i32
      %15 = arith.extui %14 : i1 to i32
      %c0_i32_8 = arith.constant 0 : i32
      %16 = arith.cmpi ne, %15, %c0_i32_8 : i32
      scf.if %16 {
        %cst_19 = arith.constant 0.000000e+00 : f32
        %26 = vector.broadcast %cst_19 : f32 to vector<1x128xf32>
        %c0_20 = arith.constant 0 : index
        %c0_21 = arith.constant 0 : index
        %27 = vector.load %arg7[%c0_20, %c0_21] : memref<1x128xf32, #tpu.memory_space<vmem>>, vector<1x128xf32>
        tpu.vector_store %arg7[%c0_20, %c0_21], %26 {strides = array<i32>} : memref<1x128xf32, #tpu.memory_space<vmem>>, vector<1x128xf32>,
        %cst_22 = arith.constant 0.000000e+00 : f32
        %28 = vector.broadcast %cst_22 : f32 to vector<1x128xf32>
        %c0_23 = arith.constant 0 : index
        %c0_24 = arith.constant 0 : index
        %29 = vector.load %arg8[%c0_23, %c0_24] : memref<1x128xf32, #tpu.memory_space<vmem>>, vector<1x128xf32>
        tpu.vector_store %arg8[%c0_23, %c0_24], %28 {strides = array<i32>} : memref<1x128xf32, #tpu.memory_space<vmem>>, vector<1x128xf32>,
      } else {
      }
      %c0_9 = arith.constant 0 : index
      %c0_10 = arith.constant 0 : index
      %17 = vector.load %arg7[%c0_9, %c0_10] : memref<1x128xf32, #tpu.memory_space<vmem>>, vector<1x128xf32>
      %18 = arith.addf %17, %10 : vector<1x128xf32>
      %c0_11 = arith.constant 0 : index
      %c0_12 = arith.constant 0 : index
      %19 = vector.load %arg7[%c0_11, %c0_12] : memref<1x128xf32, #tpu.memory_space<vmem>>, vector<1x128xf32>
      tpu.vector_store %arg7[%c0_11, %c0_12], %18 {strides = array<i32>} : memref<1x128xf32, #tpu.memory_space<vmem>>, vector<1x128xf32>,
      %c0_13 = arith.constant 0 : index
      %c0_14 = arith.constant 0 : index
      %20 = vector.load %arg8[%c0_13, %c0_14] : memref<1x128xf32, #tpu.memory_space<vmem>>, vector<1x128xf32>
      %21 = arith.addf %20, %13 : vector<1x128xf32>
      %c0_15 = arith.constant 0 : index
      %c0_16 = arith.constant 0 : index
      %22 = vector.load %arg8[%c0_15, %c0_16] : memref<1x128xf32, #tpu.memory_space<vmem>>, vector<1x128xf32>
      tpu.vector_store %arg8[%c0_15, %c0_16], %21 {strides = array<i32>} : memref<1x128xf32, #tpu.memory_space<vmem>>, vector<1x128xf32>,
      %c0_i32_17 = arith.constant 0 : i32
      %23 = arith.cmpi eq, %arg1, %c0_i32_17 : i32
      %24 = arith.extui %23 : i1 to i32
      %c0_i32_18 = arith.constant 0 : i32
      %25 = arith.cmpi ne, %24, %c0_i32_18 : i32
      scf.if %25 {
        %c0_19 = arith.constant 0 : index
        %c0_20 = arith.constant 0 : index
        %26 = vector.load %arg7[%c0_19, %c0_20] : memref<1x128xf32, #tpu.memory_space<vmem>>, vector<1x128xf32>
        %cst_21 = arith.constant 0.00255102036 : f32
        %27 = vector.broadcast %cst_21 : f32 to vector<1x128xf32>
        %28 = arith.mulf %26, %27 : vector<1x128xf32>
        %c0_22 = arith.constant 0 : index
        %c0_23 = arith.constant 0 : index
        %29 = vector.load %arg8[%c0_22, %c0_23] : memref<1x128xf32, #tpu.memory_space<vmem>>, vector<1x128xf32>
        %cst_24 = arith.constant 0.00255102036 : f32
        %30 = vector.broadcast %cst_24 : f32 to vector<1x128xf32>
        %31 = arith.mulf %29, %30 : vector<1x128xf32>
        %32 = arith.mulf %28, %28 : vector<1x128xf32>
        %33 = arith.subf %31, %32 : vector<1x128xf32>
        %cst_25 = arith.constant 0.000000e+00 : f32
        %34 = vector.broadcast %cst_25 : f32 to vector<1x128xf32>
        %35 = arith.maximumf %33, %34 : vector<1x128xf32>
        %cst_26 = arith.constant 9.99999974E-6 : f32
        %36 = vector.broadcast %cst_26 : f32 to vector<1x128xf32>
        %37 = arith.addf %35, %36 : vector<1x128xf32>
        %38 = math.rsqrt %37 : vector<1x128xf32>
        %c0_27 = arith.constant 0 : index
        %c0_28 = arith.constant 0 : index
        %39 = vector.load %arg4[%c0_27, %c0_28] : memref<1x128xf32, #tpu.memory_space<vmem>>, vector<1x128xf32>
        %40 = arith.mulf %39, %38 : vector<1x128xf32>
        %c0_29 = arith.constant 0 : index
        %c0_30 = arith.constant 0 : index
        %41 = vector.load %arg9[%c0_29, %c0_30] : memref<1x128xf32, #tpu.memory_space<vmem>>, vector<1x128xf32>
        tpu.vector_store %arg9[%c0_29, %c0_30], %40 {strides = array<i32>} : memref<1x128xf32, #tpu.memory_space<vmem>>, vector<1x128xf32>,
        %c0_31 = arith.constant 0 : index
        %c0_32 = arith.constant 0 : index
        %42 = vector.load %arg5[%c0_31, %c0_32] : memref<1x128xf32, #tpu.memory_space<vmem>>, vector<1x128xf32>
        %43 = arith.mulf %28, %40 : vector<1x128xf32>
        %44 = arith.subf %42, %43 : vector<1x128xf32>
        %c0_33 = arith.constant 0 : index
        %c0_34 = arith.constant 0 : index
        %45 = vector.load %arg10[%c0_33, %c0_34] : memref<1x128xf32, #tpu.memory_space<vmem>>, vector<1x128xf32>
        tpu.vector_store %arg10[%c0_33, %c0_34], %44 {strides = array<i32>} : memref<1x128xf32, #tpu.memory_space<vmem>>, vector<1x128xf32>,
      } else {
      }
    } else {
    }
    %c1_i32 = arith.constant 1 : i32
    %6 = arith.cmpi eq, %arg0, %c1_i32 : i32
    %7 = arith.extui %6 : i1 to i32
    %c0_i32_4 = arith.constant 0 : i32
    %8 = arith.cmpi ne, %7, %c0_i32_4 : i32
    scf.if %8 {
      %c0_5 = arith.constant 0 : index
      %c0_6 = arith.constant 0 : index
      %9 = vector.load %arg9[%c0_5, %c0_6] : memref<1x128xf32, #tpu.memory_space<vmem>>, vector<1x128xf32>
      %10 = vector.broadcast %9 : vector<1x128xf32> to vector<448x128xf32>
      %11 = arith.mulf %2, %10 : vector<448x128xf32>
      %c0_7 = arith.constant 0 : index
      %c0_8 = arith.constant 0 : index
      %12 = vector.load %arg10[%c0_7, %c0_8] : memref<1x128xf32, #tpu.memory_space<vmem>>, vector<1x128xf32>
      %13 = vector.broadcast %12 : vector<1x128xf32> to vector<448x128xf32>
      %14 = arith.addf %11, %13 : vector<448x128xf32>
      %cst_9 = arith.constant 0.000000e+00 : f32
      %15 = vector.broadcast %cst_9 : f32 to vector<448x128xf32>
      %16 = arith.cmpf oge, %14, %15 : vector<448x128xf32>
      %cst_10 = arith.constant 2.000000e-01 : f32
      %17 = vector.broadcast %cst_10 : f32 to vector<448x128xf32>
      %18 = arith.mulf %17, %14 : vector<448x128xf32>
      %19 = arith.select %16, %14, %18 : vector<448x128xi1>, vector<448x128xf32>
      %20 = arith.truncf %19 : vector<448x128xf32> to vector<448x128xbf16>
      %c0_11 = arith.constant 0 : index
      %c0_12 = arith.constant 0 : index
      %21 = vector.load %arg6[%c0_11, %c0_12] : memref<448x128xbf16, #tpu.memory_space<vmem>>, vector<448x128xbf16>
      tpu.vector_store %arg6[%c0_11, %c0_12], %20 {strides = array<i32>} : memref<448x128xbf16, #tpu.memory_space<vmem>>, vector<448x128xbf16>,
    } else {
    }
    return
  }
  func.func @transform_0(%arg0: i32, %arg1: i32) -> (i32, i32) {
    %c0_i32 = arith.constant 0 : i32
    %c0_i32_0 = arith.constant 0 : i32
    return %arg1, %c0_i32 : i32, i32
  }
  func.func @transform_1(%arg0: i32, %arg1: i32) -> (i32, i32) {
    %c0_i32 = arith.constant 0 : i32
    %c0_i32_0 = arith.constant 0 : i32
    %c0_i32_1 = arith.constant 0 : i32
    return %c0_i32, %c0_i32_0 : i32, i32
  }
  func.func @transform_2(%arg0: i32, %arg1: i32) -> (i32, i32) {
    %c0_i32 = arith.constant 0 : i32
    %c0_i32_0 = arith.constant 0 : i32
    %c0_i32_1 = arith.constant 0 : i32
    return %c0_i32, %c0_i32_0 : i32, i32
  }
  func.func @transform_3(%arg0: i32, %arg1: i32) -> (i32, i32) {
    %c0_i32 = arith.constant 0 : i32
    %c0_i32_0 = arith.constant 0 : i32
    %c0_i32_1 = arith.constant 0 : i32
    return %c0_i32, %c0_i32_0 : i32, i32
  }
  func.func @transform_4(%arg0: i32, %arg1: i32) -> (i32, i32) {
    %0 = arith.muli %arg1, %arg0 : i32
    %c0_i32 = arith.constant 0 : i32
    %c0_i32_0 = arith.constant 0 : i32
    return %0, %c0_i32 : i32, i32
  }
}

module attributes {stable_mosaic.version = 11 : i64} {
  func.func @_fused_conv_bn_lrelu_kernel(%arg0: i32, %arg1: i32, %arg2: memref<64x512xbf16, #tpu.memory_space<vmem>>, %arg3: memref<512x128xbf16, #tpu.memory_space<vmem>>, %arg4: memref<1x128xf32, #tpu.memory_space<vmem>>, %arg5: memref<1x128xf32, #tpu.memory_space<vmem>>, %arg6: memref<64x128xbf16, #tpu.memory_space<vmem>>, %arg7: memref<1x128xf32, #tpu.memory_space<vmem>>, %arg8: memref<1x128xf32, #tpu.memory_space<vmem>>, %arg9: memref<1x128xf32, #tpu.memory_space<vmem>>, %arg10: memref<1x128xf32, #tpu.memory_space<vmem>>) attributes {dimension_semantics = [#tpu.dimension_semantics<arbitrary>, #tpu.dimension_semantics<arbitrary>], iteration_bounds = array<i64: 2, 1>, scalar_prefetch = 0 : i64, scratch_operands = 4 : i64, tpu.core_type = #tpu.core_type<tc>, window_params = [{transform_indices = @transform_0, window_bounds = array<i64: 64, 512>}, {pipeline_mode = #tpu.pipeline_mode<synchronous>, transform_indices = @transform_1, window_bounds = array<i64: 512, 128>}, {pipeline_mode = #tpu.pipeline_mode<synchronous>, transform_indices = @transform_2, window_bounds = array<i64: 1, 128>}, {pipeline_mode = #tpu.pipeline_mode<synchronous>, transform_indices = @transform_3, window_bounds = array<i64: 1, 128>}, {transform_indices = @transform_4, window_bounds = array<i64: 64, 128>}]} {
    %c0 = arith.constant 0 : index
    %c0_0 = arith.constant 0 : index
    %0 = vector.load %arg2[%c0, %c0_0] : memref<64x512xbf16, #tpu.memory_space<vmem>>, vector<64x512xbf16>
    %c0_1 = arith.constant 0 : index
    %c0_2 = arith.constant 0 : index
    %1 = vector.load %arg3[%c0_1, %c0_2] : memref<512x128xbf16, #tpu.memory_space<vmem>>, vector<512x128xbf16>
    %cst = arith.constant dense<0.000000e+00> : vector<64x128xf32>
    %2 = tpu.matmul %0, %1, %cst {dimension_numbers = #tpu.dot_dimension_numbers<[1], [0], [0], [1], [0, 0, 1, 1], [], []>} : vector<64x512xbf16>, vector<512x128xbf16>, vector<64x128xf32> -> vector<64x128xf32>
    %c0_i32 = arith.constant 0 : i32
    %3 = arith.cmpi eq, %arg0, %c0_i32 : i32
    %4 = arith.extui %3 : i1 to i32
    %c0_i32_3 = arith.constant 0 : i32
    %5 = arith.cmpi ne, %4, %c0_i32_3 : i32
    scf.if %5 {
      %cst_5 = arith.constant dense<0.000000e+00> : vector<128xf32>
      %9 = vector.multi_reduction <add>, %2, %cst_5 [0] : vector<64x128xf32> to vector<128xf32>
      %10 = vector.shape_cast %9 : vector<128xf32> to vector<1x128xf32>
      %11 = arith.mulf %2, %2 : vector<64x128xf32>
      %cst_6 = arith.constant dense<0.000000e+00> : vector<128xf32>
      %12 = vector.multi_reduction <add>, %11, %cst_6 [0] : vector<64x128xf32> to vector<128xf32>
      %13 = vector.shape_cast %12 : vector<128xf32> to vector<1x128xf32>
      %c0_i32_7 = arith.constant 0 : i32
      %14 = arith.cmpi eq, %arg1, %c0_i32_7 : i32
      %15 = arith.extui %14 : i1 to i32
      %c0_i32_8 = arith.constant 0 : i32
      %16 = arith.cmpi ne, %15, %c0_i32_8 : i32
      scf.if %16 {
        %cst_19 = arith.constant 0.000000e+00 : f32
        %26 = vector.broadcast %cst_19 : f32 to vector<1x128xf32>
        %c0_20 = arith.constant 0 : index
        %c0_21 = arith.constant 0 : index
        %27 = vector.load %arg7[%c0_20, %c0_21] : memref<1x128xf32, #tpu.memory_space<vmem>>, vector<1x128xf32>
        tpu.vector_store %arg7[%c0_20, %c0_21], %26 {strides = array<i32>} : memref<1x128xf32, #tpu.memory_space<vmem>>, vector<1x128xf32>,
        %cst_22 = arith.constant 0.000000e+00 : f32
        %28 = vector.broadcast %cst_22 : f32 to vector<1x128xf32>
        %c0_23 = arith.constant 0 : index
        %c0_24 = arith.constant 0 : index
        %29 = vector.load %arg8[%c0_23, %c0_24] : memref<1x128xf32, #tpu.memory_space<vmem>>, vector<1x128xf32>
        tpu.vector_store %arg8[%c0_23, %c0_24], %28 {strides = array<i32>} : memref<1x128xf32, #tpu.memory_space<vmem>>, vector<1x128xf32>,
      } else {
      }
      %c0_9 = arith.constant 0 : index
      %c0_10 = arith.constant 0 : index
      %17 = vector.load %arg7[%c0_9, %c0_10] : memref<1x128xf32, #tpu.memory_space<vmem>>, vector<1x128xf32>
      %18 = arith.addf %17, %10 : vector<1x128xf32>
      %c0_11 = arith.constant 0 : index
      %c0_12 = arith.constant 0 : index
      %19 = vector.load %arg7[%c0_11, %c0_12] : memref<1x128xf32, #tpu.memory_space<vmem>>, vector<1x128xf32>
      tpu.vector_store %arg7[%c0_11, %c0_12], %18 {strides = array<i32>} : memref<1x128xf32, #tpu.memory_space<vmem>>, vector<1x128xf32>,
      %c0_13 = arith.constant 0 : index
      %c0_14 = arith.constant 0 : index
      %20 = vector.load %arg8[%c0_13, %c0_14] : memref<1x128xf32, #tpu.memory_space<vmem>>, vector<1x128xf32>
      %21 = arith.addf %20, %13 : vector<1x128xf32>
      %c0_15 = arith.constant 0 : index
      %c0_16 = arith.constant 0 : index
      %22 = vector.load %arg8[%c0_15, %c0_16] : memref<1x128xf32, #tpu.memory_space<vmem>>, vector<1x128xf32>
      tpu.vector_store %arg8[%c0_15, %c0_16], %21 {strides = array<i32>} : memref<1x128xf32, #tpu.memory_space<vmem>>, vector<1x128xf32>,
      %c0_i32_17 = arith.constant 0 : i32
      %23 = arith.cmpi eq, %arg1, %c0_i32_17 : i32
      %24 = arith.extui %23 : i1 to i32
      %c0_i32_18 = arith.constant 0 : i32
      %25 = arith.cmpi ne, %24, %c0_i32_18 : i32
      scf.if %25 {
        %c0_19 = arith.constant 0 : index
        %c0_20 = arith.constant 0 : index
        %26 = vector.load %arg7[%c0_19, %c0_20] : memref<1x128xf32, #tpu.memory_space<vmem>>, vector<1x128xf32>
        %cst_21 = arith.constant 3.125000e-02 : f32
        %27 = vector.broadcast %cst_21 : f32 to vector<1x128xf32>
        %28 = arith.mulf %26, %27 : vector<1x128xf32>
        %c0_22 = arith.constant 0 : index
        %c0_23 = arith.constant 0 : index
        %29 = vector.load %arg8[%c0_22, %c0_23] : memref<1x128xf32, #tpu.memory_space<vmem>>, vector<1x128xf32>
        %cst_24 = arith.constant 3.125000e-02 : f32
        %30 = vector.broadcast %cst_24 : f32 to vector<1x128xf32>
        %31 = arith.mulf %29, %30 : vector<1x128xf32>
        %32 = arith.mulf %28, %28 : vector<1x128xf32>
        %33 = arith.subf %31, %32 : vector<1x128xf32>
        %cst_25 = arith.constant 0.000000e+00 : f32
        %34 = vector.broadcast %cst_25 : f32 to vector<1x128xf32>
        %35 = arith.maximumf %33, %34 : vector<1x128xf32>
        %cst_26 = arith.constant 9.99999974E-6 : f32
        %36 = vector.broadcast %cst_26 : f32 to vector<1x128xf32>
        %37 = arith.addf %35, %36 : vector<1x128xf32>
        %38 = math.rsqrt %37 : vector<1x128xf32>
        %c0_27 = arith.constant 0 : index
        %c0_28 = arith.constant 0 : index
        %39 = vector.load %arg4[%c0_27, %c0_28] : memref<1x128xf32, #tpu.memory_space<vmem>>, vector<1x128xf32>
        %40 = arith.mulf %39, %38 : vector<1x128xf32>
        %c0_29 = arith.constant 0 : index
        %c0_30 = arith.constant 0 : index
        %41 = vector.load %arg9[%c0_29, %c0_30] : memref<1x128xf32, #tpu.memory_space<vmem>>, vector<1x128xf32>
        tpu.vector_store %arg9[%c0_29, %c0_30], %40 {strides = array<i32>} : memref<1x128xf32, #tpu.memory_space<vmem>>, vector<1x128xf32>,
        %c0_31 = arith.constant 0 : index
        %c0_32 = arith.constant 0 : index
        %42 = vector.load %arg5[%c0_31, %c0_32] : memref<1x128xf32, #tpu.memory_space<vmem>>, vector<1x128xf32>
        %43 = arith.mulf %28, %40 : vector<1x128xf32>
        %44 = arith.subf %42, %43 : vector<1x128xf32>
        %c0_33 = arith.constant 0 : index
        %c0_34 = arith.constant 0 : index
        %45 = vector.load %arg10[%c0_33, %c0_34] : memref<1x128xf32, #tpu.memory_space<vmem>>, vector<1x128xf32>
        tpu.vector_store %arg10[%c0_33, %c0_34], %44 {strides = array<i32>} : memref<1x128xf32, #tpu.memory_space<vmem>>, vector<1x128xf32>,
      } else {
      }
    } else {
    }
    %c1_i32 = arith.constant 1 : i32
    %6 = arith.cmpi eq, %arg0, %c1_i32 : i32
    %7 = arith.extui %6 : i1 to i32
    %c0_i32_4 = arith.constant 0 : i32
    %8 = arith.cmpi ne, %7, %c0_i32_4 : i32
    scf.if %8 {
      %c0_5 = arith.constant 0 : index
      %c0_6 = arith.constant 0 : index
      %9 = vector.load %arg9[%c0_5, %c0_6] : memref<1x128xf32, #tpu.memory_space<vmem>>, vector<1x128xf32>
      %10 = vector.broadcast %9 : vector<1x128xf32> to vector<64x128xf32>
      %11 = arith.mulf %2, %10 : vector<64x128xf32>
      %c0_7 = arith.constant 0 : index
      %c0_8 = arith.constant 0 : index
      %12 = vector.load %arg10[%c0_7, %c0_8] : memref<1x128xf32, #tpu.memory_space<vmem>>, vector<1x128xf32>
      %13 = vector.broadcast %12 : vector<1x128xf32> to vector<64x128xf32>
      %14 = arith.addf %11, %13 : vector<64x128xf32>
      %cst_9 = arith.constant 0.000000e+00 : f32
      %15 = vector.broadcast %cst_9 : f32 to vector<64x128xf32>
      %16 = arith.cmpf oge, %14, %15 : vector<64x128xf32>
      %cst_10 = arith.constant 2.000000e-01 : f32
      %17 = vector.broadcast %cst_10 : f32 to vector<64x128xf32>
      %18 = arith.mulf %17, %14 : vector<64x128xf32>
      %19 = arith.select %16, %14, %18 : vector<64x128xi1>, vector<64x128xf32>
      %20 = arith.truncf %19 : vector<64x128xf32> to vector<64x128xbf16>
      %c0_11 = arith.constant 0 : index
      %c0_12 = arith.constant 0 : index
      %21 = vector.load %arg6[%c0_11, %c0_12] : memref<64x128xbf16, #tpu.memory_space<vmem>>, vector<64x128xbf16>
      tpu.vector_store %arg6[%c0_11, %c0_12], %20 {strides = array<i32>} : memref<64x128xbf16, #tpu.memory_space<vmem>>, vector<64x128xbf16>,
    } else {
    }
    return
  }
  func.func @transform_0(%arg0: i32, %arg1: i32) -> (i32, i32) {
    %c0_i32 = arith.constant 0 : i32
    %c0_i32_0 = arith.constant 0 : i32
    return %arg1, %c0_i32 : i32, i32
  }
  func.func @transform_1(%arg0: i32, %arg1: i32) -> (i32, i32) {
    %c0_i32 = arith.constant 0 : i32
    %c0_i32_0 = arith.constant 0 : i32
    %c0_i32_1 = arith.constant 0 : i32
    return %c0_i32, %c0_i32_0 : i32, i32
  }
  func.func @transform_2(%arg0: i32, %arg1: i32) -> (i32, i32) {
    %c0_i32 = arith.constant 0 : i32
    %c0_i32_0 = arith.constant 0 : i32
    %c0_i32_1 = arith.constant 0 : i32
    return %c0_i32, %c0_i32_0 : i32, i32
  }
  func.func @transform_3(%arg0: i32, %arg1: i32) -> (i32, i32) {
    %c0_i32 = arith.constant 0 : i32
    %c0_i32_0 = arith.constant 0 : i32
    %c0_i32_1 = arith.constant 0 : i32
    return %c0_i32, %c0_i32_0 : i32, i32
  }
  func.func @transform_4(%arg0: i32, %arg1: i32) -> (i32, i32) {
    %0 = arith.muli %arg1, %arg0 : i32
    %c0_i32 = arith.constant 0 : i32
    %c0_i32_0 = arith.constant 0 : i32
    return %0, %c0_i32 : i32, i32
  }
}

module attributes {stable_mosaic.version = 11 : i64} {
  func.func @_gemm_bias_kernel(%arg0: i32, %arg1: memref<64x1024xbf16, #tpu.memory_space<vmem>>, %arg2: memref<1024x128xbf16, #tpu.memory_space<vmem>>, %arg3: memref<1x128xf32, #tpu.memory_space<vmem>>, %arg4: memref<64x128xf32, #tpu.memory_space<vmem>>) attributes {dimension_semantics = [#tpu.dimension_semantics<parallel>], iteration_bounds = array<i64: 1>, scalar_prefetch = 0 : i64, scratch_operands = 0 : i64, tpu.core_type = #tpu.core_type<tc>, window_params = [{transform_indices = @transform_0, window_bounds = array<i64: 64, 1024>}, {pipeline_mode = #tpu.pipeline_mode<synchronous>, transform_indices = @transform_1, window_bounds = array<i64: 1024, 128>}, {pipeline_mode = #tpu.pipeline_mode<synchronous>, transform_indices = @transform_2, window_bounds = array<i64: 1, 128>}, {transform_indices = @transform_3, window_bounds = array<i64: 64, 128>}]} {
    %c0 = arith.constant 0 : index
    %c0_0 = arith.constant 0 : index
    %0 = vector.load %arg1[%c0, %c0_0] : memref<64x1024xbf16, #tpu.memory_space<vmem>>, vector<64x1024xbf16>
    %c0_1 = arith.constant 0 : index
    %c0_2 = arith.constant 0 : index
    %1 = vector.load %arg2[%c0_1, %c0_2] : memref<1024x128xbf16, #tpu.memory_space<vmem>>, vector<1024x128xbf16>
    %cst = arith.constant dense<0.000000e+00> : vector<64x128xf32>
    %2 = tpu.matmul %0, %1, %cst {dimension_numbers = #tpu.dot_dimension_numbers<[1], [0], [0], [1], [0, 0, 1, 1], [], []>} : vector<64x1024xbf16>, vector<1024x128xbf16>, vector<64x128xf32> -> vector<64x128xf32>
    %c0_3 = arith.constant 0 : index
    %c0_4 = arith.constant 0 : index
    %3 = vector.load %arg3[%c0_3, %c0_4] : memref<1x128xf32, #tpu.memory_space<vmem>>, vector<1x128xf32>
    %4 = vector.broadcast %3 : vector<1x128xf32> to vector<64x128xf32>
    %5 = arith.addf %2, %4 : vector<64x128xf32>
    %c0_5 = arith.constant 0 : index
    %c0_6 = arith.constant 0 : index
    %6 = vector.load %arg4[%c0_5, %c0_6] : memref<64x128xf32, #tpu.memory_space<vmem>>, vector<64x128xf32>
    tpu.vector_store %arg4[%c0_5, %c0_6], %5 {strides = array<i32>} : memref<64x128xf32, #tpu.memory_space<vmem>>, vector<64x128xf32>,
    return
  }
  func.func @transform_0(%arg0: i32) -> (i32, i32) {
    %c0_i32 = arith.constant 0 : i32
    %c0_i32_0 = arith.constant 0 : i32
    return %arg0, %c0_i32 : i32, i32
  }
  func.func @transform_1(%arg0: i32) -> (i32, i32) {
    %c0_i32 = arith.constant 0 : i32
    %c0_i32_0 = arith.constant 0 : i32
    %c0_i32_1 = arith.constant 0 : i32
    return %c0_i32, %c0_i32_0 : i32, i32
  }
  func.func @transform_2(%arg0: i32) -> (i32, i32) {
    %c0_i32 = arith.constant 0 : i32
    %c0_i32_0 = arith.constant 0 : i32
    %c0_i32_1 = arith.constant 0 : i32
    return %c0_i32, %c0_i32_0 : i32, i32
  }
  func.func @transform_3(%arg0: i32) -> (i32, i32) {
    %c0_i32 = arith.constant 0 : i32
    %c0_i32_0 = arith.constant 0 : i32
    return %arg0, %c0_i32 : i32, i32
  }
}

</mosaic_0001>

<llo_original>
// kernel: classifier_forward.4
$region0: #{classifier_forward.4}
  #allocation0 [shape = 'u32[]', space=smem, size = 0x4, offset = 0x4, fixed_abs, tag = 'smem constant byte address 0x4 - core index']
  #allocation1 [shape = 'u32[144,128]{1,0:T(1,128)}', space=vmem, size = 0x12000, scoped, tag = 'internal scratch']
  #allocation2 [shape = 'f32[1,128]{1,0:T(1,128)}', space=vmem, size = 0x200, scoped, tag = 'scratch operand']
  #allocation3 [shape = 'f32[1,128]{1,0:T(1,128)}', space=vmem, size = 0x200, scoped, tag = 'scratch operand']
  #allocation4 [shape = 'f32[1,128]{1,0:T(1,128)}', space=vmem, size = 0x200, scoped, tag = 'scratch operand']
  #allocation5 [shape = 'f32[1,128]{1,0:T(1,128)}', space=vmem, size = 0x200, scoped, tag = 'scratch operand']
  %s0 = inlined_call_operand.vmem [shape: bf16[2048,48], index: 0, kind: input, shape index: {}]
  %s1 = inlined_call_operand.vmem [shape: bf16[48,128], index: 1, kind: input, shape index: {}]
  %s2 = inlined_call_operand.vmem [shape: f32[1,128], index: 2, kind: input, shape index: {}]
  %s3 = inlined_call_operand.vmem [shape: f32[1,128], index: 3, kind: input, shape index: {}]
  %s4 = inlined_call_operand.vmem [shape: bf16[2048,128], index: 4, kind: output, shape index: {}]
  %s5 = sld [smem:[#allocation0]]
  $region65: #{classifier_forward.4} parent=0
    _
  %s7 = ssub.s32 1, %s5
  %s8 = scalar_select 0, %s7, %s5
  loop: start=0, step=1, limit=10
  $region2: #{classifier_forward.4} parent=0 // loop_pre_header
    _
  $region3: #{classifier_forward.4} parent=0 // loop_header
    %s10 = sphi 0, %s14
    %p11 = scmp.ge.s32.totalorder %s10, 10
    %s17 = sphi 0, %s29
    %s18 = sphi 0, %s25
    %s19 = sphi 0, %s17
    %s20 = sphi 0, %s18
    %s21 = sphi 0, %s19
    %s22 = sphi 0, %s20
    %s32 = sphi 0, %s34
    %s35 = sphi 0, %s32
    %s36 = sphi 0, %s35
    %s52 = sphi 0, %s36
    %s56 = sphi 0, %s56
    %s58 = sphi 0, %s56
    %s59 = sphi 0, %s58
    %s73 = sphi 0, %s59
    %s77 = sphi 0, %s77
    %s79 = sphi 0, %s77
    %s80 = sphi 0, %s79
    %s94 = sphi 0, %s80
    %s98 = sphi 0, %s98
    %s100 = sphi 0, %s98
    %s101 = sphi 0, %s100
    %s115 = sphi 0, %s101
    %s123 = sphi 0, %s125
    %s126 = sphi 0, %s123
    %s127 = sphi 0, %s126
    %s143 = sphi 0, %s127
  $region4: #{classifier_forward.4} parent=0 // loop_header_branch
    %13 = sbr.rel (%p11) target = $region8
  $region5: #{classifier_forward.4} parent=0 // loop_body
    %s15 = ssub.s32 %s10, 1
    %s16 = ssub.s32 %s10, 2
    %s23 = sadd.s32 1, %s18
    %p24 = scmp.ge.s32.totalorder %s23, 4
    %s25 = scalar_select %p24, 0, %s23
    %s26 = sadd.s32 1, %s17
    %s27 = scalar_select %p24, %s26, %s17
    %p28 = scmp.ge.s32.totalorder %s27, 2
    %s29 = scalar_select %p28, 0, %s27
    %s30 = ssub.s32 %s18, %s25
    %p31 = scmp.eq.s32.totalorder %s30, 0
    %s33 = sadd.s32 %s32, 1
    %s34 = scalar_select %p31, %s32, %s33
    %p37 = pneg %p31
    %p38 = scmp.eq.s32.totalorder %s10, 7
    %p39 = por %p37, %p38
    %p40 = scmp.ne.s32.totalorder %s32, %s35
    %p41 = scmp.eq.s32.totalorder %s10, 0
    %p42 = por %p40, %p41
    %p43 = scmp.ne.s32.totalorder %s32, %s35
    %p44 = scmp.eq.s32.totalorder %s15, 7
    %p45 = por %p43, %p44
    %p46 = scmp.ne.s32.totalorder %s35, %s36
    %p47 = scmp.eq.s32.totalorder %s15, 0
    %p48 = por %p46, %p47
    %p49 = scmp.ne.s32.totalorder %s35, %s36
    %p50 = scmp.eq.s32.totalorder %s16, 7
    %p51 = por %p49, %p50
    %p53 = scmp.ne.s32.totalorder %s36, %s52
    %p54 = scmp.eq.s32.totalorder %s16, 0
    %p55 = por %p53, %p54
    %s57 = sadd.s32 %s56, 1
    %p60 = scmp.eq.s32.totalorder %s10, 7
    %p61 = scmp.ne.s32.totalorder %s56, %s58
    %p62 = scmp.eq.s32.totalorder %s10, 0
    %p63 = por %p61, %p62
    %p64 = scmp.ne.s32.totalorder %s56, %s58
    %p65 = scmp.eq.s32.totalorder %s15, 7
    %p66 = por %p64, %p65
    %p67 = scmp.ne.s32.totalorder %s58, %s59
    %p68 = scmp.eq.s32.totalorder %s15, 0
    %p69 = por %p67, %p68
    %p70 = scmp.ne.s32.totalorder %s58, %s59
    %p71 = scmp.eq.s32.totalorder %s16, 7
    %p72 = por %p70, %p71
    %p74 = scmp.ne.s32.totalorder %s59, %s73
    %p75 = scmp.eq.s32.totalorder %s16, 0
    %p76 = por %p74, %p75
    %s78 = sadd.s32 %s77, 1
    %p81 = scmp.eq.s32.totalorder %s10, 7
    %p82 = scmp.ne.s32.totalorder %s77, %s79
    %p83 = scmp.eq.s32.totalorder %s10, 0
    %p84 = por %p82, %p83
    %p85 = scmp.ne.s32.totalorder %s77, %s79
    %p86 = scmp.eq.s32.totalorder %s15, 7
    %p87 = por %p85, %p86
    %p88 = scmp.ne.s32.totalorder %s79, %s80
    %p89 = scmp.eq.s32.totalorder %s15, 0
    %p90 = por %p88, %p89
    %p91 = scmp.ne.s32.totalorder %s79, %s80
    %p92 = scmp.eq.s32.totalorder %s16, 7
    %p93 = por %p91, %p92
    %p95 = scmp.ne.s32.totalorder %s80, %s94
    %p96 = scmp.eq.s32.totalorder %s16, 0
    %p97 = por %p95, %p96
    %s99 = sadd.s32 %s98, 1
    %p102 = scmp.eq.s32.totalorder %s10, 7
    %p103 = scmp.ne.s32.totalorder %s98, %s100
    %p104 = scmp.eq.s32.totalorder %s10, 0
    %p105 = por %p103, %p104
    %p106 = scmp.ne.s32.totalorder %s98, %s100
    %p107 = scmp.eq.s32.totalorder %s15, 7
    %p108 = por %p106, %p107
    %p109 = scmp.ne.s32.totalorder %s100, %s101
    %p110 = scmp.eq.s32.totalorder %s15, 0
    %p111 = por %p109, %p110
    %p112 = scmp.ne.s32.totalorder %s100, %s101
    %p113 = scmp.eq.s32.totalorder %s16, 7
    %p114 = por %p112, %p113
    %p116 = scmp.ne.s32.totalorder %s101, %s115
    %p117 = scmp.eq.s32.totalorder %s16, 0
    %p118 = por %p116, %p117
    %s119 = smul.u32 %s18, %s17
    %s120 = smul.u32 %s25, %s29
    %s121 = ssub.s32 %s119, %s120
    %p122 = scmp.eq.s32.totalorder %s121, 0
    %s124 = sadd.s32 %s123, 1
    %s125 = scalar_select %p122, %s123, %s124
    %p128 = pneg %p122
    %p129 = scmp.eq.s32.totalorder %s10, 7
    %p130 = por %p128, %p129
    %p131 = scmp.ne.s32.totalorder %s123, %s126
    %p132 = scmp.eq.s32.totalorder %s10, 0
    %p133 = por %p131, %p132
    %p134 = scmp.ne.s32.totalorder %s123, %s126
    %p135 = scmp.eq.s32.totalorder %s15, 7
    %p136 = por %p134, %p135
    %p137 = scmp.ne.s32.totalorder %s126, %s127
    %p138 = scmp.eq.s32.totalorder %s15, 0
    %p139 = por %p137, %p138
    %p140 = scmp.ne.s32.totalorder %s126, %s127
    %p141 = scmp.eq.s32.totalorder %s16, 7
    %p142 = por %p140, %p141
    %p144 = scmp.ne.s32.totalorder %s127, %s143
    %p145 = scmp.eq.s32.totalorder %s16, 0
    %p146 = por %p144, %p145
    %p147 = scmp.le.s32.totalorder 1, %s10
    %p148 = scmp.lt.s32.totalorder %s10, 9
    %p149 = pnand %p147, %p148
    %p150 = pneg %p149
    // Predicated region
    $region9: #{classifier_forward.4} parent=5 // pred_check
      _
    $region10: #{classifier_forward.4} parent=5 // pred_check_branch
      %152 = sbr.rel (%p149) target = $region12
    $region11: #{classifier_forward.4} parent=5 // pred_region
      %s153 = ssub.s32 %s10, 1
      // Predicated region
      $region13: #{classifier_forward.4} parent=11 // pred_check
        %p154 = pneg %p69
      $region14: #{classifier_forward.4} parent=11 // pred_check_branch
        %156 = sbr.rel (%p154) target = $region16
      $region15: #{classifier_forward.4} parent=11 // pred_region
        _
      $region16: #{classifier_forward.4} parent=11 // pred_fallthru
        _
      // Predicated region
      $region17: #{classifier_forward.4} parent=11 // pred_check
        %p157 = pneg %p90
      $region18: #{classifier_forward.4} parent=11 // pred_check_branch
        %159 = sbr.rel (%p157) target = $region20
      $region19: #{classifier_forward.4} parent=11 // pred_region
        _
      $region20: #{classifier_forward.4} parent=11 // pred_fallthru
        _
      // Predicated region
      $region21: #{classifier_forward.4} parent=11 // pred_check
        %p160 = pneg %p111
      $region22: #{classifier_forward.4} parent=11 // pred_check_branch
        %162 = sbr.rel (%p160) target = $region24
      $region23: #{classifier_forward.4} parent=11 // pred_region
        _
      $region24: #{classifier_forward.4} parent=11 // pred_fallthru
        _
    $region12: #{classifier_forward.4} parent=5 // pred_fallthru
      _
    %p163 = scmp.lt.s32.totalorder %s10, 8
    // Predicated region
    $region25: #{classifier_forward.4} parent=5 // pred_check
      %p164 = pneg %p163
    $region26: #{classifier_forward.4} parent=5 // pred_check_branch
      %166 = sbr.rel (%p164) target = $region28
    $region27: #{classifier_forward.4} parent=5 // pred_region
      // Predicated region
      $region29: #{classifier_forward.4} parent=27 // pred_check
        %p167 = pneg %p42
      $region30: #{classifier_forward.4} parent=27 // pred_check_branch
        %169 = sbr.rel (%p167) target = $region32
      $region31: #{classifier_forward.4} parent=27 // pred_region
        %s170 = smul.u32 64, %s18
        %p171 = scmp.lt.s32.totalorder %s170, 255
        %s172 = scalar_select %p171, %s170, 255
        %s173 = smul.addr %s172, 4
        %s174 = scalar_lea.vmem %s0, %s173
        %s175 = smul.u32 64, %s18
      $region32: #{classifier_forward.4} parent=27 // pred_fallthru
        _
    $region28: #{classifier_forward.4} parent=5 // pred_fallthru
      _
    %p176 = scmp.le.s32.totalorder 1, %s10
    %p177 = scmp.lt.s32.totalorder %s10, 9
    %p178 = pnand %p176, %p177
    %p179 = pneg %p178
    // Predicated region
    $region33: #{classifier_forward.4} parent=5 // pred_check
      _
    $region34: #{classifier_forward.4} parent=5 // pred_check_branch
      %181 = sbr.rel (%p178) target = $region36
    $region35: #{classifier_forward.4} parent=5 // pred_region
      %s182 = ssub.s32 %s10, 1
      %s183 = smul.u32 64, %s20
      %p184 = scmp.lt.s32.totalorder %s183, 255
      %s185 = scalar_select %p184, %s183, 255
      %s186 = smul.addr %s185, 4
      %s187 = scalar_lea.vmem %s0, %s186
      %p188 = pneg %p48
      %p189 = pneg %p45
      %p190 = pneg %p69
      %p191 = pneg %p66
      %p192 = pneg %p90
      %p193 = pneg %p87
      %p194 = pneg %p111
      %p195 = pneg %p108
      %p196 = pneg %p139
      %p197 = pneg %p136
      %s198 = smul.u32 %s20, %s19
      %s199 = smul.u32 64, %s198
      %p200 = scmp.lt.s32.totalorder %s199, 255
      %s201 = scalar_select %p200, %s199, 255
      %s202 = smul.addr %s201, 4
      %s203 = scalar_lea.vmem %s4, %s202
      %s204 = smul.u32 64, %s20
      %p205 = scmp.lt.s32.totalorder %s204, 255
      %s206 = scalar_select %p205, %s204, 255
      %s207 = smul.addr %s206, 4
      %s208 = scalar_lea.vmem %s0, %s207
      %s209 = smul.u32 64, %s20
      %s210 = smul.u32 %s20, %s19
      %s211 = smul.u32 64, %s210
      %p212 = scmp.lt.s32.totalorder %s211, 255
      %s213 = scalar_select %p212, %s211, 255
      %s214 = smul.addr %s213, 4
      %s215 = scalar_lea.vmem %s4, %s214
      %s216 = smul.u32 %s20, %s19
      %s217 = smul.u32 64, %s216
      %v219 = vld [vmem:[%s208] sm:$0xf]
      %v220 = vld [vmem:[%s208 + $0x4] sm:$0xf]
      %v221 = vld [vmem:[%s208 + $0x8] sm:$0xf]
      %v222 = vld [vmem:[%s208 + $0xc] sm:$0xf]
      %v223 = vld [vmem:[%s208 + $0x10] sm:$0xf]
      %v224 = vld [vmem:[%s208 + $0x14] sm:$0xf]
      %v225 = vld [vmem:[%s208 + $0x18] sm:$0xf]
      %v226 = vld [vmem:[%s208 + $0x1c] sm:$0xf]
      %v227 = vld [vmem:[%s208 + $0x20] sm:$0xf]
      %v228 = vld [vmem:[%s208 + $0x24] sm:$0xf]
      %v229 = vld [vmem:[%s208 + $0x28] sm:$0xf]
      %v230 = vld [vmem:[%s208 + $0x2c] sm:$0xf]
      %v231 = vld [vmem:[%s208 + $0x30] sm:$0xf]
      %v232 = vld [vmem:[%s208 + $0x34] sm:$0xf]
      %v233 = vld [vmem:[%s208 + $0x38] sm:$0xf]
      %v234 = vld [vmem:[%s208 + $0x3c] sm:$0xf]
      %v235 = vld [vmem:[%s208 + $0x40] sm:$0xf]
      %v236 = vld [vmem:[%s208 + $0x44] sm:$0xf]
      %v237 = vld [vmem:[%s208 + $0x48] sm:$0xf]
      %v238 = vld [vmem:[%s208 + $0x4c] sm:$0xf]
      %v239 = vld [vmem:[%s208 + $0x50] sm:$0xf]
      %v240 = vld [vmem:[%s208 + $0x54] sm:$0xf]
      %v241 = vld [vmem:[%s208 + $0x58] sm:$0xf]
      %v242 = vld [vmem:[%s208 + $0x5c] sm:$0xf]
      %v243 = vld [vmem:[%s208 + $0x60] sm:$0xf]
      %v244 = vld [vmem:[%s208 + $0x64] sm:$0xf]
      %v245 = vld [vmem:[%s208 + $0x68] sm:$0xf]
      %v246 = vld [vmem:[%s208 + $0x6c] sm:$0xf]
      %v247 = vld [vmem:[%s208 + $0x70] sm:$0xf]
      %v248 = vld [vmem:[%s208 + $0x74] sm:$0xf]
      %v249 = vld [vmem:[%s208 + $0x78] sm:$0xf]
      %v250 = vld [vmem:[%s208 + $0x7c] sm:$0xf]
      %v251 = vld [vmem:[%s208 + $0x80] sm:$0xf]
      %v252 = vld [vmem:[%s208 + $0x84] sm:$0xf]
      %v253 = vld [vmem:[%s208 + $0x88] sm:$0xf]
      %v254 = vld [vmem:[%s208 + $0x8c] sm:$0xf]
      %v255 = vld [vmem:[%s208 + $0x90] sm:$0xf]
      %v256 = vld [vmem:[%s208 + $0x94] sm:$0xf]
      %v257 = vld [vmem:[%s208 + $0x98] sm:$0xf]
      %v258 = vld [vmem:[%s208 + $0x9c] sm:$0xf]
      %v259 = vld [vmem:[%s208 + $0xa0] sm:$0xf]
      %v260 = vld [vmem:[%s208 + $0xa4] sm:$0xf]
      %v261 = vld [vmem:[%s208 + $0xa8] sm:$0xf]
      %v262 = vld [vmem:[%s208 + $0xac] sm:$0xf]
      %v263 = vld [vmem:[%s208 + $0xb0] sm:$0xf]
      %v264 = vld [vmem:[%s208 + $0xb4] sm:$0xf]
      %v265 = vld [vmem:[%s208 + $0xb8] sm:$0xf]
      %v266 = vld [vmem:[%s208 + $0xbc] sm:$0xf]
      %v267 = vld [vmem:[%s208 + $0xc0] sm:$0xf]
      %v268 = vld [vmem:[%s208 + $0xc4] sm:$0xf]
      %v269 = vld [vmem:[%s208 + $0xc8] sm:$0xf]
      %v270 = vld [vmem:[%s208 + $0xcc] sm:$0xf]
      %v271 = vld [vmem:[%s208 + $0xd0] sm:$0xf]
      %v272 = vld [vmem:[%s208 + $0xd4] sm:$0xf]
      %v273 = vld [vmem:[%s208 + $0xd8] sm:$0xf]
      %v274 = vld [vmem:[%s208 + $0xdc] sm:$0xf]
      %v275 = vld [vmem:[%s208 + $0xe0] sm:$0xf]
      %v276 = vld [vmem:[%s208 + $0xe4] sm:$0xf]
      %v277 = vld [vmem:[%s208 + $0xe8] sm:$0xf]
      %v278 = vld [vmem:[%s208 + $0xec] sm:$0xf]
      %v279 = vld [vmem:[%s208 + $0xf0] sm:$0xf]
      %v280 = vld [vmem:[%s208 + $0xf4] sm:$0xf]
      %v281 = vld [vmem:[%s208 + $0xf8] sm:$0xf]
      %v282 = vld [vmem:[%s208 + $0xfc] sm:$0xf]
      %v283 = vld [vmem:[%s1] sm:$0xf]
      %v284 = vld [vmem:[%s1 + $0x4] sm:$0xf]
      %v285 = vld [vmem:[%s1 + $0x8] sm:$0xf]
      %v286 = vld [vmem:[%s1 + $0xc] sm:$0xf]
      %v287 = vld [vmem:[%s1 + $0x10] sm:$0xf]
      %v288 = vld [vmem:[%s1 + $0x14] sm:$0xf]
      %v353 = vunpack.c.l.b16 %v219
      %v354 = vunpack.c.l.b16 %v220
      %v355 = vunpack.c.l.b16 %v221
      %v356 = vunpack.c.l.b16 %v222
      %v357 = vunpack.c.l.b16 %v223
      %v358 = vunpack.c.l.b16 %v224
      %v359 = vunpack.c.l.b16 %v225
      %v360 = vunpack.c.l.b16 %v226
      %v361 = vunpack.c.l.b16 %v227
      %v362 = vunpack.c.l.b16 %v228
      %v363 = vunpack.c.l.b16 %v229
      %v364 = vunpack.c.l.b16 %v230
      %v365 = vunpack.c.l.b16 %v231
      %v366 = vunpack.c.l.b16 %v232
      %v367 = vunpack.c.l.b16 %v233
      %v368 = vunpack.c.l.b16 %v234
      %v369 = vunpack.c.l.b16 %v235
      %v370 = vunpack.c.l.b16 %v236
      %v371 = vunpack.c.l.b16 %v237
      %v372 = vunpack.c.l.b16 %v238
      %v373 = vunpack.c.l.b16 %v239
      %v374 = vunpack.c.l.b16 %v240
      %v375 = vunpack.c.l.b16 %v241
      %v376 = vunpack.c.l.b16 %v242
      %v377 = vunpack.c.l.b16 %v243
      %v378 = vunpack.c.l.b16 %v244
      %v379 = vunpack.c.l.b16 %v245
      %v380 = vunpack.c.l.b16 %v246
      %v381 = vunpack.c.l.b16 %v247
      %v382 = vunpack.c.l.b16 %v248
      %v383 = vunpack.c.l.b16 %v249
      %v384 = vunpack.c.l.b16 %v250
      %v385 = vunpack.c.l.b16 %v251
      %v386 = vunpack.c.l.b16 %v252
      %v387 = vunpack.c.l.b16 %v253
      %v388 = vunpack.c.l.b16 %v254
      %v389 = vunpack.c.l.b16 %v255
      %v390 = vunpack.c.l.b16 %v256
      %v391 = vunpack.c.l.b16 %v257
      %v392 = vunpack.c.l.b16 %v258
      %v393 = vunpack.c.l.b16 %v259
      %v394 = vunpack.c.l.b16 %v260
      %v395 = vunpack.c.l.b16 %v261
      %v396 = vunpack.c.l.b16 %v262
      %v397 = vunpack.c.l.b16 %v263
      %v398 = vunpack.c.l.b16 %v264
      %v399 = vunpack.c.l.b16 %v265
      %v400 = vunpack.c.l.b16 %v266
      %v401 = vunpack.c.l.b16 %v267
      %v402 = vunpack.c.l.b16 %v268
      %v403 = vunpack.c.l.b16 %v269
      %v404 = vunpack.c.l.b16 %v270
      %v405 = vunpack.c.l.b16 %v271
      %v406 = vunpack.c.l.b16 %v272
      %v407 = vunpack.c.l.b16 %v273
      %v408 = vunpack.c.l.b16 %v274
      %v409 = vunpack.c.l.b16 %v275
      %v410 = vunpack.c.l.b16 %v276
      %v411 = vunpack.c.l.b16 %v277
      %v412 = vunpack.c.l.b16 %v278
      %v413 = vunpack.c.l.b16 %v279
      %v414 = vunpack.c.l.b16 %v280
      %v415 = vunpack.c.l.b16 %v281
      %v416 = vunpack.c.l.b16 %v282
      %v417 = vpack.c.b16 %v354, %v353
      %v418 = vpack.c.b16 %v356, %v355
      %v419 = vpack.c.b16 %v358, %v357
      %v420 = vpack.c.b16 %v360, %v359
      %v421 = vpack.c.b16 %v362, %v361
      %v422 = vpack.c.b16 %v364, %v363
      %v423 = vpack.c.b16 %v366, %v365
      %v424 = vpack.c.b16 %v368, %v367
      %v425 = vpack.c.b16 %v370, %v369
      %v426 = vpack.c.b16 %v372, %v371
      %v427 = vpack.c.b16 %v374, %v373
      %v428 = vpack.c.b16 %v376, %v375
      %v429 = vpack.c.b16 %v378, %v377
      %v430 = vpack.c.b16 %v380, %v379
      %v431 = vpack.c.b16 %v382, %v381
      %v432 = vpack.c.b16 %v384, %v383
      %v433 = vpack.c.b16 %v386, %v385
      %v434 = vpack.c.b16 %v388, %v387
      %v435 = vpack.c.b16 %v390, %v389
      %v436 = vpack.c.b16 %v392, %v391
      %v437 = vpack.c.b16 %v394, %v393
      %v438 = vpack.c.b16 %v396, %v395
      %v439 = vpack.c.b16 %v398, %v397
      %v440 = vpack.c.b16 %v400, %v399
      %v441 = vpack.c.b16 %v402, %v401
      %v442 = vpack.c.b16 %v404, %v403
      %v443 = vpack.c.b16 %v406, %v405
      %v444 = vpack.c.b16 %v408, %v407
      %v445 = vpack.c.b16 %v410, %v409
      %v446 = vpack.c.b16 %v412, %v411
      %v447 = vpack.c.b16 %v414, %v413
      %v448 = vpack.c.b16 %v416, %v415
      %v455 = vunpack.c.l.b16 %v283
      %v456 = vunpack.c.l.b16 %v284
      %v457 = vunpack.c.l.b16 %v285
      %v458 = vunpack.c.l.b16 %v286
      %v459 = vunpack.c.l.b16 %v287
      %v460 = vunpack.c.l.b16 %v288
      %v461 = vpack.c.b16 %v456, %v455
      %v462 = vpack.c.b16 %v458, %v457
      %v463 = vpack.c.b16 %v460, %v459
      %vm467 = vcmask 392192
      %v469 = vsel %vm467, %v417, 0
      %v472 = vsel %vm467, %v418, 0
      %v475 = vsel %vm467, %v419, 0
      %v478 = vsel %vm467, %v420, 0
      %v481 = vsel %vm467, %v421, 0
      %v484 = vsel %vm467, %v422, 0
      %v487 = vsel %vm467, %v423, 0
      %v490 = vsel %vm467, %v424, 0
      %v493 = vsel %vm467, %v425, 0
      %v496 = vsel %vm467, %v426, 0
      %v499 = vsel %vm467, %v427, 0
      %v502 = vsel %vm467, %v428, 0
      %v505 = vsel %vm467, %v429, 0
      %v508 = vsel %vm467, %v430, 0
      %v511 = vsel %vm467, %v431, 0
      %v514 = vsel %vm467, %v432, 0
      %v517 = vsel %vm467, %v433, 0
      %v520 = vsel %vm467, %v434, 0
      %v523 = vsel %vm467, %v435, 0
      %v526 = vsel %vm467, %v436, 0
      %v529 = vsel %vm467, %v437, 0
      %v532 = vsel %vm467, %v438, 0
      %v535 = vsel %vm467, %v439, 0
      %v538 = vsel %vm467, %v440, 0
      %v541 = vsel %vm467, %v441, 0
      %v544 = vsel %vm467, %v442, 0
      %v547 = vsel %vm467, %v443, 0
      %v550 = vsel %vm467, %v444, 0
      %v553 = vsel %vm467, %v445, 0
      %v556 = vsel %vm467, %v446, 0
      %v559 = vsel %vm467, %v447, 0
      %v562 = vsel %vm467, %v448, 0
      %564 = vmatprep.subr.bf16.mxu0 0
      %565 = vmatpush1.bf16.msra.mxu0 0
      %566 = vmatprep.subr.bf16.mxu0 0
      %567 = vmatpush1.bf16.msra.mxu0 0
      %568 = vmatprep.subr.bf16.mxu0 0
      %569 = vmatpush1.bf16.msra.mxu0 0
      %570 = vmatprep.subr.bf16.mxu0 0
      %571 = vmatpush1.bf16.msra.mxu0 0
      %572 = vmatprep.subr.bf16.mxu0 0
      %573 = vmatpush1.bf16.msra.mxu0 0
      %574 = vmatprep.subr.bf16.mxu0 0
      %575 = vmatpush1.bf16.msra.mxu0 %v463
      %576 = vmatprep.subr.bf16.mxu0 0
      %577 = vmatpush1.bf16.msra.mxu0 %v462
      %578 = vmatprep.subr.bf16.mxu0 0
      %579 = vmatpush1.bf16.msra.mxu0 %v461
      %580 = vmatprep.subr.bf16.mxu0 0
      %581 = vmatpush2.bf16.msra.mxu0 0
      %582 = vmatprep.subr.bf16.mxu0 0
      %583 = vmatpush2.bf16.msra.mxu0 0
      %584 = vmatprep.subr.bf16.mxu0 0
      %585 = vmatpush2.bf16.msra.mxu0 0
      %586 = vmatprep.subr.bf16.mxu0 0
      %587 = vmatpush2.bf16.msra.mxu0 0
      %588 = vmatprep.subr.bf16.mxu0 0
      %589 = vmatpush2.bf16.msra.mxu0 0
      %590 = vmatprep.subr.bf16.mxu0 0
      %591 = vmatpush2.bf16.msra.mxu0 0
      %592 = vmatprep.subr.bf16.mxu0 0
      %593 = vmatpush2.bf16.msra.mxu0 0
      %594 = vmatprep.subr.bf16.mxu0 0
      %595 = vmatpush2.bf16.msra.mxu0 0
      %596 = vmatprep.mubr.bf16.mxu0 0
      %597 = vmatmul.mubr.bf16.gmra.mxu0 %v469
      %v598 = vpop.f32.mrf.mxu0
      %v599 = vadd.f32 0.0, %v598
      %v600 = vpop.f32.mrf.mxu0
      %v601 = vpop.f32.mrf.mxu0
      %v602 = vadd.f32 0.0, %v601
      %v603 = vpop.f32.mrf.mxu0
      %604 = vmatprep.mubr.bf16.mxu0 0
      %605 = vmatmul.mubr.bf16.gmra.mxu0 %v472
      %v606 = vpop.f32.mrf.mxu0
      %v607 = vadd.f32 0.0, %v606
      %v608 = vpop.f32.mrf.mxu0
      %v609 = vpop.f32.mrf.mxu0
      %v610 = vadd.f32 0.0, %v609
      %v611 = vpop.f32.mrf.mxu0
      %612 = vmatprep.mubr.bf16.mxu0 0
      %613 = vmatmul.mubr.bf16.gmra.mxu0 %v475
      %v614 = vpop.f32.mrf.mxu0
      %v615 = vadd.f32 0.0, %v614
      %v616 = vpop.f32.mrf.mxu0
      %v617 = vpop.f32.mrf.mxu0
      %v618 = vadd.f32 0.0, %v617
      %v619 = vpop.f32.mrf.mxu0
      %620 = vmatprep.mubr.bf16.mxu0 0
      %621 = vmatmul.mubr.bf16.gmra.mxu0 %v478
      %v622 = vpop.f32.mrf.mxu0
      %v623 = vadd.f32 0.0, %v622
      %v624 = vpop.f32.mrf.mxu0
      %v625 = vpop.f32.mrf.mxu0
      %v626 = vadd.f32 0.0, %v625
      %v627 = vpop.f32.mrf.mxu0
      %628 = vmatprep.mubr.bf16.mxu0 0
      %629 = vmatmul.mubr.bf16.gmra.mxu0 %v481
      %v630 = vpop.f32.mrf.mxu0
      %v631 = vadd.f32 0.0, %v630
      %v632 = vpop.f32.mrf.mxu0
      %v633 = vpop.f32.mrf.mxu0
      %v634 = vadd.f32 0.0, %v633
      %v635 = vpop.f32.mrf.mxu0
      %636 = vmatprep.mubr.bf16.mxu0 0
      %637 = vmatmul.mubr.bf16.gmra.mxu0 %v484
      %v638 = vpop.f32.mrf.mxu0
      %v639 = vadd.f32 0.0, %v638
      %v640 = vpop.f32.mrf.mxu0
      %v641 = vpop.f32.mrf.mxu0
      %v642 = vadd.f32 0.0, %v641
      %v643 = vpop.f32.mrf.mxu0
      %644 = vmatprep.mubr.bf16.mxu0 0
      %645 = vmatmul.mubr.bf16.gmra.mxu0 %v487
      %v646 = vpop.f32.mrf.mxu0
      %v647 = vadd.f32 0.0, %v646
      %v648 = vpop.f32.mrf.mxu0
      %v649 = vpop.f32.mrf.mxu0
      %v650 = vadd.f32 0.0, %v649
      %v651 = vpop.f32.mrf.mxu0
      %652 = vmatprep.mubr.bf16.mxu0 0
      %653 = vmatmul.mubr.bf16.gmra.mxu0 %v490
      %v654 = vpop.f32.mrf.mxu0
      %v655 = vadd.f32 0.0, %v654
      %v656 = vpop.f32.mrf.mxu0
      %v657 = vpop.f32.mrf.mxu0
      %v658 = vadd.f32 0.0, %v657
      %v659 = vpop.f32.mrf.mxu0
      %660 = vmatprep.mubr.bf16.mxu0 0
      %661 = vmatmul.mubr.bf16.gmra.mxu0 %v493
      %v662 = vpop.f32.mrf.mxu0
      %v663 = vadd.f32 0.0, %v662
      %v664 = vpop.f32.mrf.mxu0
      %v665 = vpop.f32.mrf.mxu0
      %v666 = vadd.f32 0.0, %v665
      %v667 = vpop.f32.mrf.mxu0
      %668 = vmatprep.mubr.bf16.mxu0 0
      %669 = vmatmul.mubr.bf16.gmra.mxu0 %v496
      %v670 = vpop.f32.mrf.mxu0
      %v671 = vadd.f32 0.0, %v670
      %v672 = vpop.f32.mrf.mxu0
      %v673 = vpop.f32.mrf.mxu0
      %v674 = vadd.f32 0.0, %v673
      %v675 = vpop.f32.mrf.mxu0
      %676 = vmatprep.mubr.bf16.mxu0 0
      %677 = vmatmul.mubr.bf16.gmra.mxu0 %v499
      %v678 = vpop.f32.mrf.mxu0
      %v679 = vadd.f32 0.0, %v678
      %v680 = vpop.f32.mrf.mxu0
      %v681 = vpop.f32.mrf.mxu0
      %v682 = vadd.f32 0.0, %v681
      %v683 = vpop.f32.mrf.mxu0
      %684 = vmatprep.mubr.bf16.mxu0 0
      %685 = vmatmul.mubr.bf16.gmra.mxu0 %v502
      %v686 = vpop.f32.mrf.mxu0
      %v687 = vadd.f32 0.0, %v686
      %v688 = vpop.f32.mrf.mxu0
      %v689 = vpop.f32.mrf.mxu0
      %v690 = vadd.f32 0.0, %v689
      %v691 = vpop.f32.mrf.mxu0
      %692 = vmatprep.mubr.bf16.mxu0 0
      %693 = vmatmul.mubr.bf16.gmra.mxu0 %v505
      %v694 = vpop.f32.mrf.mxu0
      %v695 = vadd.f32 0.0, %v694
      %v696 = vpop.f32.mrf.mxu0
      %v697 = vpop.f32.mrf.mxu0
      %v698 = vadd.f32 0.0, %v697
      %v699 = vpop.f32.mrf.mxu0
      %700 = vmatprep.mubr.bf16.mxu0 0
      %701 = vmatmul.mubr.bf16.gmra.mxu0 %v508
      %v702 = vpop.f32.mrf.mxu0
      %v703 = vadd.f32 0.0, %v702
      %v704 = vpop.f32.mrf.mxu0
      %v705 = vpop.f32.mrf.mxu0
      %v706 = vadd.f32 0.0, %v705
      %v707 = vpop.f32.mrf.mxu0
      %708 = vmatprep.mubr.bf16.mxu0 0
      %709 = vmatmul.mubr.bf16.gmra.mxu0 %v511
      %v710 = vpop.f32.mrf.mxu0
      %v711 = vadd.f32 0.0, %v710
      %v712 = vpop.f32.mrf.mxu0
      %v713 = vpop.f32.mrf.mxu0
      %v714 = vadd.f32 0.0, %v713
      %v715 = vpop.f32.mrf.mxu0
      %716 = vmatprep.mubr.bf16.mxu0 0
      %717 = vmatmul.mubr.bf16.gmra.mxu0 %v514
      %v718 = vpop.f32.mrf.mxu0
      %v719 = vadd.f32 0.0, %v718
      %v720 = vpop.f32.mrf.mxu0
      %v721 = vpop.f32.mrf.mxu0
      %v722 = vadd.f32 0.0, %v721
      %v723 = vpop.f32.mrf.mxu0
      %724 = vmatprep.mubr.bf16.mxu0 0
      %725 = vmatmul.mubr.bf16.gmra.mxu0 %v517
      %v726 = vpop.f32.mrf.mxu0
      %v727 = vadd.f32 0.0, %v726
      %v728 = vpop.f32.mrf.mxu0
      %v729 = vpop.f32.mrf.mxu0
      %v730 = vadd.f32 0.0, %v729
      %v731 = vpop.f32.mrf.mxu0
      %732 = vmatprep.mubr.bf16.mxu0 0
      %733 = vmatmul.mubr.bf16.gmra.mxu0 %v520
      %v734 = vpop.f32.mrf.mxu0
      %v735 = vadd.f32 0.0, %v734
      %v736 = vpop.f32.mrf.mxu0
      %v737 = vpop.f32.mrf.mxu0
      %v738 = vadd.f32 0.0, %v737
      %v739 = vpop.f32.mrf.mxu0
      %740 = vmatprep.mubr.bf16.mxu0 0
      %741 = vmatmul.mubr.bf16.gmra.mxu0 %v523
      %v742 = vpop.f32.mrf.mxu0
      %v743 = vadd.f32 0.0, %v742
      %v744 = vpop.f32.mrf.mxu0
      %v745 = vpop.f32.mrf.mxu0
      %v746 = vadd.f32 0.0, %v745
      %v747 = vpop.f32.mrf.mxu0
      %748 = vmatprep.mubr.bf16.mxu0 0
      %749 = vmatmul.mubr.bf16.gmra.mxu0 %v526
      %v750 = vpop.f32.mrf.mxu0
      %v751 = vadd.f32 0.0, %v750
      %v752 = vpop.f32.mrf.mxu0
      %v753 = vpop.f32.mrf.mxu0
      %v754 = vadd.f32 0.0, %v753
      %v755 = vpop.f32.mrf.mxu0
      %756 = vmatprep.mubr.bf16.mxu0 0
      %757 = vmatmul.mubr.bf16.gmra.mxu0 %v529
      %v758 = vpop.f32.mrf.mxu0
      %v759 = vadd.f32 0.0, %v758
      %v760 = vpop.f32.mrf.mxu0
      %v761 = vpop.f32.mrf.mxu0
      %v762 = vadd.f32 0.0, %v761
      %v763 = vpop.f32.mrf.mxu0
      %764 = vmatprep.mubr.bf16.mxu0 0
      %765 = vmatmul.mubr.bf16.gmra.mxu0 %v532
      %v766 = vpop.f32.mrf.mxu0
      %v767 = vadd.f32 0.0, %v766
      %v768 = vpop.f32.mrf.mxu0
      %v769 = vpop.f32.mrf.mxu0
      %v770 = vadd.f32 0.0, %v769
      %v771 = vpop.f32.mrf.mxu0
      %772 = vmatprep.mubr.bf16.mxu0 0
      %773 = vmatmul.mubr.bf16.gmra.mxu0 %v535
      %v774 = vpop.f32.mrf.mxu0
      %v775 = vadd.f32 0.0, %v774
      %v776 = vpop.f32.mrf.mxu0
      %v777 = vpop.f32.mrf.mxu0
      %v778 = vadd.f32 0.0, %v777
      %v779 = vpop.f32.mrf.mxu0
      %780 = vmatprep.mubr.bf16.mxu0 0
      %781 = vmatmul.mubr.bf16.gmra.mxu0 %v538
      %v782 = vpop.f32.mrf.mxu0
      %v783 = vadd.f32 0.0, %v782
      %v784 = vpop.f32.mrf.mxu0
      %v785 = vpop.f32.mrf.mxu0
      %v786 = vadd.f32 0.0, %v785
      %v787 = vpop.f32.mrf.mxu0
      %788 = vmatprep.mubr.bf16.mxu0 0
      %789 = vmatmul.mubr.bf16.gmra.mxu0 %v541
      %v790 = vpop.f32.mrf.mxu0
      %v791 = vadd.f32 0.0, %v790
      %v792 = vpop.f32.mrf.mxu0
      %v793 = vpop.f32.mrf.mxu0
      %v794 = vadd.f32 0.0, %v793
      %v795 = vpop.f32.mrf.mxu0
      %796 = vmatprep.mubr.bf16.mxu0 0
      %797 = vmatmul.mubr.bf16.gmra.mxu0 %v544
      %v798 = vpop.f32.mrf.mxu0
      %v799 = vadd.f32 0.0, %v798
      %v800 = vpop.f32.mrf.mxu0
      %v801 = vpop.f32.mrf.mxu0
      %v802 = vadd.f32 0.0, %v801
      %v803 = vpop.f32.mrf.mxu0
      %804 = vmatprep.mubr.bf16.mxu0 0
      %805 = vmatmul.mubr.bf16.gmra.mxu0 %v547
      %v806 = vpop.f32.mrf.mxu0
      %v807 = vadd.f32 0.0, %v806
      %v808 = vpop.f32.mrf.mxu0
      %v809 = vpop.f32.mrf.mxu0
      %v810 = vadd.f32 0.0, %v809
      %v811 = vpop.f32.mrf.mxu0
      %812 = vmatprep.mubr.bf16.mxu0 0
      %813 = vmatmul.mubr.bf16.gmra.mxu0 %v550
      %v814 = vpop.f32.mrf.mxu0
      %v815 = vadd.f32 0.0, %v814
      %v816 = vpop.f32.mrf.mxu0
      %v817 = vpop.f32.mrf.mxu0
      %v818 = vadd.f32 0.0, %v817
      %v819 = vpop.f32.mrf.mxu0
      %820 = vmatprep.mubr.bf16.mxu0 0
      %821 = vmatmul.mubr.bf16.gmra.mxu0 %v553
      %v822 = vpop.f32.mrf.mxu0
      %v823 = vadd.f32 0.0, %v822
      %v824 = vpop.f32.mrf.mxu0
      %v825 = vpop.f32.mrf.mxu0
      %v826 = vadd.f32 0.0, %v825
      %v827 = vpop.f32.mrf.mxu0
      %828 = vmatprep.mubr.bf16.mxu0 0
      %829 = vmatmul.mubr.bf16.gmra.mxu0 %v556
      %v830 = vpop.f32.mrf.mxu0
      %v831 = vadd.f32 0.0, %v830
      %v832 = vpop.f32.mrf.mxu0
      %v833 = vpop.f32.mrf.mxu0
      %v834 = vadd.f32 0.0, %v833
      %v835 = vpop.f32.mrf.mxu0
      %836 = vmatprep.mubr.bf16.mxu0 0
      %837 = vmatmul.mubr.bf16.gmra.mxu0 %v559
      %v838 = vpop.f32.mrf.mxu0
      %v839 = vadd.f32 0.0, %v838
      %v840 = vpop.f32.mrf.mxu0
      %v841 = vpop.f32.mrf.mxu0
      %v842 = vadd.f32 0.0, %v841
      %v843 = vpop.f32.mrf.mxu0
      %844 = vmatprep.mubr.bf16.mxu0 0
      %845 = vmatmul.mubr.bf16.gmra.mxu0 %v562
      %v846 = vpop.f32.mrf.mxu0
      %v847 = vadd.f32 0.0, %v846
      %v848 = vpop.f32.mrf.mxu0
      %v849 = vpop.f32.mrf.mxu0
      %v850 = vadd.f32 0.0, %v849
      %v851 = vpop.f32.mrf.mxu0
      %852 = vdwg.mxu0
      %p853 = scmp.eq.s32.totalorder %s19, 0
      // Predicated region
      $region37: #{classifier_forward.4} parent=35 // pred_check
        %p854 = pneg %p853
      $region38: #{classifier_forward.4} parent=35 // pred_check_branch
        %856 = sbr.rel (%p854) target = $region40
      $region39: #{classifier_forward.4} parent=35 // pred_region
        %v857 = vadd.f32 %v599, %v602
        %v858 = vadd.f32 %v857, %v607
        %v859 = vadd.f32 %v858, %v610
        %v860 = vadd.f32 %v859, %v615
        %v861 = vadd.f32 %v860, %v618
        %v862 = vadd.f32 %v861, %v623
        %v863 = vadd.f32 %v862, %v626
        %v864 = vadd.f32 %v863, %v631
        %v865 = vadd.f32 %v864, %v634
        %v866 = vadd.f32 %v865, %v639
        %v867 = vadd.f32 %v866, %v642
        %v868 = vadd.f32 %v867, %v647
        %v869 = vadd.f32 %v868, %v650
        %v870 = vadd.f32 %v869, %v655
        %v871 = vadd.f32 %v870, %v658
        %v872 = vadd.f32 %v871, %v663
        %v873 = vadd.f32 %v872, %v666
        %v874 = vadd.f32 %v873, %v671
        %v875 = vadd.f32 %v874, %v674
        %v876 = vadd.f32 %v875, %v679
        %v877 = vadd.f32 %v876, %v682
        %v878 = vadd.f32 %v877, %v687
        %v879 = vadd.f32 %v878, %v690
        %v880 = vadd.f32 %v879, %v695
        %v881 = vadd.f32 %v880, %v698
        %v882 = vadd.f32 %v881, %v703
        %v883 = vadd.f32 %v882, %v706
        %v884 = vadd.f32 %v883, %v711
        %v885 = vadd.f32 %v884, %v714
        %v886 = vadd.f32 %v885, %v719
        %v887 = vadd.f32 %v886, %v722
        %v888 = vadd.f32 %v887, %v727
        %v889 = vadd.f32 %v888, %v730
        %v890 = vadd.f32 %v889, %v735
        %v891 = vadd.f32 %v890, %v738
        %v892 = vadd.f32 %v891, %v743
        %v893 = vadd.f32 %v892, %v746
        %v894 = vadd.f32 %v893, %v751
        %v895 = vadd.f32 %v894, %v754
        %v896 = vadd.f32 %v895, %v759
        %v897 = vadd.f32 %v896, %v762
        %v898 = vadd.f32 %v897, %v767
        %v899 = vadd.f32 %v898, %v770
        %v900 = vadd.f32 %v899, %v775
        %v901 = vadd.f32 %v900, %v778
        %v902 = vadd.f32 %v901, %v783
        %v903 = vadd.f32 %v902, %v786
        %v904 = vadd.f32 %v903, %v791
        %v905 = vadd.f32 %v904, %v794
        %v906 = vadd.f32 %v905, %v799
        %v907 = vadd.f32 %v906, %v802
        %v908 = vadd.f32 %v907, %v807
        %v909 = vadd.f32 %v908, %v810
        %v910 = vadd.f32 %v909, %v815
        %v911 = vadd.f32 %v910, %v818
        %v912 = vadd.f32 %v911, %v823
        %v913 = vadd.f32 %v912, %v826
        %v914 = vadd.f32 %v913, %v831
        %v915 = vadd.f32 %v914, %v834
        %v916 = vadd.f32 %v915, %v839
        %v917 = vadd.f32 %v916, %v842
        %v918 = vadd.f32 %v917, %v847
        %v919 = vadd.f32 %v918, %v850
        %v920 = vrot.slane %v919, 4
        %v921 = vadd.f32 %v919, %v920
        %v922 = vrot.slane %v921, 2
        %v923 = vadd.f32 %v921, %v922
        %v924 = vrot.slane %v923, 1
        %v925 = vadd.f32 %v923, %v924
        %v926 = vmul.f32 %v599, %v599
        %v927 = vmul.f32 %v602, %v602
        %v928 = vmul.f32 %v607, %v607
        %v929 = vmul.f32 %v610, %v610
        %v930 = vmul.f32 %v615, %v615
        %v931 = vmul.f32 %v618, %v618
        %v932 = vmul.f32 %v623, %v623
        %v933 = vmul.f32 %v626, %v626
        %v934 = vmul.f32 %v631, %v631
        %v935 = vmul.f32 %v634, %v634
        %v936 = vmul.f32 %v639, %v639
        %v937 = vmul.f32 %v642, %v642
        %v938 = vmul.f32 %v647, %v647
        %v939 = vmul.f32 %v650, %v650
        %v940 = vmul.f32 %v655, %v655
        %v941 = vmul.f32 %v658, %v658
        %v942 = vmul.f32 %v663, %v663
        %v943 = vmul.f32 %v666, %v666
        %v944 = vmul.f32 %v671, %v671
        %v945 = vmul.f32 %v674, %v674
        %v946 = vmul.f32 %v679, %v679
        %v947 = vmul.f32 %v682, %v682
        %v948 = vmul.f32 %v687, %v687
        %v949 = vmul.f32 %v690, %v690
        %v950 = vmul.f32 %v695, %v695
        %v951 = vmul.f32 %v698, %v698
        %v952 = vmul.f32 %v703, %v703
        %v953 = vmul.f32 %v706, %v706
        %v954 = vmul.f32 %v711, %v711
        %v955 = vmul.f32 %v714, %v714
        %v956 = vmul.f32 %v719, %v719
        %v957 = vmul.f32 %v722, %v722
        %v958 = vmul.f32 %v727, %v727
        %v959 = vmul.f32 %v730, %v730
        %v960 = vmul.f32 %v735, %v735
        %v961 = vmul.f32 %v738, %v738
        %v962 = vmul.f32 %v743, %v743
        %v963 = vmul.f32 %v746, %v746
        %v964 = vmul.f32 %v751, %v751
        %v965 = vmul.f32 %v754, %v754
        %v966 = vmul.f32 %v759, %v759
        %v967 = vmul.f32 %v762, %v762
        %v968 = vmul.f32 %v767, %v767
        %v969 = vmul.f32 %v770, %v770
        %v970 = vmul.f32 %v775, %v775
        %v971 = vmul.f32 %v778, %v778
        %v972 = vmul.f32 %v783, %v783
        %v973 = vmul.f32 %v786, %v786
        %v974 = vmul.f32 %v791, %v791
        %v975 = vmul.f32 %v794, %v794
        %v976 = vmul.f32 %v799, %v799
        %v977 = vmul.f32 %v802, %v802
        %v978 = vmul.f32 %v807, %v807
        %v979 = vmul.f32 %v810, %v810
        %v980 = vmul.f32 %v815, %v815
        %v981 = vmul.f32 %v818, %v818
        %v982 = vmul.f32 %v823, %v823
        %v983 = vmul.f32 %v826, %v826
        %v984 = vmul.f32 %v831, %v831
        %v985 = vmul.f32 %v834, %v834
        %v986 = vmul.f32 %v839, %v839
        %v987 = vmul.f32 %v842, %v842
        %v988 = vmul.f32 %v847, %v847
        %v989 = vmul.f32 %v850, %v850
        %v990 = vadd.f32 %v926, %v927
        %v991 = vadd.f32 %v990, %v928
        %v992 = vadd.f32 %v991, %v929
        %v993 = vadd.f32 %v992, %v930
        %v994 = vadd.f32 %v993, %v931
        %v995 = vadd.f32 %v994, %v932
        %v996 = vadd.f32 %v995, %v933
        %v997 = vadd.f32 %v996, %v934
        %v998 = vadd.f32 %v997, %v935
        %v999 = vadd.f32 %v998, %v936
        %v1000 = vadd.f32 %v999, %v937
        %v1001 = vadd.f32 %v1000, %v938
        %v1002 = vadd.f32 %v1001, %v939
        %v1003 = vadd.f32 %v1002, %v940
        %v1004 = vadd.f32 %v1003, %v941
        %v1005 = vadd.f32 %v1004, %v942
        %v1006 = vadd.f32 %v1005, %v943
        %v1007 = vadd.f32 %v1006, %v944
        %v1008 = vadd.f32 %v1007, %v945
        %v1009 = vadd.f32 %v1008, %v946
        %v1010 = vadd.f32 %v1009, %v947
        %v1011 = vadd.f32 %v1010, %v948
        %v1012 = vadd.f32 %v1011, %v949
        %v1013 = vadd.f32 %v1012, %v950
        %v1014 = vadd.f32 %v1013, %v951
        %v1015 = vadd.f32 %v1014, %v952
        %v1016 = vadd.f32 %v1015, %v953
        %v1017 = vadd.f32 %v1016, %v954
        %v1018 = vadd.f32 %v1017, %v955
        %v1019 = vadd.f32 %v1018, %v956
        %v1020 = vadd.f32 %v1019, %v957
        %v1021 = vadd.f32 %v1020, %v958
        %v1022 = vadd.f32 %v1021, %v959
        %v1023 = vadd.f32 %v1022, %v960
        %v1024 = vadd.f32 %v1023, %v961
        %v1025 = vadd.f32 %v1024, %v962
        %v1026 = vadd.f32 %v1025, %v963
        %v1027 = vadd.f32 %v1026, %v964
        %v1028 = vadd.f32 %v1027, %v965
        %v1029 = vadd.f32 %v1028, %v966
        %v1030 = vadd.f32 %v1029, %v967
        %v1031 = vadd.f32 %v1030, %v968
        %v1032 = vadd.f32 %v1031, %v969
        %v1033 = vadd.f32 %v1032, %v970
        %v1034 = vadd.f32 %v1033, %v971
        %v1035 = vadd.f32 %v1034, %v972
        %v1036 = vadd.f32 %v1035, %v973
        %v1037 = vadd.f32 %v1036, %v974
        %v1038 = vadd.f32 %v1037, %v975
        %v1039 = vadd.f32 %v1038, %v976
        %v1040 = vadd.f32 %v1039, %v977
        %v1041 = vadd.f32 %v1040, %v978
        %v1042 = vadd.f32 %v1041, %v979
        %v1043 = vadd.f32 %v1042, %v980
        %v1044 = vadd.f32 %v1043, %v981
        %v1045 = vadd.f32 %v1044, %v982
        %v1046 = vadd.f32 %v1045, %v983
        %v1047 = vadd.f32 %v1046, %v984
        %v1048 = vadd.f32 %v1047, %v985
        %v1049 = vadd.f32 %v1048, %v986
        %v1050 = vadd.f32 %v1049, %v987
        %v1051 = vadd.f32 %v1050, %v988
        %v1052 = vadd.f32 %v1051, %v989
        %v1053 = vrot.slane %v1052, 4
        %v1054 = vadd.f32 %v1052, %v1053
        %v1055 = vrot.slane %v1054, 2
        %v1056 = vadd.f32 %v1054, %v1055
        %v1057 = vrot.slane %v1056, 1
        %v1058 = vadd.f32 %v1056, %v1057
        %p1059 = scmp.eq.s32.totalorder %s20, 0
        // Predicated region
        $region41: #{classifier_forward.4} parent=39 // pred_check
          %p1060 = pneg %p1059
        $region42: #{classifier_forward.4} parent=39 // pred_check_branch
          %1062 = sbr.rel (%p1060) target = $region44
        $region43: #{classifier_forward.4} parent=39 // pred_region
          %1063 = vst [vmem:[#allocation2] sm:$0x1] 0.0
          %1064 = vst [vmem:[#allocation3] sm:$0x1] 0.0
        $region44: #{classifier_forward.4} parent=39 // pred_fallthru
          _
        %v1065 = vld [vmem:[#allocation2] sm:$0x1]
        %v1066 = vadd.f32 %v1065, %v925
        %1067 = vst [vmem:[#allocation2] sm:$0x1] %v1066
        %v1068 = vld [vmem:[#allocation3] sm:$0x1]
        %v1069 = vadd.f32 %v1068, %v1058
        %1070 = vst [vmem:[#allocation3] sm:$0x1] %v1069
        %p1071 = scmp.eq.s32.totalorder %s20, 3
        // Predicated region
        $region45: #{classifier_forward.4} parent=39 // pred_check
          %p1072 = pneg %p1071
        $region46: #{classifier_forward.4} parent=39 // pred_check_branch
          %1074 = sbr.rel (%p1072) target = $region48
        $region47: #{classifier_forward.4} parent=39 // pred_region
          %v1075 = vld [vmem:[#allocation2] sm:$0x1]
          %v1076 = vmul.f32 %v1075, 0.0005202914
          %v1077 = vld [vmem:[#allocation3] sm:$0x1]
          %v1078 = vmul.f32 %v1077, 0.0005202914
          %v1079 = vmul.f32 %v1076, %v1076
          %v1080 = vsub.f32 %v1078, %v1079
          %v1081 = vmax.f32 %v1080, 0.0
          %v1082 = vadd.f32 %v1081, 1e-05
          %v1083 = vrsqrt.pop %v1082
          %v1084 = vld [vmem:[%s2] sm:$0x1]
          %v1085 = vmul.f32 %v1084, %v1083
          %1086 = vst [vmem:[#allocation4] sm:$0x1] %v1085
          %v1087 = vld [vmem:[%s3] sm:$0x1]
          %v1088 = vmul.f32 %v1076, %v1085
          %v1089 = vsub.f32 %v1087, %v1088
          %1090 = vst [vmem:[#allocation5] sm:$0x1] %v1089
        $region48: #{classifier_forward.4} parent=39 // pred_fallthru
          _
      $region40: #{classifier_forward.4} parent=35 // pred_fallthru
        _
      %p1091 = scmp.eq.s32.totalorder %s19, 1
      // Predicated region
      $region49: #{classifier_forward.4} parent=35 // pred_check
        %p1092 = pneg %p1091
      $region50: #{classifier_forward.4} parent=35 // pred_check_branch
        %1094 = sbr.rel (%p1092) target = $region52
      $region51: #{classifier_forward.4} parent=35 // pred_region
        %v1095 = vld [vmem:[#allocation4] sm:$0x1]
        %v1097 = vlaneseq
        %v1098 = vshrl.u32 %v1097, 7
        %v1099 = vsub.s32 0, %v1098
        %v1100 = vrot.slane %v1095, %v1099
        %v1102 = vmul.f32 %v599, %v1100
        %v1103 = vmul.f32 %v602, %v1100
        %v1104 = vmul.f32 %v607, %v1100
        %v1105 = vmul.f32 %v610, %v1100
        %v1106 = vmul.f32 %v615, %v1100
        %v1107 = vmul.f32 %v618, %v1100
        %v1108 = vmul.f32 %v623, %v1100
        %v1109 = vmul.f32 %v626, %v1100
        %v1110 = vmul.f32 %v631, %v1100
        %v1111 = vmul.f32 %v634, %v1100
        %v1112 = vmul.f32 %v639, %v1100
        %v1113 = vmul.f32 %v642, %v1100
        %v1114 = vmul.f32 %v647, %v1100
        %v1115 = vmul.f32 %v650, %v1100
        %v1116 = vmul.f32 %v655, %v1100
        %v1117 = vmul.f32 %v658, %v1100
        %v1118 = vmul.f32 %v663, %v1100
        %v1119 = vmul.f32 %v666, %v1100
        %v1120 = vmul.f32 %v671, %v1100
        %v1121 = vmul.f32 %v674, %v1100
        %v1122 = vmul.f32 %v679, %v1100
        %v1123 = vmul.f32 %v682, %v1100
        %v1124 = vmul.f32 %v687, %v1100
        %v1125 = vmul.f32 %v690, %v1100
        %v1126 = vmul.f32 %v695, %v1100
        %v1127 = vmul.f32 %v698, %v1100
        %v1128 = vmul.f32 %v703, %v1100
        %v1129 = vmul.f32 %v706, %v1100
        %v1130 = vmul.f32 %v711, %v1100
        %v1131 = vmul.f32 %v714, %v1100
        %v1132 = vmul.f32 %v719, %v1100
        %v1133 = vmul.f32 %v722, %v1100
        %v1134 = vmul.f32 %v727, %v1100
        %v1135 = vmul.f32 %v730, %v1100
        %v1136 = vmul.f32 %v735, %v1100
        %v1137 = vmul.f32 %v738, %v1100
        %v1138 = vmul.f32 %v743, %v1100
        %v1139 = vmul.f32 %v746, %v1100
        %v1140 = vmul.f32 %v751, %v1100
        %v1141 = vmul.f32 %v754, %v1100
        %v1142 = vmul.f32 %v759, %v1100
        %v1143 = vmul.f32 %v762, %v1100
        %v1144 = vmul.f32 %v767, %v1100
        %v1145 = vmul.f32 %v770, %v1100
        %v1146 = vmul.f32 %v775, %v1100
        %v1147 = vmul.f32 %v778, %v1100
        %v1148 = vmul.f32 %v783, %v1100
        %v1149 = vmul.f32 %v786, %v1100
        %v1150 = vmul.f32 %v791, %v1100
        %v1151 = vmul.f32 %v794, %v1100
        %v1152 = vmul.f32 %v799, %v1100
        %v1153 = vmul.f32 %v802, %v1100
        %v1154 = vmul.f32 %v807, %v1100
        %v1155 = vmul.f32 %v810, %v1100
        %v1156 = vmul.f32 %v815, %v1100
        %v1157 = vmul.f32 %v818, %v1100
        %v1158 = vmul.f32 %v823, %v1100
        %v1159 = vmul.f32 %v826, %v1100
        %v1160 = vmul.f32 %v831, %v1100
        %v1161 = vmul.f32 %v834, %v1100
        %v1162 = vmul.f32 %v839, %v1100
        %v1163 = vmul.f32 %v842, %v1100
        %v1164 = vmul.f32 %v847, %v1100
        %v1165 = vmul.f32 %v850, %v1100
        %v1166 = vld [vmem:[#allocation5] sm:$0x1]
        %v1168 = vlaneseq
        %v1169 = vshrl.u32 %v1168, 7
        %v1170 = vsub.s32 0, %v1169
        %v1171 = vrot.slane %v1166, %v1170
        %v1173 = vadd.f32 %v1102, %v1171
        %v1174 = vadd.f32 %v1103, %v1171
        %v1175 = vadd.f32 %v1104, %v1171
        %v1176 = vadd.f32 %v1105, %v1171
        %v1177 = vadd.f32 %v1106, %v1171
        %v1178 = vadd.f32 %v1107, %v1171
        %v1179 = vadd.f32 %v1108, %v1171
        %v1180 = vadd.f32 %v1109, %v1171
        %v1181 = vadd.f32 %v1110, %v1171
        %v1182 = vadd.f32 %v1111, %v1171
        %v1183 = vadd.f32 %v1112, %v1171
        %v1184 = vadd.f32 %v1113, %v1171
        %v1185 = vadd.f32 %v1114, %v1171
        %v1186 = vadd.f32 %v1115, %v1171
        %v1187 = vadd.f32 %v1116, %v1171
        %v1188 = vadd.f32 %v1117, %v1171
        %v1189 = vadd.f32 %v1118, %v1171
        %v1190 = vadd.f32 %v1119, %v1171
        %v1191 = vadd.f32 %v1120, %v1171
        %v1192 = vadd.f32 %v1121, %v1171
        %v1193 = vadd.f32 %v1122, %v1171
        %v1194 = vadd.f32 %v1123, %v1171
        %v1195 = vadd.f32 %v1124, %v1171
        %v1196 = vadd.f32 %v1125, %v1171
        %v1197 = vadd.f32 %v1126, %v1171
        %v1198 = vadd.f32 %v1127, %v1171
        %v1199 = vadd.f32 %v1128, %v1171
        %v1200 = vadd.f32 %v1129, %v1171
        %v1201 = vadd.f32 %v1130, %v1171
        %v1202 = vadd.f32 %v1131, %v1171
        %v1203 = vadd.f32 %v1132, %v1171
        %v1204 = vadd.f32 %v1133, %v1171
        %v1205 = vadd.f32 %v1134, %v1171
        %v1206 = vadd.f32 %v1135, %v1171
        %v1207 = vadd.f32 %v1136, %v1171
        %v1208 = vadd.f32 %v1137, %v1171
        %v1209 = vadd.f32 %v1138, %v1171
        %v1210 = vadd.f32 %v1139, %v1171
        %v1211 = vadd.f32 %v1140, %v1171
        %v1212 = vadd.f32 %v1141, %v1171
        %v1213 = vadd.f32 %v1142, %v1171
        %v1214 = vadd.f32 %v1143, %v1171
        %v1215 = vadd.f32 %v1144, %v1171
        %v1216 = vadd.f32 %v1145, %v1171
        %v1217 = vadd.f32 %v1146, %v1171
        %v1218 = vadd.f32 %v1147, %v1171
        %v1219 = vadd.f32 %v1148, %v1171
        %v1220 = vadd.f32 %v1149, %v1171
        %v1221 = vadd.f32 %v1150, %v1171
        %v1222 = vadd.f32 %v1151, %v1171
        %v1223 = vadd.f32 %v1152, %v1171
        %v1224 = vadd.f32 %v1153, %v1171
        %v1225 = vadd.f32 %v1154, %v1171
        %v1226 = vadd.f32 %v1155, %v1171
        %v1227 = vadd.f32 %v1156, %v1171
        %v1228 = vadd.f32 %v1157, %v1171
        %v1229 = vadd.f32 %v1158, %v1171
        %v1230 = vadd.f32 %v1159, %v1171
        %v1231 = vadd.f32 %v1160, %v1171
        %v1232 = vadd.f32 %v1161, %v1171
        %v1233 = vadd.f32 %v1162, %v1171
        %v1234 = vadd.f32 %v1163, %v1171
        %v1235 = vadd.f32 %v1164, %v1171
        %v1236 = vadd.f32 %v1165, %v1171
        %vm1237 = vcmp.ge.f32.partialorder %v1173, 0.0
        %vm1238 = vcmp.ge.f32.partialorder %v1174, 0.0
        %vm1239 = vcmp.ge.f32.partialorder %v1175, 0.0
        %vm1240 = vcmp.ge.f32.partialorder %v1176, 0.0
        %vm1241 = vcmp.ge.f32.partialorder %v1177, 0.0
        %vm1242 = vcmp.ge.f32.partialorder %v1178, 0.0
        %vm1243 = vcmp.ge.f32.partialorder %v1179, 0.0
        %vm1244 = vcmp.ge.f32.partialorder %v1180, 0.0
        %vm1245 = vcmp.ge.f32.partialorder %v1181, 0.0
        %vm1246 = vcmp.ge.f32.partialorder %v1182, 0.0
        %vm1247 = vcmp.ge.f32.partialorder %v1183, 0.0
        %vm1248 = vcmp.ge.f32.partialorder %v1184, 0.0
        %vm1249 = vcmp.ge.f32.partialorder %v1185, 0.0
        %vm1250 = vcmp.ge.f32.partialorder %v1186, 0.0
        %vm1251 = vcmp.ge.f32.partialorder %v1187, 0.0
        %vm1252 = vcmp.ge.f32.partialorder %v1188, 0.0
        %vm1253 = vcmp.ge.f32.partialorder %v1189, 0.0
        %vm1254 = vcmp.ge.f32.partialorder %v1190, 0.0
        %vm1255 = vcmp.ge.f32.partialorder %v1191, 0.0
        %vm1256 = vcmp.ge.f32.partialorder %v1192, 0.0
        %vm1257 = vcmp.ge.f32.partialorder %v1193, 0.0
        %vm1258 = vcmp.ge.f32.partialorder %v1194, 0.0
        %vm1259 = vcmp.ge.f32.partialorder %v1195, 0.0
        %vm1260 = vcmp.ge.f32.partialorder %v1196, 0.0
        %vm1261 = vcmp.ge.f32.partialorder %v1197, 0.0
        %vm1262 = vcmp.ge.f32.partialorder %v1198, 0.0
        %vm1263 = vcmp.ge.f32.partialorder %v1199, 0.0
        %vm1264 = vcmp.ge.f32.partialorder %v1200, 0.0
        %vm1265 = vcmp.ge.f32.partialorder %v1201, 0.0
        %vm1266 = vcmp.ge.f32.partialorder %v1202, 0.0
        %vm1267 = vcmp.ge.f32.partialorder %v1203, 0.0
        %vm1268 = vcmp.ge.f32.partialorder %v1204, 0.0
        %vm1269 = vcmp.ge.f32.partialorder %v1205, 0.0
        %vm1270 = vcmp.ge.f32.partialorder %v1206, 0.0
        %vm1271 = vcmp.ge.f32.partialorder %v1207, 0.0
        %vm1272 = vcmp.ge.f32.partialorder %v1208, 0.0
        %vm1273 = vcmp.ge.f32.partialorder %v1209, 0.0
        %vm1274 = vcmp.ge.f32.partialorder %v1210, 0.0
        %vm1275 = vcmp.ge.f32.partialorder %v1211, 0.0
        %vm1276 = vcmp.ge.f32.partialorder %v1212, 0.0
        %vm1277 = vcmp.ge.f32.partialorder %v1213, 0.0
        %vm1278 = vcmp.ge.f32.partialorder %v1214, 0.0
        %vm1279 = vcmp.ge.f32.partialorder %v1215, 0.0
        %vm1280 = vcmp.ge.f32.partialorder %v1216, 0.0
        %vm1281 = vcmp.ge.f32.partialorder %v1217, 0.0
        %vm1282 = vcmp.ge.f32.partialorder %v1218, 0.0
        %vm1283 = vcmp.ge.f32.partialorder %v1219, 0.0
        %vm1284 = vcmp.ge.f32.partialorder %v1220, 0.0
        %vm1285 = vcmp.ge.f32.partialorder %v1221, 0.0
        %vm1286 = vcmp.ge.f32.partialorder %v1222, 0.0
        %vm1287 = vcmp.ge.f32.partialorder %v1223, 0.0
        %vm1288 = vcmp.ge.f32.partialorder %v1224, 0.0
        %vm1289 = vcmp.ge.f32.partialorder %v1225, 0.0
        %vm1290 = vcmp.ge.f32.partialorder %v1226, 0.0
        %vm1291 = vcmp.ge.f32.partialorder %v1227, 0.0
        %vm1292 = vcmp.ge.f32.partialorder %v1228, 0.0
        %vm1293 = vcmp.ge.f32.partialorder %v1229, 0.0
        %vm1294 = vcmp.ge.f32.partialorder %v1230, 0.0
        %vm1295 = vcmp.ge.f32.partialorder %v1231, 0.0
        %vm1296 = vcmp.ge.f32.partialorder %v1232, 0.0
        %vm1297 = vcmp.ge.f32.partialorder %v1233, 0.0
        %vm1298 = vcmp.ge.f32.partialorder %v1234, 0.0
        %vm1299 = vcmp.ge.f32.partialorder %v1235, 0.0
        %vm1300 = vcmp.ge.f32.partialorder %v1236, 0.0
        %v1301 = vmul.f32 %v1173, 0.2
        %v1302 = vmul.f32 %v1174, 0.2
        %v1303 = vmul.f32 %v1175, 0.2
        %v1304 = vmul.f32 %v1176, 0.2
        %v1305 = vmul.f32 %v1177, 0.2
        %v1306 = vmul.f32 %v1178, 0.2
        %v1307 = vmul.f32 %v1179, 0.2
        %v1308 = vmul.f32 %v1180, 0.2
        %v1309 = vmul.f32 %v1181, 0.2
        %v1310 = vmul.f32 %v1182, 0.2
        %v1311 = vmul.f32 %v1183, 0.2
        %v1312 = vmul.f32 %v1184, 0.2
        %v1313 = vmul.f32 %v1185, 0.2
        %v1314 = vmul.f32 %v1186, 0.2
        %v1315 = vmul.f32 %v1187, 0.2
        %v1316 = vmul.f32 %v1188, 0.2
        %v1317 = vmul.f32 %v1189, 0.2
        %v1318 = vmul.f32 %v1190, 0.2
        %v1319 = vmul.f32 %v1191, 0.2
        %v1320 = vmul.f32 %v1192, 0.2
        %v1321 = vmul.f32 %v1193, 0.2
        %v1322 = vmul.f32 %v1194, 0.2
        %v1323 = vmul.f32 %v1195, 0.2
        %v1324 = vmul.f32 %v1196, 0.2
        %v1325 = vmul.f32 %v1197, 0.2
        %v1326 = vmul.f32 %v1198, 0.2
        %v1327 = vmul.f32 %v1199, 0.2
        %v1328 = vmul.f32 %v1200, 0.2
        %v1329 = vmul.f32 %v1201, 0.2
        %v1330 = vmul.f32 %v1202, 0.2
        %v1331 = vmul.f32 %v1203, 0.2
        %v1332 = vmul.f32 %v1204, 0.2
        %v1333 = vmul.f32 %v1205, 0.2
        %v1334 = vmul.f32 %v1206, 0.2
        %v1335 = vmul.f32 %v1207, 0.2
        %v1336 = vmul.f32 %v1208, 0.2
        %v1337 = vmul.f32 %v1209, 0.2
        %v1338 = vmul.f32 %v1210, 0.2
        %v1339 = vmul.f32 %v1211, 0.2
        %v1340 = vmul.f32 %v1212, 0.2
        %v1341 = vmul.f32 %v1213, 0.2
        %v1342 = vmul.f32 %v1214, 0.2
        %v1343 = vmul.f32 %v1215, 0.2
        %v1344 = vmul.f32 %v1216, 0.2
        %v1345 = vmul.f32 %v1217, 0.2
        %v1346 = vmul.f32 %v1218, 0.2
        %v1347 = vmul.f32 %v1219, 0.2
        %v1348 = vmul.f32 %v1220, 0.2
        %v1349 = vmul.f32 %v1221, 0.2
        %v1350 = vmul.f32 %v1222, 0.2
        %v1351 = vmul.f32 %v1223, 0.2
        %v1352 = vmul.f32 %v1224, 0.2
        %v1353 = vmul.f32 %v1225, 0.2
        %v1354 = vmul.f32 %v1226, 0.2
        %v1355 = vmul.f32 %v1227, 0.2
        %v1356 = vmul.f32 %v1228, 0.2
        %v1357 = vmul.f32 %v1229, 0.2
        %v1358 = vmul.f32 %v1230, 0.2
        %v1359 = vmul.f32 %v1231, 0.2
        %v1360 = vmul.f32 %v1232, 0.2
        %v1361 = vmul.f32 %v1233, 0.2
        %v1362 = vmul.f32 %v1234, 0.2
        %v1363 = vmul.f32 %v1235, 0.2
        %v1364 = vmul.f32 %v1236, 0.2
        %v1365 = vsel %vm1237, %v1173, %v1301
        %v1366 = vsel %vm1238, %v1174, %v1302
        %v1367 = vsel %vm1239, %v1175, %v1303
        %v1368 = vsel %vm1240, %v1176, %v1304
        %v1369 = vsel %vm1241, %v1177, %v1305
        %v1370 = vsel %vm1242, %v1178, %v1306
        %v1371 = vsel %vm1243, %v1179, %v1307
        %v1372 = vsel %vm1244, %v1180, %v1308
        %v1373 = vsel %vm1245, %v1181, %v1309
        %v1374 = vsel %vm1246, %v1182, %v1310
        %v1375 = vsel %vm1247, %v1183, %v1311
        %v1376 = vsel %vm1248, %v1184, %v1312
        %v1377 = vsel %vm1249, %v1185, %v1313
        %v1378 = vsel %vm1250, %v1186, %v1314
        %v1379 = vsel %vm1251, %v1187, %v1315
        %v1380 = vsel %vm1252, %v1188, %v1316
        %v1381 = vsel %vm1253, %v1189, %v1317
        %v1382 = vsel %vm1254, %v1190, %v1318
        %v1383 = vsel %vm1255, %v1191, %v1319
        %v1384 = vsel %vm1256, %v1192, %v1320
        %v1385 = vsel %vm1257, %v1193, %v1321
        %v1386 = vsel %vm1258, %v1194, %v1322
        %v1387 = vsel %vm1259, %v1195, %v1323
        %v1388 = vsel %vm1260, %v1196, %v1324
        %v1389 = vsel %vm1261, %v1197, %v1325
        %v1390 = vsel %vm1262, %v1198, %v1326
        %v1391 = vsel %vm1263, %v1199, %v1327
        %v1392 = vsel %vm1264, %v1200, %v1328
        %v1393 = vsel %vm1265, %v1201, %v1329
        %v1394 = vsel %vm1266, %v1202, %v1330
        %v1395 = vsel %vm1267, %v1203, %v1331
        %v1396 = vsel %vm1268, %v1204, %v1332
        %v1397 = vsel %vm1269, %v1205, %v1333
        %v1398 = vsel %vm1270, %v1206, %v1334
        %v1399 = vsel %vm1271, %v1207, %v1335
        %v1400 = vsel %vm1272, %v1208, %v1336
        %v1401 = vsel %vm1273, %v1209, %v1337
        %v1402 = vsel %vm1274, %v1210, %v1338
        %v1403 = vsel %vm1275, %v1211, %v1339
        %v1404 = vsel %vm1276, %v1212, %v1340
        %v1405 = vsel %vm1277, %v1213, %v1341
        %v1406 = vsel %vm1278, %v1214, %v1342
        %v1407 = vsel %vm1279, %v1215, %v1343
        %v1408 = vsel %vm1280, %v1216, %v1344
        %v1409 = vsel %vm1281, %v1217, %v1345
        %v1410 = vsel %vm1282, %v1218, %v1346
        %v1411 = vsel %vm1283, %v1219, %v1347
        %v1412 = vsel %vm1284, %v1220, %v1348
        %v1413 = vsel %vm1285, %v1221, %v1349
        %v1414 = vsel %vm1286, %v1222, %v1350
        %v1415 = vsel %vm1287, %v1223, %v1351
        %v1416 = vsel %vm1288, %v1224, %v1352
        %v1417 = vsel %vm1289, %v1225, %v1353
        %v1418 = vsel %vm1290, %v1226, %v1354
        %v1419 = vsel %vm1291, %v1227, %v1355
        %v1420 = vsel %vm1292, %v1228, %v1356
        %v1421 = vsel %vm1293, %v1229, %v1357
        %v1422 = vsel %vm1294, %v1230, %v1358
        %v1423 = vsel %vm1295, %v1231, %v1359
        %v1424 = vsel %vm1296, %v1232, %v1360
        %v1425 = vsel %vm1297, %v1233, %v1361
        %v1426 = vsel %vm1298, %v1234, %v1362
        %v1427 = vsel %vm1299, %v1235, %v1363
        %v1428 = vsel %vm1300, %v1236, %v1364
        %v1429 = vpack.c.bf16 %v1366, %v1365
        %v1430 = vpack.c.bf16 %v1368, %v1367
        %v1431 = vpack.c.bf16 %v1370, %v1369
        %v1432 = vpack.c.bf16 %v1372, %v1371
        %v1433 = vpack.c.bf16 %v1374, %v1373
        %v1434 = vpack.c.bf16 %v1376, %v1375
        %v1435 = vpack.c.bf16 %v1378, %v1377
        %v1436 = vpack.c.bf16 %v1380, %v1379
        %v1437 = vpack.c.bf16 %v1382, %v1381
        %v1438 = vpack.c.bf16 %v1384, %v1383
        %v1439 = vpack.c.bf16 %v1386, %v1385
        %v1440 = vpack.c.bf16 %v1388, %v1387
        %v1441 = vpack.c.bf16 %v1390, %v1389
        %v1442 = vpack.c.bf16 %v1392, %v1391
        %v1443 = vpack.c.bf16 %v1394, %v1393
        %v1444 = vpack.c.bf16 %v1396, %v1395
        %v1445 = vpack.c.bf16 %v1398, %v1397
        %v1446 = vpack.c.bf16 %v1400, %v1399
        %v1447 = vpack.c.bf16 %v1402, %v1401
        %v1448 = vpack.c.bf16 %v1404, %v1403
        %v1449 = vpack.c.bf16 %v1406, %v1405
        %v1450 = vpack.c.bf16 %v1408, %v1407
        %v1451 = vpack.c.bf16 %v1410, %v1409
        %v1452 = vpack.c.bf16 %v1412, %v1411
        %v1453 = vpack.c.bf16 %v1414, %v1413
        %v1454 = vpack.c.bf16 %v1416, %v1415
        %v1455 = vpack.c.bf16 %v1418, %v1417
        %v1456 = vpack.c.bf16 %v1420, %v1419
        %v1457 = vpack.c.bf16 %v1422, %v1421
        %v1458 = vpack.c.bf16 %v1424, %v1423
        %v1459 = vpack.c.bf16 %v1426, %v1425
        %v1460 = vpack.c.bf16 %v1428, %v1427
        %v1493 = vunpack.c.l.b16 %v1429
        %v1494 = vunpack.c.h.b16 %v1429
        %v1495 = vunpack.c.l.b16 %v1430
        %v1496 = vunpack.c.h.b16 %v1430
        %v1497 = vunpack.c.l.b16 %v1431
        %v1498 = vunpack.c.h.b16 %v1431
        %v1499 = vunpack.c.l.b16 %v1432
        %v1500 = vunpack.c.h.b16 %v1432
        %v1501 = vunpack.c.l.b16 %v1433
        %v1502 = vunpack.c.h.b16 %v1433
        %v1503 = vunpack.c.l.b16 %v1434
        %v1504 = vunpack.c.h.b16 %v1434
        %v1505 = vunpack.c.l.b16 %v1435
        %v1506 = vunpack.c.h.b16 %v1435
        %v1507 = vunpack.c.l.b16 %v1436
        %v1508 = vunpack.c.h.b16 %v1436
        %v1509 = vunpack.c.l.b16 %v1437
        %v1510 = vunpack.c.h.b16 %v1437
        %v1511 = vunpack.c.l.b16 %v1438
        %v1512 = vunpack.c.h.b16 %v1438
        %v1513 = vunpack.c.l.b16 %v1439
        %v1514 = vunpack.c.h.b16 %v1439
        %v1515 = vunpack.c.l.b16 %v1440
        %v1516 = vunpack.c.h.b16 %v1440
        %v1517 = vunpack.c.l.b16 %v1441
        %v1518 = vunpack.c.h.b16 %v1441
        %v1519 = vunpack.c.l.b16 %v1442
        %v1520 = vunpack.c.h.b16 %v1442
        %v1521 = vunpack.c.l.b16 %v1443
        %v1522 = vunpack.c.h.b16 %v1443
        %v1523 = vunpack.c.l.b16 %v1444
        %v1524 = vunpack.c.h.b16 %v1444
        %v1525 = vunpack.c.l.b16 %v1445
        %v1526 = vunpack.c.h.b16 %v1445
        %v1527 = vunpack.c.l.b16 %v1446
        %v1528 = vunpack.c.h.b16 %v1446
        %v1529 = vunpack.c.l.b16 %v1447
        %v1530 = vunpack.c.h.b16 %v1447
        %v1531 = vunpack.c.l.b16 %v1448
        %v1532 = vunpack.c.h.b16 %v1448
        %v1533 = vunpack.c.l.b16 %v1449
        %v1534 = vunpack.c.h.b16 %v1449
        %v1535 = vunpack.c.l.b16 %v1450
        %v1536 = vunpack.c.h.b16 %v1450
        %v1537 = vunpack.c.l.b16 %v1451
        %v1538 = vunpack.c.h.b16 %v1451
        %v1539 = vunpack.c.l.b16 %v1452
        %v1540 = vunpack.c.h.b16 %v1452
        %v1541 = vunpack.c.l.b16 %v1453
        %v1542 = vunpack.c.h.b16 %v1453
        %v1543 = vunpack.c.l.b16 %v1454
        %v1544 = vunpack.c.h.b16 %v1454
        %v1545 = vunpack.c.l.b16 %v1455
        %v1546 = vunpack.c.h.b16 %v1455
        %v1547 = vunpack.c.l.b16 %v1456
        %v1548 = vunpack.c.h.b16 %v1456
        %v1549 = vunpack.c.l.b16 %v1457
        %v1550 = vunpack.c.h.b16 %v1457
        %v1551 = vunpack.c.l.b16 %v1458
        %v1552 = vunpack.c.h.b16 %v1458
        %v1553 = vunpack.c.l.b16 %v1459
        %v1554 = vunpack.c.h.b16 %v1459
        %v1555 = vunpack.c.l.b16 %v1460
        %v1556 = vunpack.c.h.b16 %v1460
        %v1557 = vpack.c.b16 %v1493, %v1493
        %v1558 = vpack.c.b16 %v1494, %v1494
        %v1559 = vpack.c.b16 %v1495, %v1495
        %v1560 = vpack.c.b16 %v1496, %v1496
        %v1561 = vpack.c.b16 %v1497, %v1497
        %v1562 = vpack.c.b16 %v1498, %v1498
        %v1563 = vpack.c.b16 %v1499, %v1499
        %v1564 = vpack.c.b16 %v1500, %v1500
        %v1565 = vpack.c.b16 %v1501, %v1501
        %v1566 = vpack.c.b16 %v1502, %v1502
        %v1567 = vpack.c.b16 %v1503, %v1503
        %v1568 = vpack.c.b16 %v1504, %v1504
        %v1569 = vpack.c.b16 %v1505, %v1505
        %v1570 = vpack.c.b16 %v1506, %v1506
        %v1571 = vpack.c.b16 %v1507, %v1507
        %v1572 = vpack.c.b16 %v1508, %v1508
        %v1573 = vpack.c.b16 %v1509, %v1509
        %v1574 = vpack.c.b16 %v1510, %v1510
        %v1575 = vpack.c.b16 %v1511, %v1511
        %v1576 = vpack.c.b16 %v1512, %v1512
        %v1577 = vpack.c.b16 %v1513, %v1513
        %v1578 = vpack.c.b16 %v1514, %v1514
        %v1579 = vpack.c.b16 %v1515, %v1515
        %v1580 = vpack.c.b16 %v1516, %v1516
        %v1581 = vpack.c.b16 %v1517, %v1517
        %v1582 = vpack.c.b16 %v1518, %v1518
        %v1583 = vpack.c.b16 %v1519, %v1519
        %v1584 = vpack.c.b16 %v1520, %v1520
        %v1585 = vpack.c.b16 %v1521, %v1521
        %v1586 = vpack.c.b16 %v1522, %v1522
        %v1587 = vpack.c.b16 %v1523, %v1523
        %v1588 = vpack.c.b16 %v1524, %v1524
        %v1589 = vpack.c.b16 %v1525, %v1525
        %v1590 = vpack.c.b16 %v1526, %v1526
        %v1591 = vpack.c.b16 %v1527, %v1527
        %v1592 = vpack.c.b16 %v1528, %v1528
        %v1593 = vpack.c.b16 %v1529, %v1529
        %v1594 = vpack.c.b16 %v1530, %v1530
        %v1595 = vpack.c.b16 %v1531, %v1531
        %v1596 = vpack.c.b16 %v1532, %v1532
        %v1597 = vpack.c.b16 %v1533, %v1533
        %v1598 = vpack.c.b16 %v1534, %v1534
        %v1599 = vpack.c.b16 %v1535, %v1535
        %v1600 = vpack.c.b16 %v1536, %v1536
        %v1601 = vpack.c.b16 %v1537, %v1537
        %v1602 = vpack.c.b16 %v1538, %v1538
        %v1603 = vpack.c.b16 %v1539, %v1539
        %v1604 = vpack.c.b16 %v1540, %v1540
        %v1605 = vpack.c.b16 %v1541, %v1541
        %v1606 = vpack.c.b16 %v1542, %v1542
        %v1607 = vpack.c.b16 %v1543, %v1543
        %v1608 = vpack.c.b16 %v1544, %v1544
        %v1609 = vpack.c.b16 %v1545, %v1545
        %v1610 = vpack.c.b16 %v1546, %v1546
        %v1611 = vpack.c.b16 %v1547, %v1547
        %v1612 = vpack.c.b16 %v1548, %v1548
        %v1613 = vpack.c.b16 %v1549, %v1549
        %v1614 = vpack.c.b16 %v1550, %v1550
        %v1615 = vpack.c.b16 %v1551, %v1551
        %v1616 = vpack.c.b16 %v1552, %v1552
        %v1617 = vpack.c.b16 %v1553, %v1553
        %v1618 = vpack.c.b16 %v1554, %v1554
        %v1619 = vpack.c.b16 %v1555, %v1555
        %v1620 = vpack.c.b16 %v1556, %v1556
        %1685 = vst [vmem:[%s215] sm:$0xf] %v1557
        %1686 = vst [vmem:[%s215 + $0x4] sm:$0xf] %v1558
        %1687 = vst [vmem:[%s215 + $0x8] sm:$0xf] %v1559
        %1688 = vst [vmem:[%s215 + $0xc] sm:$0xf] %v1560
        %1689 = vst [vmem:[%s215 + $0x10] sm:$0xf] %v1561
        %1690 = vst [vmem:[%s215 + $0x14] sm:$0xf] %v1562
        %1691 = vst [vmem:[%s215 + $0x18] sm:$0xf] %v1563
        %1692 = vst [vmem:[%s215 + $0x1c] sm:$0xf] %v1564
        %1693 = vst [vmem:[%s215 + $0x20] sm:$0xf] %v1565
        %1694 = vst [vmem:[%s215 + $0x24] sm:$0xf] %v1566
        %1695 = vst [vmem:[%s215 + $0x28] sm:$0xf] %v1567
        %1696 = vst [vmem:[%s215 + $0x2c] sm:$0xf] %v1568
        %1697 = vst [vmem:[%s215 + $0x30] sm:$0xf] %v1569
        %1698 = vst [vmem:[%s215 + $0x34] sm:$0xf] %v1570
        %1699 = vst [vmem:[%s215 + $0x38] sm:$0xf] %v1571
        %1700 = vst [vmem:[%s215 + $0x3c] sm:$0xf] %v1572
        %1701 = vst [vmem:[%s215 + $0x40] sm:$0xf] %v1573
        %1702 = vst [vmem:[%s215 + $0x44] sm:$0xf] %v1574
        %1703 = vst [vmem:[%s215 + $0x48] sm:$0xf] %v1575
        %1704 = vst [vmem:[%s215 + $0x4c] sm:$0xf] %v1576
        %1705 = vst [vmem:[%s215 + $0x50] sm:$0xf] %v1577
        %1706 = vst [vmem:[%s215 + $0x54] sm:$0xf] %v1578
        %1707 = vst [vmem:[%s215 + $0x58] sm:$0xf] %v1579
        %1708 = vst [vmem:[%s215 + $0x5c] sm:$0xf] %v1580
        %1709 = vst [vmem:[%s215 + $0x60] sm:$0xf] %v1581
        %1710 = vst [vmem:[%s215 + $0x64] sm:$0xf] %v1582
        %1711 = vst [vmem:[%s215 + $0x68] sm:$0xf] %v1583
        %1712 = vst [vmem:[%s215 + $0x6c] sm:$0xf] %v1584
        %1713 = vst [vmem:[%s215 + $0x70] sm:$0xf] %v1585
        %1714 = vst [vmem:[%s215 + $0x74] sm:$0xf] %v1586
        %1715 = vst [vmem:[%s215 + $0x78] sm:$0xf] %v1587
        %1716 = vst [vmem:[%s215 + $0x7c] sm:$0xf] %v1588
        %1717 = vst [vmem:[%s215 + $0x80] sm:$0xf] %v1589
        %1718 = vst [vmem:[%s215 + $0x84] sm:$0xf] %v1590
        %1719 = vst [vmem:[%s215 + $0x88] sm:$0xf] %v1591
        %1720 = vst [vmem:[%s215 + $0x8c] sm:$0xf] %v1592
        %1721 = vst [vmem:[%s215 + $0x90] sm:$0xf] %v1593
        %1722 = vst [vmem:[%s215 + $0x94] sm:$0xf] %v1594
        %1723 = vst [vmem:[%s215 + $0x98] sm:$0xf] %v1595
        %1724 = vst [vmem:[%s215 + $0x9c] sm:$0xf] %v1596
        %1725 = vst [vmem:[%s215 + $0xa0] sm:$0xf] %v1597
        %1726 = vst [vmem:[%s215 + $0xa4] sm:$0xf] %v1598
        %1727 = vst [vmem:[%s215 + $0xa8] sm:$0xf] %v1599
        %1728 = vst [vmem:[%s215 + $0xac] sm:$0xf] %v1600
        %1729 = vst [vmem:[%s215 + $0xb0] sm:$0xf] %v1601
        %1730 = vst [vmem:[%s215 + $0xb4] sm:$0xf] %v1602
        %1731 = vst [vmem:[%s215 + $0xb8] sm:$0xf] %v1603
        %1732 = vst [vmem:[%s215 + $0xbc] sm:$0xf] %v1604
        %1733 = vst [vmem:[%s215 + $0xc0] sm:$0xf] %v1605
        %1734 = vst [vmem:[%s215 + $0xc4] sm:$0xf] %v1606
        %1735 = vst [vmem:[%s215 + $0xc8] sm:$0xf] %v1607
        %1736 = vst [vmem:[%s215 + $0xcc] sm:$0xf] %v1608
        %1737 = vst [vmem:[%s215 + $0xd0] sm:$0xf] %v1609
        %1738 = vst [vmem:[%s215 + $0xd4] sm:$0xf] %v1610
        %1739 = vst [vmem:[%s215 + $0xd8] sm:$0xf] %v1611
        %1740 = vst [vmem:[%s215 + $0xdc] sm:$0xf] %v1612
        %1741 = vst [vmem:[%s215 + $0xe0] sm:$0xf] %v1613
        %1742 = vst [vmem:[%s215 + $0xe4] sm:$0xf] %v1614
        %1743 = vst [vmem:[%s215 + $0xe8] sm:$0xf] %v1615
        %1744 = vst [vmem:[%s215 + $0xec] sm:$0xf] %v1616
        %1745 = vst [vmem:[%s215 + $0xf0] sm:$0xf] %v1617
        %1746 = vst [vmem:[%s215 + $0xf4] sm:$0xf] %v1618
        %1747 = vst [vmem:[%s215 + $0xf8] sm:$0xf] %v1619
        %1748 = vst [vmem:[%s215 + $0xfc] sm:$0xf] %v1620
      $region52: #{classifier_forward.4} parent=35 // pred_fallthru
        _
      %s1749 = smul.u32 %s20, %s19
      %s1750 = smul.u32 64, %s1749
      %p1751 = scmp.lt.s32.totalorder %s1750, 255
      %s1752 = scalar_select %p1751, %s1750, 255
      %s1753 = smul.addr %s1752, 4
      %s1754 = scalar_lea.vmem %s4, %s1753
      // Predicated region
      $region53: #{classifier_forward.4} parent=35 // pred_check
        %p1755 = pneg %p136
      $region54: #{classifier_forward.4} parent=35 // pred_check_branch
        %1757 = sbr.rel (%p1755) target = $region56
      $region55: #{classifier_forward.4} parent=35 // pred_region
        %s1758 = smul.u32 %s20, %s19
        %s1759 = smul.u32 64, %s1758
      $region56: #{classifier_forward.4} parent=35 // pred_fallthru
        _
    $region36: #{classifier_forward.4} parent=5 // pred_fallthru
      _
    %p1760 = scmp.le.s32.totalorder 2, %s10
    // Predicated region
    $region57: #{classifier_forward.4} parent=5 // pred_check
      %p1761 = pneg %p1760
    $region58: #{classifier_forward.4} parent=5 // pred_check_branch
      %1763 = sbr.rel (%p1761) target = $region60
    $region59: #{classifier_forward.4} parent=5 // pred_region
      %s1764 = ssub.s32 %s10, 2
      // Predicated region
      $region61: #{classifier_forward.4} parent=59 // pred_check
        %p1765 = pneg %p142
      $region62: #{classifier_forward.4} parent=59 // pred_check_branch
        %1767 = sbr.rel (%p1765) target = $region64
      $region63: #{classifier_forward.4} parent=59 // pred_region
        %s1768 = smul.u32 %s22, %s21
        %s1769 = smul.u32 64, %s1768
        %p1770 = scmp.lt.s32.totalorder %s1769, 255
        %s1771 = scalar_select %p1770, %s1769, 255
        %s1772 = smul.addr %s1771, 4
        %s1773 = scalar_lea.vmem %s4, %s1772
      $region64: #{classifier_forward.4} parent=59 // pred_fallthru
        _
    $region60: #{classifier_forward.4} parent=5 // pred_fallthru
      _
  $region6: #{classifier_forward.4} parent=0 // loop_footer
    %s14 = sadd.s32 1, %s10
  $region7: #{classifier_forward.4} parent=0 // loop_footer_branch
    %9 = sbr.rel target = $region3
  $region8: #{classifier_forward.4} parent=0 // loop_exit
    _

// kernel: classifier_forward.5
$region0: #{classifier_forward.5}
  #allocation0 [shape = 'u32[]', space=smem, size = 0x4, offset = 0x4, fixed_abs, tag = 'smem constant byte address 0x4 - core index']
  #allocation1 [shape = 'u32[144,128]{1,0:T(1,128)}', space=vmem, size = 0x12000, scoped, tag = 'internal scratch']
  #allocation2 [shape = 'f32[1,128]{1,0:T(1,128)}', space=vmem, size = 0x200, scoped, tag = 'scratch operand']
  #allocation3 [shape = 'f32[1,128]{1,0:T(1,128)}', space=vmem, size = 0x200, scoped, tag = 'scratch operand']
  #allocation4 [shape = 'f32[1,128]{1,0:T(1,128)}', space=vmem, size = 0x200, scoped, tag = 'scratch operand']
  #allocation5 [shape = 'f32[1,128]{1,0:T(1,128)}', space=vmem, size = 0x200, scoped, tag = 'scratch operand']
  %s0 = inlined_call_operand.vmem [shape: bf16[448,256], index: 0, kind: input, shape index: {}]
  %s1 = inlined_call_operand.vmem [shape: bf16[256,128], index: 1, kind: input, shape index: {}]
  %s2 = inlined_call_operand.vmem [shape: f32[1,128], index: 2, kind: input, shape index: {}]
  %s3 = inlined_call_operand.vmem [shape: f32[1,128], index: 3, kind: input, shape index: {}]
  %s4 = inlined_call_operand.vmem [shape: bf16[448,128], index: 4, kind: output, shape index: {}]
  %s5 = sld [smem:[#allocation0]]
  $region65: #{classifier_forward.5} parent=0
    _
  %s7 = ssub.s32 1, %s5
  %s8 = scalar_select 0, %s7, %s5
  loop: start=0, step=1, limit=4
  $region2: #{classifier_forward.5} parent=0 // loop_pre_header
    _
  $region3: #{classifier_forward.5} parent=0 // loop_header
    %s10 = sphi 0, %s14
    %p11 = scmp.ge.s32.totalorder %s10, 4
    %s17 = sphi 0, %s29
    %s18 = sphi 0, %s25
    %s19 = sphi 0, %s17
    %s20 = sphi 0, %s18
    %s21 = sphi 0, %s19
    %s22 = sphi 0, %s20
    %s32 = sphi 0, %s34
    %s35 = sphi 0, %s32
    %s36 = sphi 0, %s35
    %s52 = sphi 0, %s36
    %s56 = sphi 0, %s56
    %s58 = sphi 0, %s56
    %s59 = sphi 0, %s58
    %s73 = sphi 0, %s59
    %s77 = sphi 0, %s77
    %s79 = sphi 0, %s77
    %s80 = sphi 0, %s79
    %s94 = sphi 0, %s80
    %s98 = sphi 0, %s98
    %s100 = sphi 0, %s98
    %s101 = sphi 0, %s100
    %s115 = sphi 0, %s101
    %s123 = sphi 0, %s125
    %s126 = sphi 0, %s123
    %s127 = sphi 0, %s126
    %s143 = sphi 0, %s127
  $region4: #{classifier_forward.5} parent=0 // loop_header_branch
    %13 = sbr.rel (%p11) target = $region8
  $region5: #{classifier_forward.5} parent=0 // loop_body
    %s15 = ssub.s32 %s10, 1
    %s16 = ssub.s32 %s10, 2
    %s23 = sadd.s32 1, %s18
    %p24 = scmp.ge.s32.totalorder %s23, 1
    %s25 = scalar_select %p24, 0, %s23
    %s26 = sadd.s32 1, %s17
    %s27 = scalar_select %p24, %s26, %s17
    %p28 = scmp.ge.s32.totalorder %s27, 2
    %s29 = scalar_select %p28, 0, %s27
    %s30 = ssub.s32 %s18, %s25
    %p31 = scmp.eq.s32.totalorder %s30, 0
    %s33 = sadd.s32 %s32, 1
    %s34 = scalar_select %p31, %s32, %s33
    %p37 = pneg %p31
    %p38 = scmp.eq.s32.totalorder %s10, 1
    %p39 = por %p37, %p38
    %p40 = scmp.ne.s32.totalorder %s32, %s35
    %p41 = scmp.eq.s32.totalorder %s10, 0
    %p42 = por %p40, %p41
    %p43 = scmp.ne.s32.totalorder %s32, %s35
    %p44 = scmp.eq.s32.totalorder %s15, 1
    %p45 = por %p43, %p44
    %p46 = scmp.ne.s32.totalorder %s35, %s36
    %p47 = scmp.eq.s32.totalorder %s15, 0
    %p48 = por %p46, %p47
    %p49 = scmp.ne.s32.totalorder %s35, %s36
    %p50 = scmp.eq.s32.totalorder %s16, 1
    %p51 = por %p49, %p50
    %p53 = scmp.ne.s32.totalorder %s36, %s52
    %p54 = scmp.eq.s32.totalorder %s16, 0
    %p55 = por %p53, %p54
    %s57 = sadd.s32 %s56, 1
    %p60 = scmp.eq.s32.totalorder %s10, 1
    %p61 = scmp.ne.s32.totalorder %s56, %s58
    %p62 = scmp.eq.s32.totalorder %s10, 0
    %p63 = por %p61, %p62
    %p64 = scmp.ne.s32.totalorder %s56, %s58
    %p65 = scmp.eq.s32.totalorder %s15, 1
    %p66 = por %p64, %p65
    %p67 = scmp.ne.s32.totalorder %s58, %s59
    %p68 = scmp.eq.s32.totalorder %s15, 0
    %p69 = por %p67, %p68
    %p70 = scmp.ne.s32.totalorder %s58, %s59
    %p71 = scmp.eq.s32.totalorder %s16, 1
    %p72 = por %p70, %p71
    %p74 = scmp.ne.s32.totalorder %s59, %s73
    %p75 = scmp.eq.s32.totalorder %s16, 0
    %p76 = por %p74, %p75
    %s78 = sadd.s32 %s77, 1
    %p81 = scmp.eq.s32.totalorder %s10, 1
    %p82 = scmp.ne.s32.totalorder %s77, %s79
    %p83 = scmp.eq.s32.totalorder %s10, 0
    %p84 = por %p82, %p83
    %p85 = scmp.ne.s32.totalorder %s77, %s79
    %p86 = scmp.eq.s32.totalorder %s15, 1
    %p87 = por %p85, %p86
    %p88 = scmp.ne.s32.totalorder %s79, %s80
    %p89 = scmp.eq.s32.totalorder %s15, 0
    %p90 = por %p88, %p89
    %p91 = scmp.ne.s32.totalorder %s79, %s80
    %p92 = scmp.eq.s32.totalorder %s16, 1
    %p93 = por %p91, %p92
    %p95 = scmp.ne.s32.totalorder %s80, %s94
    %p96 = scmp.eq.s32.totalorder %s16, 0
    %p97 = por %p95, %p96
    %s99 = sadd.s32 %s98, 1
    %p102 = scmp.eq.s32.totalorder %s10, 1
    %p103 = scmp.ne.s32.totalorder %s98, %s100
    %p104 = scmp.eq.s32.totalorder %s10, 0
    %p105 = por %p103, %p104
    %p106 = scmp.ne.s32.totalorder %s98, %s100
    %p107 = scmp.eq.s32.totalorder %s15, 1
    %p108 = por %p106, %p107
    %p109 = scmp.ne.s32.totalorder %s100, %s101
    %p110 = scmp.eq.s32.totalorder %s15, 0
    %p111 = por %p109, %p110
    %p112 = scmp.ne.s32.totalorder %s100, %s101
    %p113 = scmp.eq.s32.totalorder %s16, 1
    %p114 = por %p112, %p113
    %p116 = scmp.ne.s32.totalorder %s101, %s115
    %p117 = scmp.eq.s32.totalorder %s16, 0
    %p118 = por %p116, %p117
    %s119 = smul.u32 %s18, %s17
    %s120 = smul.u32 %s25, %s29
    %s121 = ssub.s32 %s119, %s120
    %p122 = scmp.eq.s32.totalorder %s121, 0
    %s124 = sadd.s32 %s123, 1
    %s125 = scalar_select %p122, %s123, %s124
    %p128 = pneg %p122
    %p129 = scmp.eq.s32.totalorder %s10, 1
    %p130 = por %p128, %p129
    %p131 = scmp.ne.s32.totalorder %s123, %s126
    %p132 = scmp.eq.s32.totalorder %s10, 0
    %p133 = por %p131, %p132
    %p134 = scmp.ne.s32.totalorder %s123, %s126
    %p135 = scmp.eq.s32.totalorder %s15, 1
    %p136 = por %p134, %p135
    %p137 = scmp.ne.s32.totalorder %s126, %s127
    %p138 = scmp.eq.s32.totalorder %s15, 0
    %p139 = por %p137, %p138
    %p140 = scmp.ne.s32.totalorder %s126, %s127
    %p141 = scmp.eq.s32.totalorder %s16, 1
    %p142 = por %p140, %p141
    %p144 = scmp.ne.s32.totalorder %s127, %s143
    %p145 = scmp.eq.s32.totalorder %s16, 0
    %p146 = por %p144, %p145
    %p147 = scmp.le.s32.totalorder 1, %s10
    %p148 = scmp.lt.s32.totalorder %s10, 3
    %p149 = pnand %p147, %p148
    %p150 = pneg %p149
    // Predicated region
    $region9: #{classifier_forward.5} parent=5 // pred_check
      _
    $region10: #{classifier_forward.5} parent=5 // pred_check_branch
      %152 = sbr.rel (%p149) target = $region12
    $region11: #{classifier_forward.5} parent=5 // pred_region
      %s153 = ssub.s32 %s10, 1
      // Predicated region
      $region13: #{classifier_forward.5} parent=11 // pred_check
        %p154 = pneg %p48
      $region14: #{classifier_forward.5} parent=11 // pred_check_branch
        %156 = sbr.rel (%p154) target = $region16
      $region15: #{classifier_forward.5} parent=11 // pred_region
        %s157 = smul.u32 56, %s20
        %p158 = scmp.lt.s32.totalorder %s157, 55
        %s159 = scalar_select %p158, %s157, 55
        %s160 = smul.addr %s159, 2
        %s161 = smul.addr %s160, 4
        %s162 = scalar_lea.vmem %s0, %s161
        %s163 = smul.u32 56, %s20
      $region16: #{classifier_forward.5} parent=11 // pred_fallthru
        _
      // Predicated region
      $region17: #{classifier_forward.5} parent=11 // pred_check
        %p164 = pneg %p69
      $region18: #{classifier_forward.5} parent=11 // pred_check_branch
        %166 = sbr.rel (%p164) target = $region20
      $region19: #{classifier_forward.5} parent=11 // pred_region
        _
      $region20: #{classifier_forward.5} parent=11 // pred_fallthru
        _
      // Predicated region
      $region21: #{classifier_forward.5} parent=11 // pred_check
        %p167 = pneg %p90
      $region22: #{classifier_forward.5} parent=11 // pred_check_branch
        %169 = sbr.rel (%p167) target = $region24
      $region23: #{classifier_forward.5} parent=11 // pred_region
        _
      $region24: #{classifier_forward.5} parent=11 // pred_fallthru
        _
      // Predicated region
      $region25: #{classifier_forward.5} parent=11 // pred_check
        %p170 = pneg %p111
      $region26: #{classifier_forward.5} parent=11 // pred_check_branch
        %172 = sbr.rel (%p170) target = $region28
      $region27: #{classifier_forward.5} parent=11 // pred_region
        _
      $region28: #{classifier_forward.5} parent=11 // pred_fallthru
        _
    $region12: #{classifier_forward.5} parent=5 // pred_fallthru
      _
    %p173 = scmp.lt.s32.totalorder %s10, 2
    // Predicated region
    $region29: #{classifier_forward.5} parent=5 // pred_check
      %p174 = pneg %p173
    $region30: #{classifier_forward.5} parent=5 // pred_check_branch
      %176 = sbr.rel (%p174) target = $region32
    $region31: #{classifier_forward.5} parent=5 // pred_region
      _
    $region32: #{classifier_forward.5} parent=5 // pred_fallthru
      _
    %p177 = scmp.le.s32.totalorder 1, %s10
    %p178 = scmp.lt.s32.totalorder %s10, 3
    %p179 = pnand %p177, %p178
    %p180 = pneg %p179
    // Predicated region
    $region33: #{classifier_forward.5} parent=5 // pred_check
      _
    $region34: #{classifier_forward.5} parent=5 // pred_check_branch
      %182 = sbr.rel (%p179) target = $region36
    $region35: #{classifier_forward.5} parent=5 // pred_region
      %s183 = ssub.s32 %s10, 1
      %s184 = smul.u32 56, %s20
      %p185 = scmp.lt.s32.totalorder %s184, 55
      %s186 = scalar_select %p185, %s184, 55
      %s187 = smul.addr %s186, 2
      %s188 = smul.addr %s187, 4
      %s189 = scalar_lea.vmem %s0, %s188
      %p190 = pneg %p48
      %p191 = pneg %p45
      %p192 = pneg %p69
      %p193 = pneg %p66
      %p194 = pneg %p90
      %p195 = pneg %p87
      %p196 = pneg %p111
      %p197 = pneg %p108
      %p198 = pneg %p139
      %p199 = pneg %p136
      %s200 = smul.u32 %s20, %s19
      %s201 = smul.u32 56, %s200
      %p202 = scmp.lt.s32.totalorder %s201, 55
      %s203 = scalar_select %p202, %s201, 55
      %s204 = smul.addr %s203, 4
      %s205 = scalar_lea.vmem %s4, %s204
      %s206 = smul.u32 56, %s20
      %p207 = scmp.lt.s32.totalorder %s206, 55
      %s208 = scalar_select %p207, %s206, 55
      %s209 = smul.addr %s208, 2
      %s210 = smul.addr %s209, 4
      %s211 = scalar_lea.vmem %s0, %s210
      %s212 = smul.u32 56, %s20
      %s213 = smul.u32 %s20, %s19
      %s214 = smul.u32 56, %s213
      %p215 = scmp.lt.s32.totalorder %s214, 55
      %s216 = scalar_select %p215, %s214, 55
      %s217 = smul.addr %s216, 4
      %s218 = scalar_lea.vmem %s4, %s217
      %s219 = smul.u32 %s20, %s19
      %s220 = smul.u32 56, %s219
      %v222 = vld [vmem:[%s211] sm:$0xff]
      %v223 = vld [vmem:[%s211 + $0x8] sm:$0xff]
      %v224 = vld [vmem:[%s211 + $0x10] sm:$0xff]
      %v225 = vld [vmem:[%s211 + $0x18] sm:$0xff]
      %v226 = vld [vmem:[%s211 + $0x20] sm:$0xff]
      %v227 = vld [vmem:[%s211 + $0x28] sm:$0xff]
      %v228 = vld [vmem:[%s211 + $0x30] sm:$0xff]
      %v229 = vld [vmem:[%s211 + $0x38] sm:$0xff]
      %v230 = vld [vmem:[%s211 + $0x40] sm:$0xff]
      %v231 = vld [vmem:[%s211 + $0x48] sm:$0xff]
      %v232 = vld [vmem:[%s211 + $0x50] sm:$0xff]
      %v233 = vld [vmem:[%s211 + $0x58] sm:$0xff]
      %v234 = vld [vmem:[%s211 + $0x60] sm:$0xff]
      %v235 = vld [vmem:[%s211 + $0x68] sm:$0xff]
      %v236 = vld [vmem:[%s211 + $0x70] sm:$0xff]
      %v237 = vld [vmem:[%s211 + $0x78] sm:$0xff]
      %v238 = vld [vmem:[%s211 + $0x80] sm:$0xff]
      %v239 = vld [vmem:[%s211 + $0x88] sm:$0xff]
      %v240 = vld [vmem:[%s211 + $0x90] sm:$0xff]
      %v241 = vld [vmem:[%s211 + $0x98] sm:$0xff]
      %v242 = vld [vmem:[%s211 + $0xa0] sm:$0xff]
      %v243 = vld [vmem:[%s211 + $0xa8] sm:$0xff]
      %v244 = vld [vmem:[%s211 + $0xb0] sm:$0xff]
      %v245 = vld [vmem:[%s211 + $0xb8] sm:$0xff]
      %v246 = vld [vmem:[%s211 + $0xc0] sm:$0xff]
      %v247 = vld [vmem:[%s211 + $0xc8] sm:$0xff]
      %v248 = vld [vmem:[%s211 + $0xd0] sm:$0xff]
      %v249 = vld [vmem:[%s211 + $0xd8] sm:$0xff]
      %v250 = vld [vmem:[%s211 + $0xe0] sm:$0xff]
      %v251 = vld [vmem:[%s211 + $0xe8] sm:$0xff]
      %v252 = vld [vmem:[%s211 + $0xf0] sm:$0xff]
      %v253 = vld [vmem:[%s211 + $0xf8] sm:$0xff]
      %v254 = vld [vmem:[%s211 + $0x100] sm:$0xff]
      %v255 = vld [vmem:[%s211 + $0x108] sm:$0xff]
      %v256 = vld [vmem:[%s211 + $0x110] sm:$0xff]
      %v257 = vld [vmem:[%s211 + $0x118] sm:$0xff]
      %v258 = vld [vmem:[%s211 + $0x120] sm:$0xff]
      %v259 = vld [vmem:[%s211 + $0x128] sm:$0xff]
      %v260 = vld [vmem:[%s211 + $0x130] sm:$0xff]
      %v261 = vld [vmem:[%s211 + $0x138] sm:$0xff]
      %v262 = vld [vmem:[%s211 + $0x140] sm:$0xff]
      %v263 = vld [vmem:[%s211 + $0x148] sm:$0xff]
      %v264 = vld [vmem:[%s211 + $0x150] sm:$0xff]
      %v265 = vld [vmem:[%s211 + $0x158] sm:$0xff]
      %v266 = vld [vmem:[%s211 + $0x160] sm:$0xff]
      %v267 = vld [vmem:[%s211 + $0x168] sm:$0xff]
      %v268 = vld [vmem:[%s211 + $0x170] sm:$0xff]
      %v269 = vld [vmem:[%s211 + $0x178] sm:$0xff]
      %v270 = vld [vmem:[%s211 + $0x180] sm:$0xff]
      %v271 = vld [vmem:[%s211 + $0x188] sm:$0xff]
      %v272 = vld [vmem:[%s211 + $0x190] sm:$0xff]
      %v273 = vld [vmem:[%s211 + $0x198] sm:$0xff]
      %v274 = vld [vmem:[%s211 + $0x1a0] sm:$0xff]
      %v275 = vld [vmem:[%s211 + $0x1a8] sm:$0xff]
      %v276 = vld [vmem:[%s211 + $0x1b0] sm:$0xff]
      %v277 = vld [vmem:[%s211 + $0x1b8] sm:$0xff]
      %v278 = vld [vmem:[%s1] sm:$0xf]
      %v279 = vld [vmem:[%s1 + $0x4] sm:$0xf]
      %v280 = vld [vmem:[%s1 + $0x8] sm:$0xf]
      %v281 = vld [vmem:[%s1 + $0xc] sm:$0xf]
      %v282 = vld [vmem:[%s1 + $0x10] sm:$0xf]
      %v283 = vld [vmem:[%s1 + $0x14] sm:$0xf]
      %v284 = vld [vmem:[%s1 + $0x18] sm:$0xf]
      %v285 = vld [vmem:[%s1 + $0x1c] sm:$0xf]
      %v286 = vld [vmem:[%s1 + $0x20] sm:$0xf]
      %v287 = vld [vmem:[%s1 + $0x24] sm:$0xf]
      %v288 = vld [vmem:[%s1 + $0x28] sm:$0xf]
      %v289 = vld [vmem:[%s1 + $0x2c] sm:$0xf]
      %v290 = vld [vmem:[%s1 + $0x30] sm:$0xf]
      %v291 = vld [vmem:[%s1 + $0x34] sm:$0xf]
      %v292 = vld [vmem:[%s1 + $0x38] sm:$0xf]
      %v293 = vld [vmem:[%s1 + $0x3c] sm:$0xf]
      %v294 = vld [vmem:[%s1 + $0x40] sm:$0xf]
      %v295 = vld [vmem:[%s1 + $0x44] sm:$0xf]
      %v296 = vld [vmem:[%s1 + $0x48] sm:$0xf]
      %v297 = vld [vmem:[%s1 + $0x4c] sm:$0xf]
      %v298 = vld [vmem:[%s1 + $0x50] sm:$0xf]
      %v299 = vld [vmem:[%s1 + $0x54] sm:$0xf]
      %v300 = vld [vmem:[%s1 + $0x58] sm:$0xf]
      %v301 = vld [vmem:[%s1 + $0x5c] sm:$0xf]
      %v302 = vld [vmem:[%s1 + $0x60] sm:$0xf]
      %v303 = vld [vmem:[%s1 + $0x64] sm:$0xf]
      %v304 = vld [vmem:[%s1 + $0x68] sm:$0xf]
      %v305 = vld [vmem:[%s1 + $0x6c] sm:$0xf]
      %v306 = vld [vmem:[%s1 + $0x70] sm:$0xf]
      %v307 = vld [vmem:[%s1 + $0x74] sm:$0xf]
      %v308 = vld [vmem:[%s1 + $0x78] sm:$0xf]
      %v309 = vld [vmem:[%s1 + $0x7c] sm:$0xf]
      %v366 = vunpack.c.l.b16 %v222
      %v367 = vunpack.c.h.b16 %v222
      %v368 = vunpack.c.l.b16 %v223
      %v369 = vunpack.c.h.b16 %v223
      %v370 = vunpack.c.l.b16 %v224
      %v371 = vunpack.c.h.b16 %v224
      %v372 = vunpack.c.l.b16 %v225
      %v373 = vunpack.c.h.b16 %v225
      %v374 = vunpack.c.l.b16 %v226
      %v375 = vunpack.c.h.b16 %v226
      %v376 = vunpack.c.l.b16 %v227
      %v377 = vunpack.c.h.b16 %v227
      %v378 = vunpack.c.l.b16 %v228
      %v379 = vunpack.c.h.b16 %v228
      %v380 = vunpack.c.l.b16 %v229
      %v381 = vunpack.c.h.b16 %v229
      %v382 = vunpack.c.l.b16 %v230
      %v383 = vunpack.c.h.b16 %v230
      %v384 = vunpack.c.l.b16 %v231
      %v385 = vunpack.c.h.b16 %v231
      %v386 = vunpack.c.l.b16 %v232
      %v387 = vunpack.c.h.b16 %v232
      %v388 = vunpack.c.l.b16 %v233
      %v389 = vunpack.c.h.b16 %v233
      %v390 = vunpack.c.l.b16 %v234
      %v391 = vunpack.c.h.b16 %v234
      %v392 = vunpack.c.l.b16 %v235
      %v393 = vunpack.c.h.b16 %v235
      %v394 = vunpack.c.l.b16 %v236
      %v395 = vunpack.c.h.b16 %v236
      %v396 = vunpack.c.l.b16 %v237
      %v397 = vunpack.c.h.b16 %v237
      %v398 = vunpack.c.l.b16 %v238
      %v399 = vunpack.c.h.b16 %v238
      %v400 = vunpack.c.l.b16 %v239
      %v401 = vunpack.c.h.b16 %v239
      %v402 = vunpack.c.l.b16 %v240
      %v403 = vunpack.c.h.b16 %v240
      %v404 = vunpack.c.l.b16 %v241
      %v405 = vunpack.c.h.b16 %v241
      %v406 = vunpack.c.l.b16 %v242
      %v407 = vunpack.c.h.b16 %v242
      %v408 = vunpack.c.l.b16 %v243
      %v409 = vunpack.c.h.b16 %v243
      %v410 = vunpack.c.l.b16 %v244
      %v411 = vunpack.c.h.b16 %v244
      %v412 = vunpack.c.l.b16 %v245
      %v413 = vunpack.c.h.b16 %v245
      %v414 = vunpack.c.l.b16 %v246
      %v415 = vunpack.c.h.b16 %v246
      %v416 = vunpack.c.l.b16 %v247
      %v417 = vunpack.c.h.b16 %v247
      %v418 = vunpack.c.l.b16 %v248
      %v419 = vunpack.c.h.b16 %v248
      %v420 = vunpack.c.l.b16 %v249
      %v421 = vunpack.c.h.b16 %v249
      %v422 = vunpack.c.l.b16 %v250
      %v423 = vunpack.c.h.b16 %v250
      %v424 = vunpack.c.l.b16 %v251
      %v425 = vunpack.c.h.b16 %v251
      %v426 = vunpack.c.l.b16 %v252
      %v427 = vunpack.c.h.b16 %v252
      %v428 = vunpack.c.l.b16 %v253
      %v429 = vunpack.c.h.b16 %v253
      %v430 = vunpack.c.l.b16 %v254
      %v431 = vunpack.c.h.b16 %v254
      %v432 = vunpack.c.l.b16 %v255
      %v433 = vunpack.c.h.b16 %v255
      %v434 = vunpack.c.l.b16 %v256
      %v435 = vunpack.c.h.b16 %v256
      %v436 = vunpack.c.l.b16 %v257
      %v437 = vunpack.c.h.b16 %v257
      %v438 = vunpack.c.l.b16 %v258
      %v439 = vunpack.c.h.b16 %v258
      %v440 = vunpack.c.l.b16 %v259
      %v441 = vunpack.c.h.b16 %v259
      %v442 = vunpack.c.l.b16 %v260
      %v443 = vunpack.c.h.b16 %v260
      %v444 = vunpack.c.l.b16 %v261
      %v445 = vunpack.c.h.b16 %v261
      %v446 = vunpack.c.l.b16 %v262
      %v447 = vunpack.c.h.b16 %v262
      %v448 = vunpack.c.l.b16 %v263
      %v449 = vunpack.c.h.b16 %v263
      %v450 = vunpack.c.l.b16 %v264
      %v451 = vunpack.c.h.b16 %v264
      %v452 = vunpack.c.l.b16 %v265
      %v453 = vunpack.c.h.b16 %v265
      %v454 = vunpack.c.l.b16 %v266
      %v455 = vunpack.c.h.b16 %v266
      %v456 = vunpack.c.l.b16 %v267
      %v457 = vunpack.c.h.b16 %v267
      %v458 = vunpack.c.l.b16 %v268
      %v459 = vunpack.c.h.b16 %v268
      %v460 = vunpack.c.l.b16 %v269
      %v461 = vunpack.c.h.b16 %v269
      %v462 = vunpack.c.l.b16 %v270
      %v463 = vunpack.c.h.b16 %v270
      %v464 = vunpack.c.l.b16 %v271
      %v465 = vunpack.c.h.b16 %v271
      %v466 = vunpack.c.l.b16 %v272
      %v467 = vunpack.c.h.b16 %v272
      %v468 = vunpack.c.l.b16 %v273
      %v469 = vunpack.c.h.b16 %v273
      %v470 = vunpack.c.l.b16 %v274
      %v471 = vunpack.c.h.b16 %v274
      %v472 = vunpack.c.l.b16 %v275
      %v473 = vunpack.c.h.b16 %v275
      %v474 = vunpack.c.l.b16 %v276
      %v475 = vunpack.c.h.b16 %v276
      %v476 = vunpack.c.l.b16 %v277
      %v477 = vunpack.c.h.b16 %v277
      %v478 = vpack.c.b16 %v368, %v366
      %v479 = vpack.c.b16 %v369, %v367
      %v480 = vpack.c.b16 %v372, %v370
      %v481 = vpack.c.b16 %v373, %v371
      %v482 = vpack.c.b16 %v376, %v374
      %v483 = vpack.c.b16 %v377, %v375
      %v484 = vpack.c.b16 %v380, %v378
      %v485 = vpack.c.b16 %v381, %v379
      %v486 = vpack.c.b16 %v384, %v382
      %v487 = vpack.c.b16 %v385, %v383
      %v488 = vpack.c.b16 %v388, %v386
      %v489 = vpack.c.b16 %v389, %v387
      %v490 = vpack.c.b16 %v392, %v390
      %v491 = vpack.c.b16 %v393, %v391
      %v492 = vpack.c.b16 %v396, %v394
      %v493 = vpack.c.b16 %v397, %v395
      %v494 = vpack.c.b16 %v400, %v398
      %v495 = vpack.c.b16 %v401, %v399
      %v496 = vpack.c.b16 %v404, %v402
      %v497 = vpack.c.b16 %v405, %v403
      %v498 = vpack.c.b16 %v408, %v406
      %v499 = vpack.c.b16 %v409, %v407
      %v500 = vpack.c.b16 %v412, %v410
      %v501 = vpack.c.b16 %v413, %v411
      %v502 = vpack.c.b16 %v416, %v414
      %v503 = vpack.c.b16 %v417, %v415
      %v504 = vpack.c.b16 %v420, %v418
      %v505 = vpack.c.b16 %v421, %v419
      %v506 = vpack.c.b16 %v424, %v422
      %v507 = vpack.c.b16 %v425, %v423
      %v508 = vpack.c.b16 %v428, %v426
      %v509 = vpack.c.b16 %v429, %v427
      %v510 = vpack.c.b16 %v432, %v430
      %v511 = vpack.c.b16 %v433, %v431
      %v512 = vpack.c.b16 %v436, %v434
      %v513 = vpack.c.b16 %v437, %v435
      %v514 = vpack.c.b16 %v440, %v438
      %v515 = vpack.c.b16 %v441, %v439
      %v516 = vpack.c.b16 %v444, %v442
      %v517 = vpack.c.b16 %v445, %v443
      %v518 = vpack.c.b16 %v448, %v446
      %v519 = vpack.c.b16 %v449, %v447
      %v520 = vpack.c.b16 %v452, %v450
      %v521 = vpack.c.b16 %v453, %v451
      %v522 = vpack.c.b16 %v456, %v454
      %v523 = vpack.c.b16 %v457, %v455
      %v524 = vpack.c.b16 %v460, %v458
      %v525 = vpack.c.b16 %v461, %v459
      %v526 = vpack.c.b16 %v464, %v462
      %v527 = vpack.c.b16 %v465, %v463
      %v528 = vpack.c.b16 %v468, %v466
      %v529 = vpack.c.b16 %v469, %v467
      %v530 = vpack.c.b16 %v472, %v470
      %v531 = vpack.c.b16 %v473, %v471
      %v532 = vpack.c.b16 %v476, %v474
      %v533 = vpack.c.b16 %v477, %v475
      %v622 = vunpack.c.l.b16 %v278
      %v623 = vunpack.c.l.b16 %v279
      %v624 = vunpack.c.l.b16 %v280
      %v625 = vunpack.c.l.b16 %v281
      %v626 = vunpack.c.l.b16 %v282
      %v627 = vunpack.c.l.b16 %v283
      %v628 = vunpack.c.l.b16 %v284
      %v629 = vunpack.c.l.b16 %v285
      %v630 = vunpack.c.l.b16 %v286
      %v631 = vunpack.c.l.b16 %v287
      %v632 = vunpack.c.l.b16 %v288
      %v633 = vunpack.c.l.b16 %v289
      %v634 = vunpack.c.l.b16 %v290
      %v635 = vunpack.c.l.b16 %v291
      %v636 = vunpack.c.l.b16 %v292
      %v637 = vunpack.c.l.b16 %v293
      %v638 = vunpack.c.l.b16 %v294
      %v639 = vunpack.c.l.b16 %v295
      %v640 = vunpack.c.l.b16 %v296
      %v641 = vunpack.c.l.b16 %v297
      %v642 = vunpack.c.l.b16 %v298
      %v643 = vunpack.c.l.b16 %v299
      %v644 = vunpack.c.l.b16 %v300
      %v645 = vunpack.c.l.b16 %v301
      %v646 = vunpack.c.l.b16 %v302
      %v647 = vunpack.c.l.b16 %v303
      %v648 = vunpack.c.l.b16 %v304
      %v649 = vunpack.c.l.b16 %v305
      %v650 = vunpack.c.l.b16 %v306
      %v651 = vunpack.c.l.b16 %v307
      %v652 = vunpack.c.l.b16 %v308
      %v653 = vunpack.c.l.b16 %v309
      %v654 = vpack.c.b16 %v623, %v622
      %v655 = vpack.c.b16 %v625, %v624
      %v656 = vpack.c.b16 %v627, %v626
      %v657 = vpack.c.b16 %v629, %v628
      %v658 = vpack.c.b16 %v631, %v630
      %v659 = vpack.c.b16 %v633, %v632
      %v660 = vpack.c.b16 %v635, %v634
      %v661 = vpack.c.b16 %v637, %v636
      %v662 = vpack.c.b16 %v639, %v638
      %v663 = vpack.c.b16 %v641, %v640
      %v664 = vpack.c.b16 %v643, %v642
      %v665 = vpack.c.b16 %v645, %v644
      %v666 = vpack.c.b16 %v647, %v646
      %v667 = vpack.c.b16 %v649, %v648
      %v668 = vpack.c.b16 %v651, %v650
      %v669 = vpack.c.b16 %v653, %v652
      %686 = vmatprep.subr.bf16.mxu0 0
      %687 = vmatpush1.bf16.msra.mxu0 %v661
      %688 = vmatprep.subr.bf16.mxu0 0
      %689 = vmatpush1.bf16.msra.mxu0 %v660
      %690 = vmatprep.subr.bf16.mxu0 0
      %691 = vmatpush1.bf16.msra.mxu0 %v659
      %692 = vmatprep.subr.bf16.mxu0 0
      %693 = vmatpush1.bf16.msra.mxu0 %v658
      %694 = vmatprep.subr.bf16.mxu0 0
      %695 = vmatpush1.bf16.msra.mxu0 %v657
      %696 = vmatprep.subr.bf16.mxu0 0
      %697 = vmatpush1.bf16.msra.mxu0 %v656
      %698 = vmatprep.subr.bf16.mxu0 0
      %699 = vmatpush1.bf16.msra.mxu0 %v655
      %700 = vmatprep.subr.bf16.mxu0 0
      %701 = vmatpush1.bf16.msra.mxu0 %v654
      %702 = vmatprep.subr.bf16.mxu0 0
      %703 = vmatpush2.bf16.msra.mxu0 %v669
      %704 = vmatprep.subr.bf16.mxu0 0
      %705 = vmatpush2.bf16.msra.mxu0 %v668
      %706 = vmatprep.subr.bf16.mxu0 0
      %707 = vmatpush2.bf16.msra.mxu0 %v667
      %708 = vmatprep.subr.bf16.mxu0 0
      %709 = vmatpush2.bf16.msra.mxu0 %v666
      %710 = vmatprep.subr.bf16.mxu0 0
      %711 = vmatpush2.bf16.msra.mxu0 %v665
      %712 = vmatprep.subr.bf16.mxu0 0
      %713 = vmatpush2.bf16.msra.mxu0 %v664
      %714 = vmatprep.subr.bf16.mxu0 0
      %715 = vmatpush2.bf16.msra.mxu0 %v663
      %716 = vmatprep.subr.bf16.mxu0 0
      %717 = vmatpush2.bf16.msra.mxu0 %v662
      %718 = vmatprep.mubr.bf16.mxu0 %v479
      %719 = vmatmul.mubr.bf16.gmra.mxu0 %v478
      %v720 = vpop.f32.mrf.mxu0
      %v721 = vadd.f32 0.0, %v720
      %v722 = vpop.f32.mrf.mxu0
      %v723 = vpop.f32.mrf.mxu0
      %v724 = vadd.f32 0.0, %v723
      %v725 = vpop.f32.mrf.mxu0
      %726 = vmatprep.mubr.bf16.mxu0 %v481
      %727 = vmatmul.mubr.bf16.gmra.mxu0 %v480
      %v728 = vpop.f32.mrf.mxu0
      %v729 = vadd.f32 0.0, %v728
      %v730 = vpop.f32.mrf.mxu0
      %v731 = vpop.f32.mrf.mxu0
      %v732 = vadd.f32 0.0, %v731
      %v733 = vpop.f32.mrf.mxu0
      %734 = vmatprep.mubr.bf16.mxu0 %v483
      %735 = vmatmul.mubr.bf16.gmra.mxu0 %v482
      %v736 = vpop.f32.mrf.mxu0
      %v737 = vadd.f32 0.0, %v736
      %v738 = vpop.f32.mrf.mxu0
      %v739 = vpop.f32.mrf.mxu0
      %v740 = vadd.f32 0.0, %v739
      %v741 = vpop.f32.mrf.mxu0
      %742 = vmatprep.mubr.bf16.mxu0 %v485
      %743 = vmatmul.mubr.bf16.gmra.mxu0 %v484
      %v744 = vpop.f32.mrf.mxu0
      %v745 = vadd.f32 0.0, %v744
      %v746 = vpop.f32.mrf.mxu0
      %v747 = vpop.f32.mrf.mxu0
      %v748 = vadd.f32 0.0, %v747
      %v749 = vpop.f32.mrf.mxu0
      %750 = vmatprep.mubr.bf16.mxu0 %v487
      %751 = vmatmul.mubr.bf16.gmra.mxu0 %v486
      %v752 = vpop.f32.mrf.mxu0
      %v753 = vadd.f32 0.0, %v752
      %v754 = vpop.f32.mrf.mxu0
      %v755 = vpop.f32.mrf.mxu0
      %v756 = vadd.f32 0.0, %v755
      %v757 = vpop.f32.mrf.mxu0
      %758 = vmatprep.mubr.bf16.mxu0 %v489
      %759 = vmatmul.mubr.bf16.gmra.mxu0 %v488
      %v760 = vpop.f32.mrf.mxu0
      %v761 = vadd.f32 0.0, %v760
      %v762 = vpop.f32.mrf.mxu0
      %v763 = vpop.f32.mrf.mxu0
      %v764 = vadd.f32 0.0, %v763
      %v765 = vpop.f32.mrf.mxu0
      %766 = vmatprep.mubr.bf16.mxu0 %v491
      %767 = vmatmul.mubr.bf16.gmra.mxu0 %v490
      %v768 = vpop.f32.mrf.mxu0
      %v769 = vadd.f32 0.0, %v768
      %v770 = vpop.f32.mrf.mxu0
      %v771 = vpop.f32.mrf.mxu0
      %v772 = vadd.f32 0.0, %v771
      %v773 = vpop.f32.mrf.mxu0
      %774 = vmatprep.mubr.bf16.mxu0 %v493
      %775 = vmatmul.mubr.bf16.gmra.mxu0 %v492
      %v776 = vpop.f32.mrf.mxu0
      %v777 = vadd.f32 0.0, %v776
      %v778 = vpop.f32.mrf.mxu0
      %v779 = vpop.f32.mrf.mxu0
      %v780 = vadd.f32 0.0, %v779
      %v781 = vpop.f32.mrf.mxu0
      %782 = vmatprep.mubr.bf16.mxu0 %v495
      %783 = vmatmul.mubr.bf16.gmra.mxu0 %v494
      %v784 = vpop.f32.mrf.mxu0
      %v785 = vadd.f32 0.0, %v784
      %v786 = vpop.f32.mrf.mxu0
      %v787 = vpop.f32.mrf.mxu0
      %v788 = vadd.f32 0.0, %v787
      %v789 = vpop.f32.mrf.mxu0
      %790 = vmatprep.mubr.bf16.mxu0 %v497
      %791 = vmatmul.mubr.bf16.gmra.mxu0 %v496
      %v792 = vpop.f32.mrf.mxu0
      %v793 = vadd.f32 0.0, %v792
      %v794 = vpop.f32.mrf.mxu0
      %v795 = vpop.f32.mrf.mxu0
      %v796 = vadd.f32 0.0, %v795
      %v797 = vpop.f32.mrf.mxu0
      %798 = vmatprep.mubr.bf16.mxu0 %v499
      %799 = vmatmul.mubr.bf16.gmra.mxu0 %v498
      %v800 = vpop.f32.mrf.mxu0
      %v801 = vadd.f32 0.0, %v800
      %v802 = vpop.f32.mrf.mxu0
      %v803 = vpop.f32.mrf.mxu0
      %v804 = vadd.f32 0.0, %v803
      %v805 = vpop.f32.mrf.mxu0
      %806 = vmatprep.mubr.bf16.mxu0 %v501
      %807 = vmatmul.mubr.bf16.gmra.mxu0 %v500
      %v808 = vpop.f32.mrf.mxu0
      %v809 = vadd.f32 0.0, %v808
      %v810 = vpop.f32.mrf.mxu0
      %v811 = vpop.f32.mrf.mxu0
      %v812 = vadd.f32 0.0, %v811
      %v813 = vpop.f32.mrf.mxu0
      %814 = vmatprep.mubr.bf16.mxu0 %v503
      %815 = vmatmul.mubr.bf16.gmra.mxu0 %v502
      %v816 = vpop.f32.mrf.mxu0
      %v817 = vadd.f32 0.0, %v816
      %v818 = vpop.f32.mrf.mxu0
      %v819 = vpop.f32.mrf.mxu0
      %v820 = vadd.f32 0.0, %v819
      %v821 = vpop.f32.mrf.mxu0
      %822 = vmatprep.mubr.bf16.mxu0 %v505
      %823 = vmatmul.mubr.bf16.gmra.mxu0 %v504
      %v824 = vpop.f32.mrf.mxu0
      %v825 = vadd.f32 0.0, %v824
      %v826 = vpop.f32.mrf.mxu0
      %v827 = vpop.f32.mrf.mxu0
      %v828 = vadd.f32 0.0, %v827
      %v829 = vpop.f32.mrf.mxu0
      %830 = vmatprep.mubr.bf16.mxu0 %v507
      %831 = vmatmul.mubr.bf16.gmra.mxu0 %v506
      %v832 = vpop.f32.mrf.mxu0
      %v833 = vadd.f32 0.0, %v832
      %v834 = vpop.f32.mrf.mxu0
      %v835 = vpop.f32.mrf.mxu0
      %v836 = vadd.f32 0.0, %v835
      %v837 = vpop.f32.mrf.mxu0
      %838 = vmatprep.mubr.bf16.mxu0 %v509
      %839 = vmatmul.mubr.bf16.gmra.mxu0 %v508
      %v840 = vpop.f32.mrf.mxu0
      %v841 = vadd.f32 0.0, %v840
      %v842 = vpop.f32.mrf.mxu0
      %v843 = vpop.f32.mrf.mxu0
      %v844 = vadd.f32 0.0, %v843
      %v845 = vpop.f32.mrf.mxu0
      %846 = vmatprep.mubr.bf16.mxu0 %v511
      %847 = vmatmul.mubr.bf16.gmra.mxu0 %v510
      %v848 = vpop.f32.mrf.mxu0
      %v849 = vadd.f32 0.0, %v848
      %v850 = vpop.f32.mrf.mxu0
      %v851 = vpop.f32.mrf.mxu0
      %v852 = vadd.f32 0.0, %v851
      %v853 = vpop.f32.mrf.mxu0
      %854 = vmatprep.mubr.bf16.mxu0 %v513
      %855 = vmatmul.mubr.bf16.gmra.mxu0 %v512
      %v856 = vpop.f32.mrf.mxu0
      %v857 = vadd.f32 0.0, %v856
      %v858 = vpop.f32.mrf.mxu0
      %v859 = vpop.f32.mrf.mxu0
      %v860 = vadd.f32 0.0, %v859
      %v861 = vpop.f32.mrf.mxu0
      %862 = vmatprep.mubr.bf16.mxu0 %v515
      %863 = vmatmul.mubr.bf16.gmra.mxu0 %v514
      %v864 = vpop.f32.mrf.mxu0
      %v865 = vadd.f32 0.0, %v864
      %v866 = vpop.f32.mrf.mxu0
      %v867 = vpop.f32.mrf.mxu0
      %v868 = vadd.f32 0.0, %v867
      %v869 = vpop.f32.mrf.mxu0
      %870 = vmatprep.mubr.bf16.mxu0 %v517
      %871 = vmatmul.mubr.bf16.gmra.mxu0 %v516
      %v872 = vpop.f32.mrf.mxu0
      %v873 = vadd.f32 0.0, %v872
      %v874 = vpop.f32.mrf.mxu0
      %v875 = vpop.f32.mrf.mxu0
      %v876 = vadd.f32 0.0, %v875
      %v877 = vpop.f32.mrf.mxu0
      %878 = vmatprep.mubr.bf16.mxu0 %v519
      %879 = vmatmul.mubr.bf16.gmra.mxu0 %v518
      %v880 = vpop.f32.mrf.mxu0
      %v881 = vadd.f32 0.0, %v880
      %v882 = vpop.f32.mrf.mxu0
      %v883 = vpop.f32.mrf.mxu0
      %v884 = vadd.f32 0.0, %v883
      %v885 = vpop.f32.mrf.mxu0
      %886 = vmatprep.mubr.bf16.mxu0 %v521
      %887 = vmatmul.mubr.bf16.gmra.mxu0 %v520
      %v888 = vpop.f32.mrf.mxu0
      %v889 = vadd.f32 0.0, %v888
      %v890 = vpop.f32.mrf.mxu0
      %v891 = vpop.f32.mrf.mxu0
      %v892 = vadd.f32 0.0, %v891
      %v893 = vpop.f32.mrf.mxu0
      %894 = vmatprep.mubr.bf16.mxu0 %v523
      %895 = vmatmul.mubr.bf16.gmra.mxu0 %v522
      %v896 = vpop.f32.mrf.mxu0
      %v897 = vadd.f32 0.0, %v896
      %v898 = vpop.f32.mrf.mxu0
      %v899 = vpop.f32.mrf.mxu0
      %v900 = vadd.f32 0.0, %v899
      %v901 = vpop.f32.mrf.mxu0
      %902 = vmatprep.mubr.bf16.mxu0 %v525
      %903 = vmatmul.mubr.bf16.gmra.mxu0 %v524
      %v904 = vpop.f32.mrf.mxu0
      %v905 = vadd.f32 0.0, %v904
      %v906 = vpop.f32.mrf.mxu0
      %v907 = vpop.f32.mrf.mxu0
      %v908 = vadd.f32 0.0, %v907
      %v909 = vpop.f32.mrf.mxu0
      %910 = vmatprep.mubr.bf16.mxu0 %v527
      %911 = vmatmul.mubr.bf16.gmra.mxu0 %v526
      %v912 = vpop.f32.mrf.mxu0
      %v913 = vadd.f32 0.0, %v912
      %v914 = vpop.f32.mrf.mxu0
      %v915 = vpop.f32.mrf.mxu0
      %v916 = vadd.f32 0.0, %v915
      %v917 = vpop.f32.mrf.mxu0
      %918 = vmatprep.mubr.bf16.mxu0 %v529
      %919 = vmatmul.mubr.bf16.gmra.mxu0 %v528
      %v920 = vpop.f32.mrf.mxu0
      %v921 = vadd.f32 0.0, %v920
      %v922 = vpop.f32.mrf.mxu0
      %v923 = vpop.f32.mrf.mxu0
      %v924 = vadd.f32 0.0, %v923
      %v925 = vpop.f32.mrf.mxu0
      %926 = vmatprep.mubr.bf16.mxu0 %v531
      %927 = vmatmul.mubr.bf16.gmra.mxu0 %v530
      %v928 = vpop.f32.mrf.mxu0
      %v929 = vadd.f32 0.0, %v928
      %v930 = vpop.f32.mrf.mxu0
      %v931 = vpop.f32.mrf.mxu0
      %v932 = vadd.f32 0.0, %v931
      %v933 = vpop.f32.mrf.mxu0
      %934 = vmatprep.mubr.bf16.mxu0 %v533
      %935 = vmatmul.mubr.bf16.gmra.mxu0 %v532
      %v936 = vpop.f32.mrf.mxu0
      %v937 = vadd.f32 0.0, %v936
      %v938 = vpop.f32.mrf.mxu0
      %v939 = vpop.f32.mrf.mxu0
      %v940 = vadd.f32 0.0, %v939
      %v941 = vpop.f32.mrf.mxu0
      %942 = vdwg.mxu0
      %p943 = scmp.eq.s32.totalorder %s19, 0
      // Predicated region
      $region37: #{classifier_forward.5} parent=35 // pred_check
        %p944 = pneg %p943
      $region38: #{classifier_forward.5} parent=35 // pred_check_branch
        %946 = sbr.rel (%p944) target = $region40
      $region39: #{classifier_forward.5} parent=35 // pred_region
        %v947 = vadd.f32 %v721, %v724
        %v948 = vadd.f32 %v947, %v729
        %v949 = vadd.f32 %v948, %v732
        %v950 = vadd.f32 %v949, %v737
        %v951 = vadd.f32 %v950, %v740
        %v952 = vadd.f32 %v951, %v745
        %v953 = vadd.f32 %v952, %v748
        %v954 = vadd.f32 %v953, %v753
        %v955 = vadd.f32 %v954, %v756
        %v956 = vadd.f32 %v955, %v761
        %v957 = vadd.f32 %v956, %v764
        %v958 = vadd.f32 %v957, %v769
        %v959 = vadd.f32 %v958, %v772
        %v960 = vadd.f32 %v959, %v777
        %v961 = vadd.f32 %v960, %v780
        %v962 = vadd.f32 %v961, %v785
        %v963 = vadd.f32 %v962, %v788
        %v964 = vadd.f32 %v963, %v793
        %v965 = vadd.f32 %v964, %v796
        %v966 = vadd.f32 %v965, %v801
        %v967 = vadd.f32 %v966, %v804
        %v968 = vadd.f32 %v967, %v809
        %v969 = vadd.f32 %v968, %v812
        %v970 = vadd.f32 %v969, %v817
        %v971 = vadd.f32 %v970, %v820
        %v972 = vadd.f32 %v971, %v825
        %v973 = vadd.f32 %v972, %v828
        %v974 = vadd.f32 %v973, %v833
        %v975 = vadd.f32 %v974, %v836
        %v976 = vadd.f32 %v975, %v841
        %v977 = vadd.f32 %v976, %v844
        %v978 = vadd.f32 %v977, %v849
        %v979 = vadd.f32 %v978, %v852
        %v980 = vadd.f32 %v979, %v857
        %v981 = vadd.f32 %v980, %v860
        %v982 = vadd.f32 %v981, %v865
        %v983 = vadd.f32 %v982, %v868
        %v984 = vadd.f32 %v983, %v873
        %v985 = vadd.f32 %v984, %v876
        %v986 = vadd.f32 %v985, %v881
        %v987 = vadd.f32 %v986, %v884
        %v988 = vadd.f32 %v987, %v889
        %v989 = vadd.f32 %v988, %v892
        %v990 = vadd.f32 %v989, %v897
        %v991 = vadd.f32 %v990, %v900
        %v992 = vadd.f32 %v991, %v905
        %v993 = vadd.f32 %v992, %v908
        %v994 = vadd.f32 %v993, %v913
        %v995 = vadd.f32 %v994, %v916
        %v996 = vadd.f32 %v995, %v921
        %v997 = vadd.f32 %v996, %v924
        %v998 = vadd.f32 %v997, %v929
        %v999 = vadd.f32 %v998, %v932
        %v1000 = vadd.f32 %v999, %v937
        %v1001 = vadd.f32 %v1000, %v940
        %v1002 = vrot.slane %v1001, 4
        %v1003 = vadd.f32 %v1001, %v1002
        %v1004 = vrot.slane %v1003, 2
        %v1005 = vadd.f32 %v1003, %v1004
        %v1006 = vrot.slane %v1005, 1
        %v1007 = vadd.f32 %v1005, %v1006
        %v1008 = vmul.f32 %v721, %v721
        %v1009 = vmul.f32 %v724, %v724
        %v1010 = vmul.f32 %v729, %v729
        %v1011 = vmul.f32 %v732, %v732
        %v1012 = vmul.f32 %v737, %v737
        %v1013 = vmul.f32 %v740, %v740
        %v1014 = vmul.f32 %v745, %v745
        %v1015 = vmul.f32 %v748, %v748
        %v1016 = vmul.f32 %v753, %v753
        %v1017 = vmul.f32 %v756, %v756
        %v1018 = vmul.f32 %v761, %v761
        %v1019 = vmul.f32 %v764, %v764
        %v1020 = vmul.f32 %v769, %v769
        %v1021 = vmul.f32 %v772, %v772
        %v1022 = vmul.f32 %v777, %v777
        %v1023 = vmul.f32 %v780, %v780
        %v1024 = vmul.f32 %v785, %v785
        %v1025 = vmul.f32 %v788, %v788
        %v1026 = vmul.f32 %v793, %v793
        %v1027 = vmul.f32 %v796, %v796
        %v1028 = vmul.f32 %v801, %v801
        %v1029 = vmul.f32 %v804, %v804
        %v1030 = vmul.f32 %v809, %v809
        %v1031 = vmul.f32 %v812, %v812
        %v1032 = vmul.f32 %v817, %v817
        %v1033 = vmul.f32 %v820, %v820
        %v1034 = vmul.f32 %v825, %v825
        %v1035 = vmul.f32 %v828, %v828
        %v1036 = vmul.f32 %v833, %v833
        %v1037 = vmul.f32 %v836, %v836
        %v1038 = vmul.f32 %v841, %v841
        %v1039 = vmul.f32 %v844, %v844
        %v1040 = vmul.f32 %v849, %v849
        %v1041 = vmul.f32 %v852, %v852
        %v1042 = vmul.f32 %v857, %v857
        %v1043 = vmul.f32 %v860, %v860
        %v1044 = vmul.f32 %v865, %v865
        %v1045 = vmul.f32 %v868, %v868
        %v1046 = vmul.f32 %v873, %v873
        %v1047 = vmul.f32 %v876, %v876
        %v1048 = vmul.f32 %v881, %v881
        %v1049 = vmul.f32 %v884, %v884
        %v1050 = vmul.f32 %v889, %v889
        %v1051 = vmul.f32 %v892, %v892
        %v1052 = vmul.f32 %v897, %v897
        %v1053 = vmul.f32 %v900, %v900
        %v1054 = vmul.f32 %v905, %v905
        %v1055 = vmul.f32 %v908, %v908
        %v1056 = vmul.f32 %v913, %v913
        %v1057 = vmul.f32 %v916, %v916
        %v1058 = vmul.f32 %v921, %v921
        %v1059 = vmul.f32 %v924, %v924
        %v1060 = vmul.f32 %v929, %v929
        %v1061 = vmul.f32 %v932, %v932
        %v1062 = vmul.f32 %v937, %v937
        %v1063 = vmul.f32 %v940, %v940
        %v1064 = vadd.f32 %v1008, %v1009
        %v1065 = vadd.f32 %v1064, %v1010
        %v1066 = vadd.f32 %v1065, %v1011
        %v1067 = vadd.f32 %v1066, %v1012
        %v1068 = vadd.f32 %v1067, %v1013
        %v1069 = vadd.f32 %v1068, %v1014
        %v1070 = vadd.f32 %v1069, %v1015
        %v1071 = vadd.f32 %v1070, %v1016
        %v1072 = vadd.f32 %v1071, %v1017
        %v1073 = vadd.f32 %v1072, %v1018
        %v1074 = vadd.f32 %v1073, %v1019
        %v1075 = vadd.f32 %v1074, %v1020
        %v1076 = vadd.f32 %v1075, %v1021
        %v1077 = vadd.f32 %v1076, %v1022
        %v1078 = vadd.f32 %v1077, %v1023
        %v1079 = vadd.f32 %v1078, %v1024
        %v1080 = vadd.f32 %v1079, %v1025
        %v1081 = vadd.f32 %v1080, %v1026
        %v1082 = vadd.f32 %v1081, %v1027
        %v1083 = vadd.f32 %v1082, %v1028
        %v1084 = vadd.f32 %v1083, %v1029
        %v1085 = vadd.f32 %v1084, %v1030
        %v1086 = vadd.f32 %v1085, %v1031
        %v1087 = vadd.f32 %v1086, %v1032
        %v1088 = vadd.f32 %v1087, %v1033
        %v1089 = vadd.f32 %v1088, %v1034
        %v1090 = vadd.f32 %v1089, %v1035
        %v1091 = vadd.f32 %v1090, %v1036
        %v1092 = vadd.f32 %v1091, %v1037
        %v1093 = vadd.f32 %v1092, %v1038
        %v1094 = vadd.f32 %v1093, %v1039
        %v1095 = vadd.f32 %v1094, %v1040
        %v1096 = vadd.f32 %v1095, %v1041
        %v1097 = vadd.f32 %v1096, %v1042
        %v1098 = vadd.f32 %v1097, %v1043
        %v1099 = vadd.f32 %v1098, %v1044
        %v1100 = vadd.f32 %v1099, %v1045
        %v1101 = vadd.f32 %v1100, %v1046
        %v1102 = vadd.f32 %v1101, %v1047
        %v1103 = vadd.f32 %v1102, %v1048
        %v1104 = vadd.f32 %v1103, %v1049
        %v1105 = vadd.f32 %v1104, %v1050
        %v1106 = vadd.f32 %v1105, %v1051
        %v1107 = vadd.f32 %v1106, %v1052
        %v1108 = vadd.f32 %v1107, %v1053
        %v1109 = vadd.f32 %v1108, %v1054
        %v1110 = vadd.f32 %v1109, %v1055
        %v1111 = vadd.f32 %v1110, %v1056
        %v1112 = vadd.f32 %v1111, %v1057
        %v1113 = vadd.f32 %v1112, %v1058
        %v1114 = vadd.f32 %v1113, %v1059
        %v1115 = vadd.f32 %v1114, %v1060
        %v1116 = vadd.f32 %v1115, %v1061
        %v1117 = vadd.f32 %v1116, %v1062
        %v1118 = vadd.f32 %v1117, %v1063
        %v1119 = vrot.slane %v1118, 4
        %v1120 = vadd.f32 %v1118, %v1119
        %v1121 = vrot.slane %v1120, 2
        %v1122 = vadd.f32 %v1120, %v1121
        %v1123 = vrot.slane %v1122, 1
        %v1124 = vadd.f32 %v1122, %v1123
        %p1125 = scmp.eq.s32.totalorder %s20, 0
        // Predicated region
        $region41: #{classifier_forward.5} parent=39 // pred_check
          %p1126 = pneg %p1125
        $region42: #{classifier_forward.5} parent=39 // pred_check_branch
          %1128 = sbr.rel (%p1126) target = $region44
        $region43: #{classifier_forward.5} parent=39 // pred_region
          %1129 = vst [vmem:[#allocation2] sm:$0x1] 0.0
          %1130 = vst [vmem:[#allocation3] sm:$0x1] 0.0
        $region44: #{classifier_forward.5} parent=39 // pred_fallthru
          _
        %v1131 = vld [vmem:[#allocation2] sm:$0x1]
        %v1132 = vadd.f32 %v1131, %v1007
        %1133 = vst [vmem:[#allocation2] sm:$0x1] %v1132
        %v1134 = vld [vmem:[#allocation3] sm:$0x1]
        %v1135 = vadd.f32 %v1134, %v1124
        %1136 = vst [vmem:[#allocation3] sm:$0x1] %v1135
        // Predicated region
        $region45: #{classifier_forward.5} parent=39 // pred_check
          %p1137 = pneg %p1125
        $region46: #{classifier_forward.5} parent=39 // pred_check_branch
          %1139 = sbr.rel (%p1137) target = $region48
        $region47: #{classifier_forward.5} parent=39 // pred_region
          %v1140 = vld [vmem:[#allocation2] sm:$0x1]
          %v1141 = vmul.f32 %v1140, 0.0025510204
          %v1142 = vld [vmem:[#allocation3] sm:$0x1]
          %v1143 = vmul.f32 %v1142, 0.0025510204
          %v1144 = vmul.f32 %v1141, %v1141
          %v1145 = vsub.f32 %v1143, %v1144
          %v1146 = vmax.f32 %v1145, 0.0
          %v1147 = vadd.f32 %v1146, 1e-05
          %v1148 = vrsqrt.pop %v1147
          %v1149 = vld [vmem:[%s2] sm:$0x1]
          %v1150 = vmul.f32 %v1149, %v1148
          %1151 = vst [vmem:[#allocation4] sm:$0x1] %v1150
          %v1152 = vld [vmem:[%s3] sm:$0x1]
          %v1153 = vmul.f32 %v1141, %v1150
          %v1154 = vsub.f32 %v1152, %v1153
          %1155 = vst [vmem:[#allocation5] sm:$0x1] %v1154
        $region48: #{classifier_forward.5} parent=39 // pred_fallthru
          _
      $region40: #{classifier_forward.5} parent=35 // pred_fallthru
        _
      %p1156 = scmp.eq.s32.totalorder %s19, 1
      // Predicated region
      $region49: #{classifier_forward.5} parent=35 // pred_check
        %p1157 = pneg %p1156
      $region50: #{classifier_forward.5} parent=35 // pred_check_branch
        %1159 = sbr.rel (%p1157) target = $region52
      $region51: #{classifier_forward.5} parent=35 // pred_region
        %v1160 = vld [vmem:[#allocation4] sm:$0x1]
        %v1162 = vlaneseq
        %v1163 = vshrl.u32 %v1162, 7
        %v1164 = vsub.s32 0, %v1163
        %v1165 = vrot.slane %v1160, %v1164
        %v1167 = vmul.f32 %v721, %v1165
        %v1168 = vmul.f32 %v724, %v1165
        %v1169 = vmul.f32 %v729, %v1165
        %v1170 = vmul.f32 %v732, %v1165
        %v1171 = vmul.f32 %v737, %v1165
        %v1172 = vmul.f32 %v740, %v1165
        %v1173 = vmul.f32 %v745, %v1165
        %v1174 = vmul.f32 %v748, %v1165
        %v1175 = vmul.f32 %v753, %v1165
        %v1176 = vmul.f32 %v756, %v1165
        %v1177 = vmul.f32 %v761, %v1165
        %v1178 = vmul.f32 %v764, %v1165
        %v1179 = vmul.f32 %v769, %v1165
        %v1180 = vmul.f32 %v772, %v1165
        %v1181 = vmul.f32 %v777, %v1165
        %v1182 = vmul.f32 %v780, %v1165
        %v1183 = vmul.f32 %v785, %v1165
        %v1184 = vmul.f32 %v788, %v1165
        %v1185 = vmul.f32 %v793, %v1165
        %v1186 = vmul.f32 %v796, %v1165
        %v1187 = vmul.f32 %v801, %v1165
        %v1188 = vmul.f32 %v804, %v1165
        %v1189 = vmul.f32 %v809, %v1165
        %v1190 = vmul.f32 %v812, %v1165
        %v1191 = vmul.f32 %v817, %v1165
        %v1192 = vmul.f32 %v820, %v1165
        %v1193 = vmul.f32 %v825, %v1165
        %v1194 = vmul.f32 %v828, %v1165
        %v1195 = vmul.f32 %v833, %v1165
        %v1196 = vmul.f32 %v836, %v1165
        %v1197 = vmul.f32 %v841, %v1165
        %v1198 = vmul.f32 %v844, %v1165
        %v1199 = vmul.f32 %v849, %v1165
        %v1200 = vmul.f32 %v852, %v1165
        %v1201 = vmul.f32 %v857, %v1165
        %v1202 = vmul.f32 %v860, %v1165
        %v1203 = vmul.f32 %v865, %v1165
        %v1204 = vmul.f32 %v868, %v1165
        %v1205 = vmul.f32 %v873, %v1165
        %v1206 = vmul.f32 %v876, %v1165
        %v1207 = vmul.f32 %v881, %v1165
        %v1208 = vmul.f32 %v884, %v1165
        %v1209 = vmul.f32 %v889, %v1165
        %v1210 = vmul.f32 %v892, %v1165
        %v1211 = vmul.f32 %v897, %v1165
        %v1212 = vmul.f32 %v900, %v1165
        %v1213 = vmul.f32 %v905, %v1165
        %v1214 = vmul.f32 %v908, %v1165
        %v1215 = vmul.f32 %v913, %v1165
        %v1216 = vmul.f32 %v916, %v1165
        %v1217 = vmul.f32 %v921, %v1165
        %v1218 = vmul.f32 %v924, %v1165
        %v1219 = vmul.f32 %v929, %v1165
        %v1220 = vmul.f32 %v932, %v1165
        %v1221 = vmul.f32 %v937, %v1165
        %v1222 = vmul.f32 %v940, %v1165
        %v1223 = vld [vmem:[#allocation5] sm:$0x1]
        %v1225 = vlaneseq
        %v1226 = vshrl.u32 %v1225, 7
        %v1227 = vsub.s32 0, %v1226
        %v1228 = vrot.slane %v1223, %v1227
        %v1230 = vadd.f32 %v1167, %v1228
        %v1231 = vadd.f32 %v1168, %v1228
        %v1232 = vadd.f32 %v1169, %v1228
        %v1233 = vadd.f32 %v1170, %v1228
        %v1234 = vadd.f32 %v1171, %v1228
        %v1235 = vadd.f32 %v1172, %v1228
        %v1236 = vadd.f32 %v1173, %v1228
        %v1237 = vadd.f32 %v1174, %v1228
        %v1238 = vadd.f32 %v1175, %v1228
        %v1239 = vadd.f32 %v1176, %v1228
        %v1240 = vadd.f32 %v1177, %v1228
        %v1241 = vadd.f32 %v1178, %v1228
        %v1242 = vadd.f32 %v1179, %v1228
        %v1243 = vadd.f32 %v1180, %v1228
        %v1244 = vadd.f32 %v1181, %v1228
        %v1245 = vadd.f32 %v1182, %v1228
        %v1246 = vadd.f32 %v1183, %v1228
        %v1247 = vadd.f32 %v1184, %v1228
        %v1248 = vadd.f32 %v1185, %v1228
        %v1249 = vadd.f32 %v1186, %v1228
        %v1250 = vadd.f32 %v1187, %v1228
        %v1251 = vadd.f32 %v1188, %v1228
        %v1252 = vadd.f32 %v1189, %v1228
        %v1253 = vadd.f32 %v1190, %v1228
        %v1254 = vadd.f32 %v1191, %v1228
        %v1255 = vadd.f32 %v1192, %v1228
        %v1256 = vadd.f32 %v1193, %v1228
        %v1257 = vadd.f32 %v1194, %v1228
        %v1258 = vadd.f32 %v1195, %v1228
        %v1259 = vadd.f32 %v1196, %v1228
        %v1260 = vadd.f32 %v1197, %v1228
        %v1261 = vadd.f32 %v1198, %v1228
        %v1262 = vadd.f32 %v1199, %v1228
        %v1263 = vadd.f32 %v1200, %v1228
        %v1264 = vadd.f32 %v1201, %v1228
        %v1265 = vadd.f32 %v1202, %v1228
        %v1266 = vadd.f32 %v1203, %v1228
        %v1267 = vadd.f32 %v1204, %v1228
        %v1268 = vadd.f32 %v1205, %v1228
        %v1269 = vadd.f32 %v1206, %v1228
        %v1270 = vadd.f32 %v1207, %v1228
        %v1271 = vadd.f32 %v1208, %v1228
        %v1272 = vadd.f32 %v1209, %v1228
        %v1273 = vadd.f32 %v1210, %v1228
        %v1274 = vadd.f32 %v1211, %v1228
        %v1275 = vadd.f32 %v1212, %v1228
        %v1276 = vadd.f32 %v1213, %v1228
        %v1277 = vadd.f32 %v1214, %v1228
        %v1278 = vadd.f32 %v1215, %v1228
        %v1279 = vadd.f32 %v1216, %v1228
        %v1280 = vadd.f32 %v1217, %v1228
        %v1281 = vadd.f32 %v1218, %v1228
        %v1282 = vadd.f32 %v1219, %v1228
        %v1283 = vadd.f32 %v1220, %v1228
        %v1284 = vadd.f32 %v1221, %v1228
        %v1285 = vadd.f32 %v1222, %v1228
        %vm1286 = vcmp.ge.f32.partialorder %v1230, 0.0
        %vm1287 = vcmp.ge.f32.partialorder %v1231, 0.0
        %vm1288 = vcmp.ge.f32.partialorder %v1232, 0.0
        %vm1289 = vcmp.ge.f32.partialorder %v1233, 0.0
        %vm1290 = vcmp.ge.f32.partialorder %v1234, 0.0
        %vm1291 = vcmp.ge.f32.partialorder %v1235, 0.0
        %vm1292 = vcmp.ge.f32.partialorder %v1236, 0.0
        %vm1293 = vcmp.ge.f32.partialorder %v1237, 0.0
        %vm1294 = vcmp.ge.f32.partialorder %v1238, 0.0
        %vm1295 = vcmp.ge.f32.partialorder %v1239, 0.0
        %vm1296 = vcmp.ge.f32.partialorder %v1240, 0.0
        %vm1297 = vcmp.ge.f32.partialorder %v1241, 0.0
        %vm1298 = vcmp.ge.f32.partialorder %v1242, 0.0
        %vm1299 = vcmp.ge.f32.partialorder %v1243, 0.0
        %vm1300 = vcmp.ge.f32.partialorder %v1244, 0.0
        %vm1301 = vcmp.ge.f32.partialorder %v1245, 0.0
        %vm1302 = vcmp.ge.f32.partialorder %v1246, 0.0
        %vm1303 = vcmp.ge.f32.partialorder %v1247, 0.0
        %vm1304 = vcmp.ge.f32.partialorder %v1248, 0.0
        %vm1305 = vcmp.ge.f32.partialorder %v1249, 0.0
        %vm1306 = vcmp.ge.f32.partialorder %v1250, 0.0
        %vm1307 = vcmp.ge.f32.partialorder %v1251, 0.0
        %vm1308 = vcmp.ge.f32.partialorder %v1252, 0.0
        %vm1309 = vcmp.ge.f32.partialorder %v1253, 0.0
        %vm1310 = vcmp.ge.f32.partialorder %v1254, 0.0
        %vm1311 = vcmp.ge.f32.partialorder %v1255, 0.0
        %vm1312 = vcmp.ge.f32.partialorder %v1256, 0.0
        %vm1313 = vcmp.ge.f32.partialorder %v1257, 0.0
        %vm1314 = vcmp.ge.f32.partialorder %v1258, 0.0
        %vm1315 = vcmp.ge.f32.partialorder %v1259, 0.0
        %vm1316 = vcmp.ge.f32.partialorder %v1260, 0.0
        %vm1317 = vcmp.ge.f32.partialorder %v1261, 0.0
        %vm1318 = vcmp.ge.f32.partialorder %v1262, 0.0
        %vm1319 = vcmp.ge.f32.partialorder %v1263, 0.0
        %vm1320 = vcmp.ge.f32.partialorder %v1264, 0.0
        %vm1321 = vcmp.ge.f32.partialorder %v1265, 0.0
        %vm1322 = vcmp.ge.f32.partialorder %v1266, 0.0
        %vm1323 = vcmp.ge.f32.partialorder %v1267, 0.0
        %vm1324 = vcmp.ge.f32.partialorder %v1268, 0.0
        %vm1325 = vcmp.ge.f32.partialorder %v1269, 0.0
        %vm1326 = vcmp.ge.f32.partialorder %v1270, 0.0
        %vm1327 = vcmp.ge.f32.partialorder %v1271, 0.0
        %vm1328 = vcmp.ge.f32.partialorder %v1272, 0.0
        %vm1329 = vcmp.ge.f32.partialorder %v1273, 0.0
        %vm1330 = vcmp.ge.f32.partialorder %v1274, 0.0
        %vm1331 = vcmp.ge.f32.partialorder %v1275, 0.0
        %vm1332 = vcmp.ge.f32.partialorder %v1276, 0.0
        %vm1333 = vcmp.ge.f32.partialorder %v1277, 0.0
        %vm1334 = vcmp.ge.f32.partialorder %v1278, 0.0
        %vm1335 = vcmp.ge.f32.partialorder %v1279, 0.0
        %vm1336 = vcmp.ge.f32.partialorder %v1280, 0.0
        %vm1337 = vcmp.ge.f32.partialorder %v1281, 0.0
        %vm1338 = vcmp.ge.f32.partialorder %v1282, 0.0
        %vm1339 = vcmp.ge.f32.partialorder %v1283, 0.0
        %vm1340 = vcmp.ge.f32.partialorder %v1284, 0.0
        %vm1341 = vcmp.ge.f32.partialorder %v1285, 0.0
        %v1342 = vmul.f32 %v1230, 0.2
        %v1343 = vmul.f32 %v1231, 0.2
        %v1344 = vmul.f32 %v1232, 0.2
        %v1345 = vmul.f32 %v1233, 0.2
        %v1346 = vmul.f32 %v1234, 0.2
        %v1347 = vmul.f32 %v1235, 0.2
        %v1348 = vmul.f32 %v1236, 0.2
        %v1349 = vmul.f32 %v1237, 0.2
        %v1350 = vmul.f32 %v1238, 0.2
        %v1351 = vmul.f32 %v1239, 0.2
        %v1352 = vmul.f32 %v1240, 0.2
        %v1353 = vmul.f32 %v1241, 0.2
        %v1354 = vmul.f32 %v1242, 0.2
        %v1355 = vmul.f32 %v1243, 0.2
        %v1356 = vmul.f32 %v1244, 0.2
        %v1357 = vmul.f32 %v1245, 0.2
        %v1358 = vmul.f32 %v1246, 0.2
        %v1359 = vmul.f32 %v1247, 0.2
        %v1360 = vmul.f32 %v1248, 0.2
        %v1361 = vmul.f32 %v1249, 0.2
        %v1362 = vmul.f32 %v1250, 0.2
        %v1363 = vmul.f32 %v1251, 0.2
        %v1364 = vmul.f32 %v1252, 0.2
        %v1365 = vmul.f32 %v1253, 0.2
        %v1366 = vmul.f32 %v1254, 0.2
        %v1367 = vmul.f32 %v1255, 0.2
        %v1368 = vmul.f32 %v1256, 0.2
        %v1369 = vmul.f32 %v1257, 0.2
        %v1370 = vmul.f32 %v1258, 0.2
        %v1371 = vmul.f32 %v1259, 0.2
        %v1372 = vmul.f32 %v1260, 0.2
        %v1373 = vmul.f32 %v1261, 0.2
        %v1374 = vmul.f32 %v1262, 0.2
        %v1375 = vmul.f32 %v1263, 0.2
        %v1376 = vmul.f32 %v1264, 0.2
        %v1377 = vmul.f32 %v1265, 0.2
        %v1378 = vmul.f32 %v1266, 0.2
        %v1379 = vmul.f32 %v1267, 0.2
        %v1380 = vmul.f32 %v1268, 0.2
        %v1381 = vmul.f32 %v1269, 0.2
        %v1382 = vmul.f32 %v1270, 0.2
        %v1383 = vmul.f32 %v1271, 0.2
        %v1384 = vmul.f32 %v1272, 0.2
        %v1385 = vmul.f32 %v1273, 0.2
        %v1386 = vmul.f32 %v1274, 0.2
        %v1387 = vmul.f32 %v1275, 0.2
        %v1388 = vmul.f32 %v1276, 0.2
        %v1389 = vmul.f32 %v1277, 0.2
        %v1390 = vmul.f32 %v1278, 0.2
        %v1391 = vmul.f32 %v1279, 0.2
        %v1392 = vmul.f32 %v1280, 0.2
        %v1393 = vmul.f32 %v1281, 0.2
        %v1394 = vmul.f32 %v1282, 0.2
        %v1395 = vmul.f32 %v1283, 0.2
        %v1396 = vmul.f32 %v1284, 0.2
        %v1397 = vmul.f32 %v1285, 0.2
        %v1398 = vsel %vm1286, %v1230, %v1342
        %v1399 = vsel %vm1287, %v1231, %v1343
        %v1400 = vsel %vm1288, %v1232, %v1344
        %v1401 = vsel %vm1289, %v1233, %v1345
        %v1402 = vsel %vm1290, %v1234, %v1346
        %v1403 = vsel %vm1291, %v1235, %v1347
        %v1404 = vsel %vm1292, %v1236, %v1348
        %v1405 = vsel %vm1293, %v1237, %v1349
        %v1406 = vsel %vm1294, %v1238, %v1350
        %v1407 = vsel %vm1295, %v1239, %v1351
        %v1408 = vsel %vm1296, %v1240, %v1352
        %v1409 = vsel %vm1297, %v1241, %v1353
        %v1410 = vsel %vm1298, %v1242, %v1354
        %v1411 = vsel %vm1299, %v1243, %v1355
        %v1412 = vsel %vm1300, %v1244, %v1356
        %v1413 = vsel %vm1301, %v1245, %v1357
        %v1414 = vsel %vm1302, %v1246, %v1358
        %v1415 = vsel %vm1303, %v1247, %v1359
        %v1416 = vsel %vm1304, %v1248, %v1360
        %v1417 = vsel %vm1305, %v1249, %v1361
        %v1418 = vsel %vm1306, %v1250, %v1362
        %v1419 = vsel %vm1307, %v1251, %v1363
        %v1420 = vsel %vm1308, %v1252, %v1364
        %v1421 = vsel %vm1309, %v1253, %v1365
        %v1422 = vsel %vm1310, %v1254, %v1366
        %v1423 = vsel %vm1311, %v1255, %v1367
        %v1424 = vsel %vm1312, %v1256, %v1368
        %v1425 = vsel %vm1313, %v1257, %v1369
        %v1426 = vsel %vm1314, %v1258, %v1370
        %v1427 = vsel %vm1315, %v1259, %v1371
        %v1428 = vsel %vm1316, %v1260, %v1372
        %v1429 = vsel %vm1317, %v1261, %v1373
        %v1430 = vsel %vm1318, %v1262, %v1374
        %v1431 = vsel %vm1319, %v1263, %v1375
        %v1432 = vsel %vm1320, %v1264, %v1376
        %v1433 = vsel %vm1321, %v1265, %v1377
        %v1434 = vsel %vm1322, %v1266, %v1378
        %v1435 = vsel %vm1323, %v1267, %v1379
        %v1436 = vsel %vm1324, %v1268, %v1380
        %v1437 = vsel %vm1325, %v1269, %v1381
        %v1438 = vsel %vm1326, %v1270, %v1382
        %v1439 = vsel %vm1327, %v1271, %v1383
        %v1440 = vsel %vm1328, %v1272, %v1384
        %v1441 = vsel %vm1329, %v1273, %v1385
        %v1442 = vsel %vm1330, %v1274, %v1386
        %v1443 = vsel %vm1331, %v1275, %v1387
        %v1444 = vsel %vm1332, %v1276, %v1388
        %v1445 = vsel %vm1333, %v1277, %v1389
        %v1446 = vsel %vm1334, %v1278, %v1390
        %v1447 = vsel %vm1335, %v1279, %v1391
        %v1448 = vsel %vm1336, %v1280, %v1392
        %v1449 = vsel %vm1337, %v1281, %v1393
        %v1450 = vsel %vm1338, %v1282, %v1394
        %v1451 = vsel %vm1339, %v1283, %v1395
        %v1452 = vsel %vm1340, %v1284, %v1396
        %v1453 = vsel %vm1341, %v1285, %v1397
        %v1454 = vpack.c.bf16 %v1399, %v1398
        %v1455 = vpack.c.bf16 %v1401, %v1400
        %v1456 = vpack.c.bf16 %v1403, %v1402
        %v1457 = vpack.c.bf16 %v1405, %v1404
        %v1458 = vpack.c.bf16 %v1407, %v1406
        %v1459 = vpack.c.bf16 %v1409, %v1408
        %v1460 = vpack.c.bf16 %v1411, %v1410
        %v1461 = vpack.c.bf16 %v1413, %v1412
        %v1462 = vpack.c.bf16 %v1415, %v1414
        %v1463 = vpack.c.bf16 %v1417, %v1416
        %v1464 = vpack.c.bf16 %v1419, %v1418
        %v1465 = vpack.c.bf16 %v1421, %v1420
        %v1466 = vpack.c.bf16 %v1423, %v1422
        %v1467 = vpack.c.bf16 %v1425, %v1424
        %v1468 = vpack.c.bf16 %v1427, %v1426
        %v1469 = vpack.c.bf16 %v1429, %v1428
        %v1470 = vpack.c.bf16 %v1431, %v1430
        %v1471 = vpack.c.bf16 %v1433, %v1432
        %v1472 = vpack.c.bf16 %v1435, %v1434
        %v1473 = vpack.c.bf16 %v1437, %v1436
        %v1474 = vpack.c.bf16 %v1439, %v1438
        %v1475 = vpack.c.bf16 %v1441, %v1440
        %v1476 = vpack.c.bf16 %v1443, %v1442
        %v1477 = vpack.c.bf16 %v1445, %v1444
        %v1478 = vpack.c.bf16 %v1447, %v1446
        %v1479 = vpack.c.bf16 %v1449, %v1448
        %v1480 = vpack.c.bf16 %v1451, %v1450
        %v1481 = vpack.c.bf16 %v1453, %v1452
        %v1510 = vunpack.c.l.b16 %v1454
        %v1511 = vunpack.c.h.b16 %v1454
        %v1512 = vunpack.c.l.b16 %v1455
        %v1513 = vunpack.c.h.b16 %v1455
        %v1514 = vunpack.c.l.b16 %v1456
        %v1515 = vunpack.c.h.b16 %v1456
        %v1516 = vunpack.c.l.b16 %v1457
        %v1517 = vunpack.c.h.b16 %v1457
        %v1518 = vunpack.c.l.b16 %v1458
        %v1519 = vunpack.c.h.b16 %v1458
        %v1520 = vunpack.c.l.b16 %v1459
        %v1521 = vunpack.c.h.b16 %v1459
        %v1522 = vunpack.c.l.b16 %v1460
        %v1523 = vunpack.c.h.b16 %v1460
        %v1524 = vunpack.c.l.b16 %v1461
        %v1525 = vunpack.c.h.b16 %v1461
        %v1526 = vunpack.c.l.b16 %v1462
        %v1527 = vunpack.c.h.b16 %v1462
        %v1528 = vunpack.c.l.b16 %v1463
        %v1529 = vunpack.c.h.b16 %v1463
        %v1530 = vunpack.c.l.b16 %v1464
        %v1531 = vunpack.c.h.b16 %v1464
        %v1532 = vunpack.c.l.b16 %v1465
        %v1533 = vunpack.c.h.b16 %v1465
        %v1534 = vunpack.c.l.b16 %v1466
        %v1535 = vunpack.c.h.b16 %v1466
        %v1536 = vunpack.c.l.b16 %v1467
        %v1537 = vunpack.c.h.b16 %v1467
        %v1538 = vunpack.c.l.b16 %v1468
        %v1539 = vunpack.c.h.b16 %v1468
        %v1540 = vunpack.c.l.b16 %v1469
        %v1541 = vunpack.c.h.b16 %v1469
        %v1542 = vunpack.c.l.b16 %v1470
        %v1543 = vunpack.c.h.b16 %v1470
        %v1544 = vunpack.c.l.b16 %v1471
        %v1545 = vunpack.c.h.b16 %v1471
        %v1546 = vunpack.c.l.b16 %v1472
        %v1547 = vunpack.c.h.b16 %v1472
        %v1548 = vunpack.c.l.b16 %v1473
        %v1549 = vunpack.c.h.b16 %v1473
        %v1550 = vunpack.c.l.b16 %v1474
        %v1551 = vunpack.c.h.b16 %v1474
        %v1552 = vunpack.c.l.b16 %v1475
        %v1553 = vunpack.c.h.b16 %v1475
        %v1554 = vunpack.c.l.b16 %v1476
        %v1555 = vunpack.c.h.b16 %v1476
        %v1556 = vunpack.c.l.b16 %v1477
        %v1557 = vunpack.c.h.b16 %v1477
        %v1558 = vunpack.c.l.b16 %v1478
        %v1559 = vunpack.c.h.b16 %v1478
        %v1560 = vunpack.c.l.b16 %v1479
        %v1561 = vunpack.c.h.b16 %v1479
        %v1562 = vunpack.c.l.b16 %v1480
        %v1563 = vunpack.c.h.b16 %v1480
        %v1564 = vunpack.c.l.b16 %v1481
        %v1565 = vunpack.c.h.b16 %v1481
        %v1566 = vpack.c.b16 %v1510, %v1510
        %v1567 = vpack.c.b16 %v1511, %v1511
        %v1568 = vpack.c.b16 %v1512, %v1512
        %v1569 = vpack.c.b16 %v1513, %v1513
        %v1570 = vpack.c.b16 %v1514, %v1514
        %v1571 = vpack.c.b16 %v1515, %v1515
        %v1572 = vpack.c.b16 %v1516, %v1516
        %v1573 = vpack.c.b16 %v1517, %v1517
        %v1574 = vpack.c.b16 %v1518, %v1518
        %v1575 = vpack.c.b16 %v1519, %v1519
        %v1576 = vpack.c.b16 %v1520, %v1520
        %v1577 = vpack.c.b16 %v1521, %v1521
        %v1578 = vpack.c.b16 %v1522, %v1522
        %v1579 = vpack.c.b16 %v1523, %v1523
        %v1580 = vpack.c.b16 %v1524, %v1524
        %v1581 = vpack.c.b16 %v1525, %v1525
        %v1582 = vpack.c.b16 %v1526, %v1526
        %v1583 = vpack.c.b16 %v1527, %v1527
        %v1584 = vpack.c.b16 %v1528, %v1528
        %v1585 = vpack.c.b16 %v1529, %v1529
        %v1586 = vpack.c.b16 %v1530, %v1530
        %v1587 = vpack.c.b16 %v1531, %v1531
        %v1588 = vpack.c.b16 %v1532, %v1532
        %v1589 = vpack.c.b16 %v1533, %v1533
        %v1590 = vpack.c.b16 %v1534, %v1534
        %v1591 = vpack.c.b16 %v1535, %v1535
        %v1592 = vpack.c.b16 %v1536, %v1536
        %v1593 = vpack.c.b16 %v1537, %v1537
        %v1594 = vpack.c.b16 %v1538, %v1538
        %v1595 = vpack.c.b16 %v1539, %v1539
        %v1596 = vpack.c.b16 %v1540, %v1540
        %v1597 = vpack.c.b16 %v1541, %v1541
        %v1598 = vpack.c.b16 %v1542, %v1542
        %v1599 = vpack.c.b16 %v1543, %v1543
        %v1600 = vpack.c.b16 %v1544, %v1544
        %v1601 = vpack.c.b16 %v1545, %v1545
        %v1602 = vpack.c.b16 %v1546, %v1546
        %v1603 = vpack.c.b16 %v1547, %v1547
        %v1604 = vpack.c.b16 %v1548, %v1548
        %v1605 = vpack.c.b16 %v1549, %v1549
        %v1606 = vpack.c.b16 %v1550, %v1550
        %v1607 = vpack.c.b16 %v1551, %v1551
        %v1608 = vpack.c.b16 %v1552, %v1552
        %v1609 = vpack.c.b16 %v1553, %v1553
        %v1610 = vpack.c.b16 %v1554, %v1554
        %v1611 = vpack.c.b16 %v1555, %v1555
        %v1612 = vpack.c.b16 %v1556, %v1556
        %v1613 = vpack.c.b16 %v1557, %v1557
        %v1614 = vpack.c.b16 %v1558, %v1558
        %v1615 = vpack.c.b16 %v1559, %v1559
        %v1616 = vpack.c.b16 %v1560, %v1560
        %v1617 = vpack.c.b16 %v1561, %v1561
        %v1618 = vpack.c.b16 %v1562, %v1562
        %v1619 = vpack.c.b16 %v1563, %v1563
        %v1620 = vpack.c.b16 %v1564, %v1564
        %v1621 = vpack.c.b16 %v1565, %v1565
        %1678 = vst [vmem:[%s218] sm:$0xf] %v1566
        %1679 = vst [vmem:[%s218 + $0x4] sm:$0xf] %v1567
        %1680 = vst [vmem:[%s218 + $0x8] sm:$0xf] %v1568
        %1681 = vst [vmem:[%s218 + $0xc] sm:$0xf] %v1569
        %1682 = vst [vmem:[%s218 + $0x10] sm:$0xf] %v1570
        %1683 = vst [vmem:[%s218 + $0x14] sm:$0xf] %v1571
        %1684 = vst [vmem:[%s218 + $0x18] sm:$0xf] %v1572
        %1685 = vst [vmem:[%s218 + $0x1c] sm:$0xf] %v1573
        %1686 = vst [vmem:[%s218 + $0x20] sm:$0xf] %v1574
        %1687 = vst [vmem:[%s218 + $0x24] sm:$0xf] %v1575
        %1688 = vst [vmem:[%s218 + $0x28] sm:$0xf] %v1576
        %1689 = vst [vmem:[%s218 + $0x2c] sm:$0xf] %v1577
        %1690 = vst [vmem:[%s218 + $0x30] sm:$0xf] %v1578
        %1691 = vst [vmem:[%s218 + $0x34] sm:$0xf] %v1579
        %1692 = vst [vmem:[%s218 + $0x38] sm:$0xf] %v1580
        %1693 = vst [vmem:[%s218 + $0x3c] sm:$0xf] %v1581
        %1694 = vst [vmem:[%s218 + $0x40] sm:$0xf] %v1582
        %1695 = vst [vmem:[%s218 + $0x44] sm:$0xf] %v1583
        %1696 = vst [vmem:[%s218 + $0x48] sm:$0xf] %v1584
        %1697 = vst [vmem:[%s218 + $0x4c] sm:$0xf] %v1585
        %1698 = vst [vmem:[%s218 + $0x50] sm:$0xf] %v1586
        %1699 = vst [vmem:[%s218 + $0x54] sm:$0xf] %v1587
        %1700 = vst [vmem:[%s218 + $0x58] sm:$0xf] %v1588
        %1701 = vst [vmem:[%s218 + $0x5c] sm:$0xf] %v1589
        %1702 = vst [vmem:[%s218 + $0x60] sm:$0xf] %v1590
        %1703 = vst [vmem:[%s218 + $0x64] sm:$0xf] %v1591
        %1704 = vst [vmem:[%s218 + $0x68] sm:$0xf] %v1592
        %1705 = vst [vmem:[%s218 + $0x6c] sm:$0xf] %v1593
        %1706 = vst [vmem:[%s218 + $0x70] sm:$0xf] %v1594
        %1707 = vst [vmem:[%s218 + $0x74] sm:$0xf] %v1595
        %1708 = vst [vmem:[%s218 + $0x78] sm:$0xf] %v1596
        %1709 = vst [vmem:[%s218 + $0x7c] sm:$0xf] %v1597
        %1710 = vst [vmem:[%s218 + $0x80] sm:$0xf] %v1598
        %1711 = vst [vmem:[%s218 + $0x84] sm:$0xf] %v1599
        %1712 = vst [vmem:[%s218 + $0x88] sm:$0xf] %v1600
        %1713 = vst [vmem:[%s218 + $0x8c] sm:$0xf] %v1601
        %1714 = vst [vmem:[%s218 + $0x90] sm:$0xf] %v1602
        %1715 = vst [vmem:[%s218 + $0x94] sm:$0xf] %v1603
        %1716 = vst [vmem:[%s218 + $0x98] sm:$0xf] %v1604
        %1717 = vst [vmem:[%s218 + $0x9c] sm:$0xf] %v1605
        %1718 = vst [vmem:[%s218 + $0xa0] sm:$0xf] %v1606
        %1719 = vst [vmem:[%s218 + $0xa4] sm:$0xf] %v1607
        %1720 = vst [vmem:[%s218 + $0xa8] sm:$0xf] %v1608
        %1721 = vst [vmem:[%s218 + $0xac] sm:$0xf] %v1609
        %1722 = vst [vmem:[%s218 + $0xb0] sm:$0xf] %v1610
        %1723 = vst [vmem:[%s218 + $0xb4] sm:$0xf] %v1611
        %1724 = vst [vmem:[%s218 + $0xb8] sm:$0xf] %v1612
        %1725 = vst [vmem:[%s218 + $0xbc] sm:$0xf] %v1613
        %1726 = vst [vmem:[%s218 + $0xc0] sm:$0xf] %v1614
        %1727 = vst [vmem:[%s218 + $0xc4] sm:$0xf] %v1615
        %1728 = vst [vmem:[%s218 + $0xc8] sm:$0xf] %v1616
        %1729 = vst [vmem:[%s218 + $0xcc] sm:$0xf] %v1617
        %1730 = vst [vmem:[%s218 + $0xd0] sm:$0xf] %v1618
        %1731 = vst [vmem:[%s218 + $0xd4] sm:$0xf] %v1619
        %1732 = vst [vmem:[%s218 + $0xd8] sm:$0xf] %v1620
        %1733 = vst [vmem:[%s218 + $0xdc] sm:$0xf] %v1621
      $region52: #{classifier_forward.5} parent=35 // pred_fallthru
        _
      %s1734 = smul.u32 %s20, %s19
      %s1735 = smul.u32 56, %s1734
      %p1736 = scmp.lt.s32.totalorder %s1735, 55
      %s1737 = scalar_select %p1736, %s1735, 55
      %s1738 = smul.addr %s1737, 4
      %s1739 = scalar_lea.vmem %s4, %s1738
      // Predicated region
      $region53: #{classifier_forward.5} parent=35 // pred_check
        %p1740 = pneg %p136
      $region54: #{classifier_forward.5} parent=35 // pred_check_branch
        %1742 = sbr.rel (%p1740) target = $region56
      $region55: #{classifier_forward.5} parent=35 // pred_region
        %s1743 = smul.u32 %s20, %s19
        %s1744 = smul.u32 56, %s1743
      $region56: #{classifier_forward.5} parent=35 // pred_fallthru
        _
    $region36: #{classifier_forward.5} parent=5 // pred_fallthru
      _
    %p1745 = scmp.le.s32.totalorder 2, %s10
    // Predicated region
    $region57: #{classifier_forward.5} parent=5 // pred_check
      %p1746 = pneg %p1745
    $region58: #{classifier_forward.5} parent=5 // pred_check_branch
      %1748 = sbr.rel (%p1746) target = $region60
    $region59: #{classifier_forward.5} parent=5 // pred_region
      %s1749 = ssub.s32 %s10, 2
      // Predicated region
      $region61: #{classifier_forward.5} parent=59 // pred_check
        %p1750 = pneg %p142
      $region62: #{classifier_forward.5} parent=59 // pred_check_branch
        %1752 = sbr.rel (%p1750) target = $region64
      $region63: #{classifier_forward.5} parent=59 // pred_region
        %s1753 = smul.u32 %s22, %s21
        %s1754 = smul.u32 56, %s1753
        %p1755 = scmp.lt.s32.totalorder %s1754, 55
        %s1756 = scalar_select %p1755, %s1754, 55
        %s1757 = smul.addr %s1756, 4
        %s1758 = scalar_lea.vmem %s4, %s1757
      $region64: #{classifier_forward.5} parent=59 // pred_fallthru
        _
    $region60: #{classifier_forward.5} parent=5 // pred_fallthru
      _
  $region6: #{classifier_forward.5} parent=0 // loop_footer
    %s14 = sadd.s32 1, %s10
  $region7: #{classifier_forward.5} parent=0 // loop_footer_branch
    %9 = sbr.rel target = $region3
  $region8: #{classifier_forward.5} parent=0 // loop_exit
    _

// kernel: classifier_forward.6
$region0: #{classifier_forward.6}
  #allocation0 [shape = 'u32[]', space=smem, size = 0x4, offset = 0x4, fixed_abs, tag = 'smem constant byte address 0x4 - core index']
  #allocation1 [shape = 'u32[144,128]{1,0:T(1,128)}', space=vmem, size = 0x12000, scoped, tag = 'internal scratch']
  #allocation2 [shape = 'f32[1,128]{1,0:T(1,128)}', space=vmem, size = 0x200, scoped, tag = 'scratch operand']
  #allocation3 [shape = 'f32[1,128]{1,0:T(1,128)}', space=vmem, size = 0x200, scoped, tag = 'scratch operand']
  #allocation4 [shape = 'f32[1,128]{1,0:T(1,128)}', space=vmem, size = 0x200, scoped, tag = 'scratch operand']
  #allocation5 [shape = 'f32[1,128]{1,0:T(1,128)}', space=vmem, size = 0x200, scoped, tag = 'scratch operand']
  %s0 = inlined_call_operand.vmem [shape: bf16[64,512], index: 0, kind: input, shape index: {}]
  %s1 = inlined_call_operand.vmem [shape: bf16[512,128], index: 1, kind: input, shape index: {}]
  %s2 = inlined_call_operand.vmem [shape: f32[1,128], index: 2, kind: input, shape index: {}]
  %s3 = inlined_call_operand.vmem [shape: f32[1,128], index: 3, kind: input, shape index: {}]
  %s4 = inlined_call_operand.vmem [shape: bf16[64,128], index: 4, kind: output, shape index: {}]
  %s5 = sld [smem:[#allocation0]]
  $region65: #{classifier_forward.6} parent=0
    _
  %s7 = ssub.s32 1, %s5
  %s8 = scalar_select 0, %s7, %s5
  loop: start=0, step=1, limit=4
  $region2: #{classifier_forward.6} parent=0 // loop_pre_header
    _
  $region3: #{classifier_forward.6} parent=0 // loop_header
    %s10 = sphi 0, %s14
    %p11 = scmp.ge.s32.totalorder %s10, 4
    %s17 = sphi 0, %s29
    %s18 = sphi 0, %s25
    %s19 = sphi 0, %s17
    %s20 = sphi 0, %s18
    %s21 = sphi 0, %s19
    %s22 = sphi 0, %s20
    %s32 = sphi 0, %s34
    %s35 = sphi 0, %s32
    %s36 = sphi 0, %s35
    %s52 = sphi 0, %s36
    %s56 = sphi 0, %s56
    %s58 = sphi 0, %s56
    %s59 = sphi 0, %s58
    %s73 = sphi 0, %s59
    %s77 = sphi 0, %s77
    %s79 = sphi 0, %s77
    %s80 = sphi 0, %s79
    %s94 = sphi 0, %s80
    %s98 = sphi 0, %s98
    %s100 = sphi 0, %s98
    %s101 = sphi 0, %s100
    %s115 = sphi 0, %s101
    %s123 = sphi 0, %s125
    %s126 = sphi 0, %s123
    %s127 = sphi 0, %s126
    %s143 = sphi 0, %s127
  $region4: #{classifier_forward.6} parent=0 // loop_header_branch
    %13 = sbr.rel (%p11) target = $region8
  $region5: #{classifier_forward.6} parent=0 // loop_body
    %s15 = ssub.s32 %s10, 1
    %s16 = ssub.s32 %s10, 2
    %s23 = sadd.s32 1, %s18
    %p24 = scmp.ge.s32.totalorder %s23, 1
    %s25 = scalar_select %p24, 0, %s23
    %s26 = sadd.s32 1, %s17
    %s27 = scalar_select %p24, %s26, %s17
    %p28 = scmp.ge.s32.totalorder %s27, 2
    %s29 = scalar_select %p28, 0, %s27
    %s30 = ssub.s32 %s18, %s25
    %p31 = scmp.eq.s32.totalorder %s30, 0
    %s33 = sadd.s32 %s32, 1
    %s34 = scalar_select %p31, %s32, %s33
    %p37 = pneg %p31
    %p38 = scmp.eq.s32.totalorder %s10, 1
    %p39 = por %p37, %p38
    %p40 = scmp.ne.s32.totalorder %s32, %s35
    %p41 = scmp.eq.s32.totalorder %s10, 0
    %p42 = por %p40, %p41
    %p43 = scmp.ne.s32.totalorder %s32, %s35
    %p44 = scmp.eq.s32.totalorder %s15, 1
    %p45 = por %p43, %p44
    %p46 = scmp.ne.s32.totalorder %s35, %s36
    %p47 = scmp.eq.s32.totalorder %s15, 0
    %p48 = por %p46, %p47
    %p49 = scmp.ne.s32.totalorder %s35, %s36
    %p50 = scmp.eq.s32.totalorder %s16, 1
    %p51 = por %p49, %p50
    %p53 = scmp.ne.s32.totalorder %s36, %s52
    %p54 = scmp.eq.s32.totalorder %s16, 0
    %p55 = por %p53, %p54
    %s57 = sadd.s32 %s56, 1
    %p60 = scmp.eq.s32.totalorder %s10, 1
    %p61 = scmp.ne.s32.totalorder %s56, %s58
    %p62 = scmp.eq.s32.totalorder %s10, 0
    %p63 = por %p61, %p62
    %p64 = scmp.ne.s32.totalorder %s56, %s58
    %p65 = scmp.eq.s32.totalorder %s15, 1
    %p66 = por %p64, %p65
    %p67 = scmp.ne.s32.totalorder %s58, %s59
    %p68 = scmp.eq.s32.totalorder %s15, 0
    %p69 = por %p67, %p68
    %p70 = scmp.ne.s32.totalorder %s58, %s59
    %p71 = scmp.eq.s32.totalorder %s16, 1
    %p72 = por %p70, %p71
    %p74 = scmp.ne.s32.totalorder %s59, %s73
    %p75 = scmp.eq.s32.totalorder %s16, 0
    %p76 = por %p74, %p75
    %s78 = sadd.s32 %s77, 1
    %p81 = scmp.eq.s32.totalorder %s10, 1
    %p82 = scmp.ne.s32.totalorder %s77, %s79
    %p83 = scmp.eq.s32.totalorder %s10, 0
    %p84 = por %p82, %p83
    %p85 = scmp.ne.s32.totalorder %s77, %s79
    %p86 = scmp.eq.s32.totalorder %s15, 1
    %p87 = por %p85, %p86
    %p88 = scmp.ne.s32.totalorder %s79, %s80
    %p89 = scmp.eq.s32.totalorder %s15, 0
    %p90 = por %p88, %p89
    %p91 = scmp.ne.s32.totalorder %s79, %s80
    %p92 = scmp.eq.s32.totalorder %s16, 1
    %p93 = por %p91, %p92
    %p95 = scmp.ne.s32.totalorder %s80, %s94
    %p96 = scmp.eq.s32.totalorder %s16, 0
    %p97 = por %p95, %p96
    %s99 = sadd.s32 %s98, 1
    %p102 = scmp.eq.s32.totalorder %s10, 1
    %p103 = scmp.ne.s32.totalorder %s98, %s100
    %p104 = scmp.eq.s32.totalorder %s10, 0
    %p105 = por %p103, %p104
    %p106 = scmp.ne.s32.totalorder %s98, %s100
    %p107 = scmp.eq.s32.totalorder %s15, 1
    %p108 = por %p106, %p107
    %p109 = scmp.ne.s32.totalorder %s100, %s101
    %p110 = scmp.eq.s32.totalorder %s15, 0
    %p111 = por %p109, %p110
    %p112 = scmp.ne.s32.totalorder %s100, %s101
    %p113 = scmp.eq.s32.totalorder %s16, 1
    %p114 = por %p112, %p113
    %p116 = scmp.ne.s32.totalorder %s101, %s115
    %p117 = scmp.eq.s32.totalorder %s16, 0
    %p118 = por %p116, %p117
    %s119 = smul.u32 %s18, %s17
    %s120 = smul.u32 %s25, %s29
    %s121 = ssub.s32 %s119, %s120
    %p122 = scmp.eq.s32.totalorder %s121, 0
    %s124 = sadd.s32 %s123, 1
    %s125 = scalar_select %p122, %s123, %s124
    %p128 = pneg %p122
    %p129 = scmp.eq.s32.totalorder %s10, 1
    %p130 = por %p128, %p129
    %p131 = scmp.ne.s32.totalorder %s123, %s126
    %p132 = scmp.eq.s32.totalorder %s10, 0
    %p133 = por %p131, %p132
    %p134 = scmp.ne.s32.totalorder %s123, %s126
    %p135 = scmp.eq.s32.totalorder %s15, 1
    %p136 = por %p134, %p135
    %p137 = scmp.ne.s32.totalorder %s126, %s127
    %p138 = scmp.eq.s32.totalorder %s15, 0
    %p139 = por %p137, %p138
    %p140 = scmp.ne.s32.totalorder %s126, %s127
    %p141 = scmp.eq.s32.totalorder %s16, 1
    %p142 = por %p140, %p141
    %p144 = scmp.ne.s32.totalorder %s127, %s143
    %p145 = scmp.eq.s32.totalorder %s16, 0
    %p146 = por %p144, %p145
    %p147 = scmp.le.s32.totalorder 1, %s10
    %p148 = scmp.lt.s32.totalorder %s10, 3
    %p149 = pnand %p147, %p148
    %p150 = pneg %p149
    // Predicated region
    $region9: #{classifier_forward.6} parent=5 // pred_check
      _
    $region10: #{classifier_forward.6} parent=5 // pred_check_branch
      %152 = sbr.rel (%p149) target = $region12
    $region11: #{classifier_forward.6} parent=5 // pred_region
      %s153 = ssub.s32 %s10, 1
      // Predicated region
      $region13: #{classifier_forward.6} parent=11 // pred_check
        %p154 = pneg %p48
      $region14: #{classifier_forward.6} parent=11 // pred_check_branch
        %156 = sbr.rel (%p154) target = $region16
      $region15: #{classifier_forward.6} parent=11 // pred_region
        %s157 = smul.u32 8, %s20
        %p158 = scmp.lt.s32.totalorder %s157, 7
        %s159 = scalar_select %p158, %s157, 7
        %s160 = smul.addr %s159, 4
        %s161 = smul.addr %s160, 4
        %s162 = scalar_lea.vmem %s0, %s161
        %s163 = smul.u32 8, %s20
      $region16: #{classifier_forward.6} parent=11 // pred_fallthru
        _
      // Predicated region
      $region17: #{classifier_forward.6} parent=11 // pred_check
        %p164 = pneg %p69
      $region18: #{classifier_forward.6} parent=11 // pred_check_branch
        %166 = sbr.rel (%p164) target = $region20
      $region19: #{classifier_forward.6} parent=11 // pred_region
        _
      $region20: #{classifier_forward.6} parent=11 // pred_fallthru
        _
      // Predicated region
      $region21: #{classifier_forward.6} parent=11 // pred_check
        %p167 = pneg %p90
      $region22: #{classifier_forward.6} parent=11 // pred_check_branch
        %169 = sbr.rel (%p167) target = $region24
      $region23: #{classifier_forward.6} parent=11 // pred_region
        _
      $region24: #{classifier_forward.6} parent=11 // pred_fallthru
        _
      // Predicated region
      $region25: #{classifier_forward.6} parent=11 // pred_check
        %p170 = pneg %p111
      $region26: #{classifier_forward.6} parent=11 // pred_check_branch
        %172 = sbr.rel (%p170) target = $region28
      $region27: #{classifier_forward.6} parent=11 // pred_region
        _
      $region28: #{classifier_forward.6} parent=11 // pred_fallthru
        _
    $region12: #{classifier_forward.6} parent=5 // pred_fallthru
      _
    %p173 = scmp.lt.s32.totalorder %s10, 2
    // Predicated region
    $region29: #{classifier_forward.6} parent=5 // pred_check
      %p174 = pneg %p173
    $region30: #{classifier_forward.6} parent=5 // pred_check_branch
      %176 = sbr.rel (%p174) target = $region32
    $region31: #{classifier_forward.6} parent=5 // pred_region
      _
    $region32: #{classifier_forward.6} parent=5 // pred_fallthru
      _
    %p177 = scmp.le.s32.totalorder 1, %s10
    %p178 = scmp.lt.s32.totalorder %s10, 3
    %p179 = pnand %p177, %p178
    %p180 = pneg %p179
    // Predicated region
    $region33: #{classifier_forward.6} parent=5 // pred_check
      _
    $region34: #{classifier_forward.6} parent=5 // pred_check_branch
      %182 = sbr.rel (%p179) target = $region36
    $region35: #{classifier_forward.6} parent=5 // pred_region
      %s183 = ssub.s32 %s10, 1
      %s184 = smul.u32 8, %s20
      %p185 = scmp.lt.s32.totalorder %s184, 7
      %s186 = scalar_select %p185, %s184, 7
      %s187 = smul.addr %s186, 4
      %s188 = smul.addr %s187, 4
      %s189 = scalar_lea.vmem %s0, %s188
      %p190 = pneg %p48
      %p191 = pneg %p45
      %p192 = pneg %p69
      %p193 = pneg %p66
      %p194 = pneg %p90
      %p195 = pneg %p87
      %p196 = pneg %p111
      %p197 = pneg %p108
      %p198 = pneg %p139
      %p199 = pneg %p136
      %s200 = smul.u32 %s20, %s19
      %s201 = smul.u32 8, %s200
      %p202 = scmp.lt.s32.totalorder %s201, 7
      %s203 = scalar_select %p202, %s201, 7
      %s204 = smul.addr %s203, 4
      %s205 = scalar_lea.vmem %s4, %s204
      %s206 = smul.u32 8, %s20
      %p207 = scmp.lt.s32.totalorder %s206, 7
      %s208 = scalar_select %p207, %s206, 7
      %s209 = smul.addr %s208, 4
      %s210 = smul.addr %s209, 4
      %s211 = scalar_lea.vmem %s0, %s210
      %s212 = smul.u32 8, %s20
      %s213 = smul.u32 %s20, %s19
      %s214 = smul.u32 8, %s213
      %p215 = scmp.lt.s32.totalorder %s214, 7
      %s216 = scalar_select %p215, %s214, 7
      %s217 = smul.addr %s216, 4
      %s218 = scalar_lea.vmem %s4, %s217
      %s219 = smul.u32 %s20, %s19
      %s220 = smul.u32 8, %s219
      %v222 = vld [vmem:[%s211] sm:$0xff]
      %v223 = vld [vmem:[%s211 + $0x8] sm:$0xff]
      %v224 = vld [vmem:[%s211 + $0x10] sm:$0xff]
      %v225 = vld [vmem:[%s211 + $0x18] sm:$0xff]
      %v226 = vld [vmem:[%s211 + $0x20] sm:$0xff]
      %v227 = vld [vmem:[%s211 + $0x28] sm:$0xff]
      %v228 = vld [vmem:[%s211 + $0x30] sm:$0xff]
      %v229 = vld [vmem:[%s211 + $0x38] sm:$0xff]
      %v230 = vld [vmem:[%s211 + $0x40] sm:$0xff]
      %v231 = vld [vmem:[%s211 + $0x48] sm:$0xff]
      %v232 = vld [vmem:[%s211 + $0x50] sm:$0xff]
      %v233 = vld [vmem:[%s211 + $0x58] sm:$0xff]
      %v234 = vld [vmem:[%s211 + $0x60] sm:$0xff]
      %v235 = vld [vmem:[%s211 + $0x68] sm:$0xff]
      %v236 = vld [vmem:[%s211 + $0x70] sm:$0xff]
      %v237 = vld [vmem:[%s211 + $0x78] sm:$0xff]
      %v238 = vld [vmem:[%s1] sm:$0xf]
      %v239 = vld [vmem:[%s1 + $0x4] sm:$0xf]
      %v240 = vld [vmem:[%s1 + $0x8] sm:$0xf]
      %v241 = vld [vmem:[%s1 + $0xc] sm:$0xf]
      %v242 = vld [vmem:[%s1 + $0x10] sm:$0xf]
      %v243 = vld [vmem:[%s1 + $0x14] sm:$0xf]
      %v244 = vld [vmem:[%s1 + $0x18] sm:$0xf]
      %v245 = vld [vmem:[%s1 + $0x1c] sm:$0xf]
      %v246 = vld [vmem:[%s1 + $0x20] sm:$0xf]
      %v247 = vld [vmem:[%s1 + $0x24] sm:$0xf]
      %v248 = vld [vmem:[%s1 + $0x28] sm:$0xf]
      %v249 = vld [vmem:[%s1 + $0x2c] sm:$0xf]
      %v250 = vld [vmem:[%s1 + $0x30] sm:$0xf]
      %v251 = vld [vmem:[%s1 + $0x34] sm:$0xf]
      %v252 = vld [vmem:[%s1 + $0x38] sm:$0xf]
      %v253 = vld [vmem:[%s1 + $0x3c] sm:$0xf]
      %v254 = vld [vmem:[%s1 + $0x40] sm:$0xf]
      %v255 = vld [vmem:[%s1 + $0x44] sm:$0xf]
      %v256 = vld [vmem:[%s1 + $0x48] sm:$0xf]
      %v257 = vld [vmem:[%s1 + $0x4c] sm:$0xf]
      %v258 = vld [vmem:[%s1 + $0x50] sm:$0xf]
      %v259 = vld [vmem:[%s1 + $0x54] sm:$0xf]
      %v260 = vld [vmem:[%s1 + $0x58] sm:$0xf]
      %v261 = vld [vmem:[%s1 + $0x5c] sm:$0xf]
      %v262 = vld [vmem:[%s1 + $0x60] sm:$0xf]
      %v263 = vld [vmem:[%s1 + $0x64] sm:$0xf]
      %v264 = vld [vmem:[%s1 + $0x68] sm:$0xf]
      %v265 = vld [vmem:[%s1 + $0x6c] sm:$0xf]
      %v266 = vld [vmem:[%s1 + $0x70] sm:$0xf]
      %v267 = vld [vmem:[%s1 + $0x74] sm:$0xf]
      %v268 = vld [vmem:[%s1 + $0x78] sm:$0xf]
      %v269 = vld [vmem:[%s1 + $0x7c] sm:$0xf]
      %v270 = vld [vmem:[%s1 + $0x80] sm:$0xf]
      %v271 = vld [vmem:[%s1 + $0x84] sm:$0xf]
      %v272 = vld [vmem:[%s1 + $0x88] sm:$0xf]
      %v273 = vld [vmem:[%s1 + $0x8c] sm:$0xf]
      %v274 = vld [vmem:[%s1 + $0x90] sm:$0xf]
      %v275 = vld [vmem:[%s1 + $0x94] sm:$0xf]
      %v276 = vld [vmem:[%s1 + $0x98] sm:$0xf]
      %v277 = vld [vmem:[%s1 + $0x9c] sm:$0xf]
      %v278 = vld [vmem:[%s1 + $0xa0] sm:$0xf]
      %v279 = vld [vmem:[%s1 + $0xa4] sm:$0xf]
      %v280 = vld [vmem:[%s1 + $0xa8] sm:$0xf]
      %v281 = vld [vmem:[%s1 + $0xac] sm:$0xf]
      %v282 = vld [vmem:[%s1 + $0xb0] sm:$0xf]
      %v283 = vld [vmem:[%s1 + $0xb4] sm:$0xf]
      %v284 = vld [vmem:[%s1 + $0xb8] sm:$0xf]
      %v285 = vld [vmem:[%s1 + $0xbc] sm:$0xf]
      %v286 = vld [vmem:[%s1 + $0xc0] sm:$0xf]
      %v287 = vld [vmem:[%s1 + $0xc4] sm:$0xf]
      %v288 = vld [vmem:[%s1 + $0xc8] sm:$0xf]
      %v289 = vld [vmem:[%s1 + $0xcc] sm:$0xf]
      %v290 = vld [vmem:[%s1 + $0xd0] sm:$0xf]
      %v291 = vld [vmem:[%s1 + $0xd4] sm:$0xf]
      %v292 = vld [vmem:[%s1 + $0xd8] sm:$0xf]
      %v293 = vld [vmem:[%s1 + $0xdc] sm:$0xf]
      %v294 = vld [vmem:[%s1 + $0xe0] sm:$0xf]
      %v295 = vld [vmem:[%s1 + $0xe4] sm:$0xf]
      %v296 = vld [vmem:[%s1 + $0xe8] sm:$0xf]
      %v297 = vld [vmem:[%s1 + $0xec] sm:$0xf]
      %v298 = vld [vmem:[%s1 + $0xf0] sm:$0xf]
      %v299 = vld [vmem:[%s1 + $0xf4] sm:$0xf]
      %v300 = vld [vmem:[%s1 + $0xf8] sm:$0xf]
      %v301 = vld [vmem:[%s1 + $0xfc] sm:$0xf]
      %v318 = vunpack.c.l.b16 %v222
      %v319 = vunpack.c.h.b16 %v222
      %v320 = vunpack.c.l.b16 %v223
      %v321 = vunpack.c.h.b16 %v223
      %v322 = vunpack.c.l.b16 %v224
      %v323 = vunpack.c.h.b16 %v224
      %v324 = vunpack.c.l.b16 %v225
      %v325 = vunpack.c.h.b16 %v225
      %v326 = vunpack.c.l.b16 %v226
      %v327 = vunpack.c.h.b16 %v226
      %v328 = vunpack.c.l.b16 %v227
      %v329 = vunpack.c.h.b16 %v227
      %v330 = vunpack.c.l.b16 %v228
      %v331 = vunpack.c.h.b16 %v228
      %v332 = vunpack.c.l.b16 %v229
      %v333 = vunpack.c.h.b16 %v229
      %v334 = vunpack.c.l.b16 %v230
      %v335 = vunpack.c.h.b16 %v230
      %v336 = vunpack.c.l.b16 %v231
      %v337 = vunpack.c.h.b16 %v231
      %v338 = vunpack.c.l.b16 %v232
      %v339 = vunpack.c.h.b16 %v232
      %v340 = vunpack.c.l.b16 %v233
      %v341 = vunpack.c.h.b16 %v233
      %v342 = vunpack.c.l.b16 %v234
      %v343 = vunpack.c.h.b16 %v234
      %v344 = vunpack.c.l.b16 %v235
      %v345 = vunpack.c.h.b16 %v235
      %v346 = vunpack.c.l.b16 %v236
      %v347 = vunpack.c.h.b16 %v236
      %v348 = vunpack.c.l.b16 %v237
      %v349 = vunpack.c.h.b16 %v237
      %v350 = vpack.c.b16 %v322, %v318
      %v351 = vpack.c.b16 %v323, %v319
      %v352 = vpack.c.b16 %v324, %v320
      %v353 = vpack.c.b16 %v325, %v321
      %v354 = vpack.c.b16 %v330, %v326
      %v355 = vpack.c.b16 %v331, %v327
      %v356 = vpack.c.b16 %v332, %v328
      %v357 = vpack.c.b16 %v333, %v329
      %v358 = vpack.c.b16 %v338, %v334
      %v359 = vpack.c.b16 %v339, %v335
      %v360 = vpack.c.b16 %v340, %v336
      %v361 = vpack.c.b16 %v341, %v337
      %v362 = vpack.c.b16 %v346, %v342
      %v363 = vpack.c.b16 %v347, %v343
      %v364 = vpack.c.b16 %v348, %v344
      %v365 = vpack.c.b16 %v349, %v345
      %v446 = vunpack.c.l.b16 %v238
      %v447 = vunpack.c.l.b16 %v239
      %v448 = vunpack.c.l.b16 %v240
      %v449 = vunpack.c.l.b16 %v241
      %v450 = vunpack.c.l.b16 %v242
      %v451 = vunpack.c.l.b16 %v243
      %v452 = vunpack.c.l.b16 %v244
      %v453 = vunpack.c.l.b16 %v245
      %v454 = vunpack.c.l.b16 %v246
      %v455 = vunpack.c.l.b16 %v247
      %v456 = vunpack.c.l.b16 %v248
      %v457 = vunpack.c.l.b16 %v249
      %v458 = vunpack.c.l.b16 %v250
      %v459 = vunpack.c.l.b16 %v251
      %v460 = vunpack.c.l.b16 %v252
      %v461 = vunpack.c.l.b16 %v253
      %v462 = vunpack.c.l.b16 %v254
      %v463 = vunpack.c.l.b16 %v255
      %v464 = vunpack.c.l.b16 %v256
      %v465 = vunpack.c.l.b16 %v257
      %v466 = vunpack.c.l.b16 %v258
      %v467 = vunpack.c.l.b16 %v259
      %v468 = vunpack.c.l.b16 %v260
      %v469 = vunpack.c.l.b16 %v261
      %v470 = vunpack.c.l.b16 %v262
      %v471 = vunpack.c.l.b16 %v263
      %v472 = vunpack.c.l.b16 %v264
      %v473 = vunpack.c.l.b16 %v265
      %v474 = vunpack.c.l.b16 %v266
      %v475 = vunpack.c.l.b16 %v267
      %v476 = vunpack.c.l.b16 %v268
      %v477 = vunpack.c.l.b16 %v269
      %v478 = vunpack.c.l.b16 %v270
      %v479 = vunpack.c.l.b16 %v271
      %v480 = vunpack.c.l.b16 %v272
      %v481 = vunpack.c.l.b16 %v273
      %v482 = vunpack.c.l.b16 %v274
      %v483 = vunpack.c.l.b16 %v275
      %v484 = vunpack.c.l.b16 %v276
      %v485 = vunpack.c.l.b16 %v277
      %v486 = vunpack.c.l.b16 %v278
      %v487 = vunpack.c.l.b16 %v279
      %v488 = vunpack.c.l.b16 %v280
      %v489 = vunpack.c.l.b16 %v281
      %v490 = vunpack.c.l.b16 %v282
      %v491 = vunpack.c.l.b16 %v283
      %v492 = vunpack.c.l.b16 %v284
      %v493 = vunpack.c.l.b16 %v285
      %v494 = vunpack.c.l.b16 %v286
      %v495 = vunpack.c.l.b16 %v287
      %v496 = vunpack.c.l.b16 %v288
      %v497 = vunpack.c.l.b16 %v289
      %v498 = vunpack.c.l.b16 %v290
      %v499 = vunpack.c.l.b16 %v291
      %v500 = vunpack.c.l.b16 %v292
      %v501 = vunpack.c.l.b16 %v293
      %v502 = vunpack.c.l.b16 %v294
      %v503 = vunpack.c.l.b16 %v295
      %v504 = vunpack.c.l.b16 %v296
      %v505 = vunpack.c.l.b16 %v297
      %v506 = vunpack.c.l.b16 %v298
      %v507 = vunpack.c.l.b16 %v299
      %v508 = vunpack.c.l.b16 %v300
      %v509 = vunpack.c.l.b16 %v301
      %v510 = vpack.c.b16 %v447, %v446
      %v511 = vpack.c.b16 %v449, %v448
      %v512 = vpack.c.b16 %v451, %v450
      %v513 = vpack.c.b16 %v453, %v452
      %v514 = vpack.c.b16 %v455, %v454
      %v515 = vpack.c.b16 %v457, %v456
      %v516 = vpack.c.b16 %v459, %v458
      %v517 = vpack.c.b16 %v461, %v460
      %v518 = vpack.c.b16 %v463, %v462
      %v519 = vpack.c.b16 %v465, %v464
      %v520 = vpack.c.b16 %v467, %v466
      %v521 = vpack.c.b16 %v469, %v468
      %v522 = vpack.c.b16 %v471, %v470
      %v523 = vpack.c.b16 %v473, %v472
      %v524 = vpack.c.b16 %v475, %v474
      %v525 = vpack.c.b16 %v477, %v476
      %v526 = vpack.c.b16 %v479, %v478
      %v527 = vpack.c.b16 %v481, %v480
      %v528 = vpack.c.b16 %v483, %v482
      %v529 = vpack.c.b16 %v485, %v484
      %v530 = vpack.c.b16 %v487, %v486
      %v531 = vpack.c.b16 %v489, %v488
      %v532 = vpack.c.b16 %v491, %v490
      %v533 = vpack.c.b16 %v493, %v492
      %v534 = vpack.c.b16 %v495, %v494
      %v535 = vpack.c.b16 %v497, %v496
      %v536 = vpack.c.b16 %v499, %v498
      %v537 = vpack.c.b16 %v501, %v500
      %v538 = vpack.c.b16 %v503, %v502
      %v539 = vpack.c.b16 %v505, %v504
      %v540 = vpack.c.b16 %v507, %v506
      %v541 = vpack.c.b16 %v509, %v508
      %574 = vmatprep.subr.bf16.mxu0 0
      %575 = vmatpush1.bf16.msra.mxu0 %v517
      %576 = vmatprep.subr.bf16.mxu0 0
      %577 = vmatpush1.bf16.msra.mxu0 %v516
      %578 = vmatprep.subr.bf16.mxu0 0
      %579 = vmatpush1.bf16.msra.mxu0 %v515
      %580 = vmatprep.subr.bf16.mxu0 0
      %581 = vmatpush1.bf16.msra.mxu0 %v514
      %582 = vmatprep.subr.bf16.mxu0 0
      %583 = vmatpush1.bf16.msra.mxu0 %v513
      %584 = vmatprep.subr.bf16.mxu0 0
      %585 = vmatpush1.bf16.msra.mxu0 %v512
      %586 = vmatprep.subr.bf16.mxu0 0
      %587 = vmatpush1.bf16.msra.mxu0 %v511
      %588 = vmatprep.subr.bf16.mxu0 0
      %589 = vmatpush1.bf16.msra.mxu0 %v510
      %590 = vmatprep.subr.bf16.mxu0 0
      %591 = vmatpush2.bf16.msra.mxu0 %v525
      %592 = vmatprep.subr.bf16.mxu0 0
      %593 = vmatpush2.bf16.msra.mxu0 %v524
      %594 = vmatprep.subr.bf16.mxu0 0
      %595 = vmatpush2.bf16.msra.mxu0 %v523
      %596 = vmatprep.subr.bf16.mxu0 0
      %597 = vmatpush2.bf16.msra.mxu0 %v522
      %598 = vmatprep.subr.bf16.mxu0 0
      %599 = vmatpush2.bf16.msra.mxu0 %v521
      %600 = vmatprep.subr.bf16.mxu0 0
      %601 = vmatpush2.bf16.msra.mxu0 %v520
      %602 = vmatprep.subr.bf16.mxu0 0
      %603 = vmatpush2.bf16.msra.mxu0 %v519
      %604 = vmatprep.subr.bf16.mxu0 0
      %605 = vmatpush2.bf16.msra.mxu0 %v518
      %606 = vmatprep.mubr.bf16.mxu0 %v351
      %607 = vmatmul.mubr.bf16.gmra.mxu0 %v350
      %v608 = vpop.f32.mrf.mxu0
      %v609 = vadd.f32 0.0, %v608
      %v610 = vpop.f32.mrf.mxu0
      %v611 = vpop.f32.mrf.mxu0
      %v612 = vadd.f32 0.0, %v611
      %v613 = vpop.f32.mrf.mxu0
      %614 = vmatprep.mubr.bf16.mxu0 %v355
      %615 = vmatmul.mubr.bf16.gmra.mxu0 %v354
      %v616 = vpop.f32.mrf.mxu0
      %v617 = vadd.f32 0.0, %v616
      %v618 = vpop.f32.mrf.mxu0
      %v619 = vpop.f32.mrf.mxu0
      %v620 = vadd.f32 0.0, %v619
      %v621 = vpop.f32.mrf.mxu0
      %622 = vmatprep.mubr.bf16.mxu0 %v359
      %623 = vmatmul.mubr.bf16.gmra.mxu0 %v358
      %v624 = vpop.f32.mrf.mxu0
      %v625 = vadd.f32 0.0, %v624
      %v626 = vpop.f32.mrf.mxu0
      %v627 = vpop.f32.mrf.mxu0
      %v628 = vadd.f32 0.0, %v627
      %v629 = vpop.f32.mrf.mxu0
      %630 = vmatprep.mubr.bf16.mxu0 %v363
      %631 = vmatmul.mubr.bf16.gmra.mxu0 %v362
      %v632 = vpop.f32.mrf.mxu0
      %v633 = vadd.f32 0.0, %v632
      %v634 = vpop.f32.mrf.mxu0
      %v635 = vpop.f32.mrf.mxu0
      %v636 = vadd.f32 0.0, %v635
      %v637 = vpop.f32.mrf.mxu0
      %638 = vdwg.mxu0
      %639 = vmatprep.subr.bf16.mxu0 0
      %640 = vmatpush1.bf16.msra.mxu0 %v533
      %641 = vmatprep.subr.bf16.mxu0 0
      %642 = vmatpush1.bf16.msra.mxu0 %v532
      %643 = vmatprep.subr.bf16.mxu0 0
      %644 = vmatpush1.bf16.msra.mxu0 %v531
      %645 = vmatprep.subr.bf16.mxu0 0
      %646 = vmatpush1.bf16.msra.mxu0 %v530
      %647 = vmatprep.subr.bf16.mxu0 0
      %648 = vmatpush1.bf16.msra.mxu0 %v529
      %649 = vmatprep.subr.bf16.mxu0 0
      %650 = vmatpush1.bf16.msra.mxu0 %v528
      %651 = vmatprep.subr.bf16.mxu0 0
      %652 = vmatpush1.bf16.msra.mxu0 %v527
      %653 = vmatprep.subr.bf16.mxu0 0
      %654 = vmatpush1.bf16.msra.mxu0 %v526
      %655 = vmatprep.subr.bf16.mxu0 0
      %656 = vmatpush2.bf16.msra.mxu0 %v541
      %657 = vmatprep.subr.bf16.mxu0 0
      %658 = vmatpush2.bf16.msra.mxu0 %v540
      %659 = vmatprep.subr.bf16.mxu0 0
      %660 = vmatpush2.bf16.msra.mxu0 %v539
      %661 = vmatprep.subr.bf16.mxu0 0
      %662 = vmatpush2.bf16.msra.mxu0 %v538
      %663 = vmatprep.subr.bf16.mxu0 0
      %664 = vmatpush2.bf16.msra.mxu0 %v537
      %665 = vmatprep.subr.bf16.mxu0 0
      %666 = vmatpush2.bf16.msra.mxu0 %v536
      %667 = vmatprep.subr.bf16.mxu0 0
      %668 = vmatpush2.bf16.msra.mxu0 %v535
      %669 = vmatprep.subr.bf16.mxu0 0
      %670 = vmatpush2.bf16.msra.mxu0 %v534
      %671 = vmatprep.mubr.bf16.mxu0 %v353
      %672 = vmatmul.mubr.bf16.gmra.mxu0 %v352
      %v673 = vpop.f32.mrf.mxu0
      %v674 = vadd.f32 %v609, %v673
      %v675 = vpop.f32.mrf.mxu0
      %v676 = vpop.f32.mrf.mxu0
      %v677 = vadd.f32 %v612, %v676
      %v678 = vpop.f32.mrf.mxu0
      %679 = vmatprep.mubr.bf16.mxu0 %v357
      %680 = vmatmul.mubr.bf16.gmra.mxu0 %v356
      %v681 = vpop.f32.mrf.mxu0
      %v682 = vadd.f32 %v617, %v681
      %v683 = vpop.f32.mrf.mxu0
      %v684 = vpop.f32.mrf.mxu0
      %v685 = vadd.f32 %v620, %v684
      %v686 = vpop.f32.mrf.mxu0
      %687 = vmatprep.mubr.bf16.mxu0 %v361
      %688 = vmatmul.mubr.bf16.gmra.mxu0 %v360
      %v689 = vpop.f32.mrf.mxu0
      %v690 = vadd.f32 %v625, %v689
      %v691 = vpop.f32.mrf.mxu0
      %v692 = vpop.f32.mrf.mxu0
      %v693 = vadd.f32 %v628, %v692
      %v694 = vpop.f32.mrf.mxu0
      %695 = vmatprep.mubr.bf16.mxu0 %v365
      %696 = vmatmul.mubr.bf16.gmra.mxu0 %v364
      %v697 = vpop.f32.mrf.mxu0
      %v698 = vadd.f32 %v633, %v697
      %v699 = vpop.f32.mrf.mxu0
      %v700 = vpop.f32.mrf.mxu0
      %v701 = vadd.f32 %v636, %v700
      %v702 = vpop.f32.mrf.mxu0
      %703 = vdwg.mxu0
      %p704 = scmp.eq.s32.totalorder %s19, 0
      // Predicated region
      $region37: #{classifier_forward.6} parent=35 // pred_check
        %p705 = pneg %p704
      $region38: #{classifier_forward.6} parent=35 // pred_check_branch
        %707 = sbr.rel (%p705) target = $region40
      $region39: #{classifier_forward.6} parent=35 // pred_region
        %v708 = vadd.f32 %v674, %v677
        %v709 = vadd.f32 %v708, %v682
        %v710 = vadd.f32 %v709, %v685
        %v711 = vadd.f32 %v710, %v690
        %v712 = vadd.f32 %v711, %v693
        %v713 = vadd.f32 %v712, %v698
        %v714 = vadd.f32 %v713, %v701
        %v715 = vrot.slane %v714, 4
        %v716 = vadd.f32 %v714, %v715
        %v717 = vrot.slane %v716, 2
        %v718 = vadd.f32 %v716, %v717
        %v719 = vrot.slane %v718, 1
        %v720 = vadd.f32 %v718, %v719
        %v721 = vmul.f32 %v674, %v674
        %v722 = vmul.f32 %v677, %v677
        %v723 = vmul.f32 %v682, %v682
        %v724 = vmul.f32 %v685, %v685
        %v725 = vmul.f32 %v690, %v690
        %v726 = vmul.f32 %v693, %v693
        %v727 = vmul.f32 %v698, %v698
        %v728 = vmul.f32 %v701, %v701
        %v729 = vadd.f32 %v721, %v722
        %v730 = vadd.f32 %v729, %v723
        %v731 = vadd.f32 %v730, %v724
        %v732 = vadd.f32 %v731, %v725
        %v733 = vadd.f32 %v732, %v726
        %v734 = vadd.f32 %v733, %v727
        %v735 = vadd.f32 %v734, %v728
        %v736 = vrot.slane %v735, 4
        %v737 = vadd.f32 %v735, %v736
        %v738 = vrot.slane %v737, 2
        %v739 = vadd.f32 %v737, %v738
        %v740 = vrot.slane %v739, 1
        %v741 = vadd.f32 %v739, %v740
        %p742 = scmp.eq.s32.totalorder %s20, 0
        // Predicated region
        $region41: #{classifier_forward.6} parent=39 // pred_check
          %p743 = pneg %p742
        $region42: #{classifier_forward.6} parent=39 // pred_check_branch
          %745 = sbr.rel (%p743) target = $region44
        $region43: #{classifier_forward.6} parent=39 // pred_region
          %746 = vst [vmem:[#allocation2] sm:$0x1] 0.0
          %747 = vst [vmem:[#allocation3] sm:$0x1] 0.0
        $region44: #{classifier_forward.6} parent=39 // pred_fallthru
          _
        %v748 = vld [vmem:[#allocation2] sm:$0x1]
        %v749 = vadd.f32 %v748, %v720
        %750 = vst [vmem:[#allocation2] sm:$0x1] %v749
        %v751 = vld [vmem:[#allocation3] sm:$0x1]
        %v752 = vadd.f32 %v751, %v741
        %753 = vst [vmem:[#allocation3] sm:$0x1] %v752
        // Predicated region
        $region45: #{classifier_forward.6} parent=39 // pred_check
          %p754 = pneg %p742
        $region46: #{classifier_forward.6} parent=39 // pred_check_branch
          %756 = sbr.rel (%p754) target = $region48
        $region47: #{classifier_forward.6} parent=39 // pred_region
          %v757 = vld [vmem:[#allocation2] sm:$0x1]
          %v758 = vmul.f32 %v757, 0.03125
          %v759 = vld [vmem:[#allocation3] sm:$0x1]
          %v760 = vmul.f32 %v759, 0.03125
          %v761 = vmul.f32 %v758, %v758
          %v762 = vsub.f32 %v760, %v761
          %v763 = vmax.f32 %v762, 0.0
          %v764 = vadd.f32 %v763, 1e-05
          %v765 = vrsqrt.pop %v764
          %v766 = vld [vmem:[%s2] sm:$0x1]
          %v767 = vmul.f32 %v766, %v765
          %768 = vst [vmem:[#allocation4] sm:$0x1] %v767
          %v769 = vld [vmem:[%s3] sm:$0x1]
          %v770 = vmul.f32 %v758, %v767
          %v771 = vsub.f32 %v769, %v770
          %772 = vst [vmem:[#allocation5] sm:$0x1] %v771
        $region48: #{classifier_forward.6} parent=39 // pred_fallthru
          _
      $region40: #{classifier_forward.6} parent=35 // pred_fallthru
        _
      %p773 = scmp.eq.s32.totalorder %s19, 1
      // Predicated region
      $region49: #{classifier_forward.6} parent=35 // pred_check
        %p774 = pneg %p773
      $region50: #{classifier_forward.6} parent=35 // pred_check_branch
        %776 = sbr.rel (%p774) target = $region52
      $region51: #{classifier_forward.6} parent=35 // pred_region
        %v777 = vld [vmem:[#allocation4] sm:$0x1]
        %v779 = vlaneseq
        %v780 = vshrl.u32 %v779, 7
        %v781 = vsub.s32 0, %v780
        %v782 = vrot.slane %v777, %v781
        %v784 = vmul.f32 %v674, %v782
        %v785 = vmul.f32 %v677, %v782
        %v786 = vmul.f32 %v682, %v782
        %v787 = vmul.f32 %v685, %v782
        %v788 = vmul.f32 %v690, %v782
        %v789 = vmul.f32 %v693, %v782
        %v790 = vmul.f32 %v698, %v782
        %v791 = vmul.f32 %v701, %v782
        %v792 = vld [vmem:[#allocation5] sm:$0x1]
        %v794 = vlaneseq
        %v795 = vshrl.u32 %v794, 7
        %v796 = vsub.s32 0, %v795
        %v797 = vrot.slane %v792, %v796
        %v799 = vadd.f32 %v784, %v797
        %v800 = vadd.f32 %v785, %v797
        %v801 = vadd.f32 %v786, %v797
        %v802 = vadd.f32 %v787, %v797
        %v803 = vadd.f32 %v788, %v797
        %v804 = vadd.f32 %v789, %v797
        %v805 = vadd.f32 %v790, %v797
        %v806 = vadd.f32 %v791, %v797
        %vm807 = vcmp.ge.f32.partialorder %v799, 0.0
        %vm808 = vcmp.ge.f32.partialorder %v800, 0.0
        %vm809 = vcmp.ge.f32.partialorder %v801, 0.0
        %vm810 = vcmp.ge.f32.partialorder %v802, 0.0
        %vm811 = vcmp.ge.f32.partialorder %v803, 0.0
        %vm812 = vcmp.ge.f32.partialorder %v804, 0.0
        %vm813 = vcmp.ge.f32.partialorder %v805, 0.0
        %vm814 = vcmp.ge.f32.partialorder %v806, 0.0
        %v815 = vmul.f32 %v799, 0.2
        %v816 = vmul.f32 %v800, 0.2
        %v817 = vmul.f32 %v801, 0.2
        %v818 = vmul.f32 %v802, 0.2
        %v819 = vmul.f32 %v803, 0.2
        %v820 = vmul.f32 %v804, 0.2
        %v821 = vmul.f32 %v805, 0.2
        %v822 = vmul.f32 %v806, 0.2
        %v823 = vsel %vm807, %v799, %v815
        %v824 = vsel %vm808, %v800, %v816
        %v825 = vsel %vm809, %v801, %v817
        %v826 = vsel %vm810, %v802, %v818
        %v827 = vsel %vm811, %v803, %v819
        %v828 = vsel %vm812, %v804, %v820
        %v829 = vsel %vm813, %v805, %v821
        %v830 = vsel %vm814, %v806, %v822
        %v831 = vpack.c.bf16 %v824, %v823
        %v832 = vpack.c.bf16 %v826, %v825
        %v833 = vpack.c.bf16 %v828, %v827
        %v834 = vpack.c.bf16 %v830, %v829
        %v839 = vunpack.c.l.b16 %v831
        %v840 = vunpack.c.h.b16 %v831
        %v841 = vunpack.c.l.b16 %v832
        %v842 = vunpack.c.h.b16 %v832
        %v843 = vunpack.c.l.b16 %v833
        %v844 = vunpack.c.h.b16 %v833
        %v845 = vunpack.c.l.b16 %v834
        %v846 = vunpack.c.h.b16 %v834
        %v847 = vpack.c.b16 %v839, %v839
        %v848 = vpack.c.b16 %v840, %v840
        %v849 = vpack.c.b16 %v841, %v841
        %v850 = vpack.c.b16 %v842, %v842
        %v851 = vpack.c.b16 %v843, %v843
        %v852 = vpack.c.b16 %v844, %v844
        %v853 = vpack.c.b16 %v845, %v845
        %v854 = vpack.c.b16 %v846, %v846
        %863 = vst [vmem:[%s218] sm:$0xf] %v847
        %864 = vst [vmem:[%s218 + $0x4] sm:$0xf] %v848
        %865 = vst [vmem:[%s218 + $0x8] sm:$0xf] %v849
        %866 = vst [vmem:[%s218 + $0xc] sm:$0xf] %v850
        %867 = vst [vmem:[%s218 + $0x10] sm:$0xf] %v851
        %868 = vst [vmem:[%s218 + $0x14] sm:$0xf] %v852
        %869 = vst [vmem:[%s218 + $0x18] sm:$0xf] %v853
        %870 = vst [vmem:[%s218 + $0x1c] sm:$0xf] %v854
      $region52: #{classifier_forward.6} parent=35 // pred_fallthru
        _
      %s871 = smul.u32 %s20, %s19
      %s872 = smul.u32 8, %s871
      %p873 = scmp.lt.s32.totalorder %s872, 7
      %s874 = scalar_select %p873, %s872, 7
      %s875 = smul.addr %s874, 4
      %s876 = scalar_lea.vmem %s4, %s875
      // Predicated region
      $region53: #{classifier_forward.6} parent=35 // pred_check
        %p877 = pneg %p136
      $region54: #{classifier_forward.6} parent=35 // pred_check_branch
        %879 = sbr.rel (%p877) target = $region56
      $region55: #{classifier_forward.6} parent=35 // pred_region
        %s880 = smul.u32 %s20, %s19
        %s881 = smul.u32 8, %s880
      $region56: #{classifier_forward.6} parent=35 // pred_fallthru
        _
    $region36: #{classifier_forward.6} parent=5 // pred_fallthru
      _
    %p882 = scmp.le.s32.totalorder 2, %s10
    // Predicated region
    $region57: #{classifier_forward.6} parent=5 // pred_check
      %p883 = pneg %p882
    $region58: #{classifier_forward.6} parent=5 // pred_check_branch
      %885 = sbr.rel (%p883) target = $region60
    $region59: #{classifier_forward.6} parent=5 // pred_region
      %s886 = ssub.s32 %s10, 2
      // Predicated region
      $region61: #{classifier_forward.6} parent=59 // pred_check
        %p887 = pneg %p142
      $region62: #{classifier_forward.6} parent=59 // pred_check_branch
        %889 = sbr.rel (%p887) target = $region64
      $region63: #{classifier_forward.6} parent=59 // pred_region
        %s890 = smul.u32 %s22, %s21
        %s891 = smul.u32 8, %s890
        %p892 = scmp.lt.s32.totalorder %s891, 7
        %s893 = scalar_select %p892, %s891, 7
        %s894 = smul.addr %s893, 4
        %s895 = scalar_lea.vmem %s4, %s894
      $region64: #{classifier_forward.6} parent=59 // pred_fallthru
        _
    $region60: #{classifier_forward.6} parent=5 // pred_fallthru
      _
  $region6: #{classifier_forward.6} parent=0 // loop_footer
    %s14 = sadd.s32 1, %s10
  $region7: #{classifier_forward.6} parent=0 // loop_footer_branch
    %9 = sbr.rel target = $region3
  $region8: #{classifier_forward.6} parent=0 // loop_exit
    _

// kernel: classifier_forward.7
$region0: #{classifier_forward.7}
  #allocation0 [shape = 'u32[]', space=smem, size = 0x4, offset = 0x4, fixed_abs, tag = 'smem constant byte address 0x4 - core index']
  #allocation1 [shape = 'u32[144,128]{1,0:T(1,128)}', space=vmem, size = 0x12000, scoped, tag = 'internal scratch']
  %s0 = inlined_call_operand.vmem [shape: bf16[64,1024], index: 0, kind: input, shape index: {}]
  %s1 = inlined_call_operand.vmem [shape: bf16[1024,128], index: 1, kind: input, shape index: {}]
  %s2 = inlined_call_operand.vmem [shape: f32[1,128], index: 2, kind: input, shape index: {}]
  %s3 = inlined_call_operand.vmem [shape: f32[64,128], index: 3, kind: output, shape index: {}]
  %s4 = sld [smem:[#allocation0]]
  $region22: #{classifier_forward.7} parent=0
    _
  %s6 = ssub.s32 1, %s4
  %s7 = scalar_select 0, %s6, %s4
  // Predicated region
  $region2: #{classifier_forward.7} parent=0 // pred_check
    _
  $region3: #{classifier_forward.7} parent=0 // pred_check_branch
    %9 = sbr.rel (0) target = $region5
  $region4: #{classifier_forward.7} parent=0 // pred_region
    _
  $region5: #{classifier_forward.7} parent=0 // pred_fallthru
    _
  // Predicated region
  $region6: #{classifier_forward.7} parent=0 // pred_check
    _
  $region7: #{classifier_forward.7} parent=0 // pred_check_branch
    %11 = sbr.rel (0) target = $region9
  $region8: #{classifier_forward.7} parent=0 // pred_region
    _
  $region9: #{classifier_forward.7} parent=0 // pred_fallthru
    _
  // Predicated region
  $region10: #{classifier_forward.7} parent=0 // pred_check
    _
  $region11: #{classifier_forward.7} parent=0 // pred_check_branch
    %13 = sbr.rel (0) target = $region13
  $region12: #{classifier_forward.7} parent=0 // pred_region
    _
  $region13: #{classifier_forward.7} parent=0 // pred_fallthru
    _
  %v15 = vld [vmem:[%s0] sm:$0xff]
  %v16 = vld [vmem:[%s0 + $0x8] sm:$0xff]
  %v17 = vld [vmem:[%s0 + $0x10] sm:$0xff]
  %v18 = vld [vmem:[%s0 + $0x18] sm:$0xff]
  %v19 = vld [vmem:[%s0 + $0x20] sm:$0xff]
  %v20 = vld [vmem:[%s0 + $0x28] sm:$0xff]
  %v21 = vld [vmem:[%s0 + $0x30] sm:$0xff]
  %v22 = vld [vmem:[%s0 + $0x38] sm:$0xff]
  %v23 = vld [vmem:[%s0 + $0x40] sm:$0xff]
  %v24 = vld [vmem:[%s0 + $0x48] sm:$0xff]
  %v25 = vld [vmem:[%s0 + $0x50] sm:$0xff]
  %v26 = vld [vmem:[%s0 + $0x58] sm:$0xff]
  %v27 = vld [vmem:[%s0 + $0x60] sm:$0xff]
  %v28 = vld [vmem:[%s0 + $0x68] sm:$0xff]
  %v29 = vld [vmem:[%s0 + $0x70] sm:$0xff]
  %v30 = vld [vmem:[%s0 + $0x78] sm:$0xff]
  %v31 = vld [vmem:[%s0 + $0x80] sm:$0xff]
  %v32 = vld [vmem:[%s0 + $0x88] sm:$0xff]
  %v33 = vld [vmem:[%s0 + $0x90] sm:$0xff]
  %v34 = vld [vmem:[%s0 + $0x98] sm:$0xff]
  %v35 = vld [vmem:[%s0 + $0xa0] sm:$0xff]
  %v36 = vld [vmem:[%s0 + $0xa8] sm:$0xff]
  %v37 = vld [vmem:[%s0 + $0xb0] sm:$0xff]
  %v38 = vld [vmem:[%s0 + $0xb8] sm:$0xff]
  %v39 = vld [vmem:[%s0 + $0xc0] sm:$0xff]
  %v40 = vld [vmem:[%s0 + $0xc8] sm:$0xff]
  %v41 = vld [vmem:[%s0 + $0xd0] sm:$0xff]
  %v42 = vld [vmem:[%s0 + $0xd8] sm:$0xff]
  %v43 = vld [vmem:[%s0 + $0xe0] sm:$0xff]
  %v44 = vld [vmem:[%s0 + $0xe8] sm:$0xff]
  %v45 = vld [vmem:[%s0 + $0xf0] sm:$0xff]
  %v46 = vld [vmem:[%s0 + $0xf8] sm:$0xff]
  %v47 = vld [vmem:[%s1] sm:$0xf]
  %v48 = vld [vmem:[%s1 + $0x4] sm:$0xf]
  %v49 = vld [vmem:[%s1 + $0x8] sm:$0xf]
  %v50 = vld [vmem:[%s1 + $0xc] sm:$0xf]
  %v51 = vld [vmem:[%s1 + $0x10] sm:$0xf]
  %v52 = vld [vmem:[%s1 + $0x14] sm:$0xf]
  %v53 = vld [vmem:[%s1 + $0x18] sm:$0xf]
  %v54 = vld [vmem:[%s1 + $0x1c] sm:$0xf]
  %v55 = vld [vmem:[%s1 + $0x20] sm:$0xf]
  %v56 = vld [vmem:[%s1 + $0x24] sm:$0xf]
  %v57 = vld [vmem:[%s1 + $0x28] sm:$0xf]
  %v58 = vld [vmem:[%s1 + $0x2c] sm:$0xf]
  %v59 = vld [vmem:[%s1 + $0x30] sm:$0xf]
  %v60 = vld [vmem:[%s1 + $0x34] sm:$0xf]
  %v61 = vld [vmem:[%s1 + $0x38] sm:$0xf]
  %v62 = vld [vmem:[%s1 + $0x3c] sm:$0xf]
  %v63 = vld [vmem:[%s1 + $0x40] sm:$0xf]
  %v64 = vld [vmem:[%s1 + $0x44] sm:$0xf]
  %v65 = vld [vmem:[%s1 + $0x48] sm:$0xf]
  %v66 = vld [vmem:[%s1 + $0x4c] sm:$0xf]
  %v67 = vld [vmem:[%s1 + $0x50] sm:$0xf]
  %v68 = vld [vmem:[%s1 + $0x54] sm:$0xf]
  %v69 = vld [vmem:[%s1 + $0x58] sm:$0xf]
  %v70 = vld [vmem:[%s1 + $0x5c] sm:$0xf]
  %v71 = vld [vmem:[%s1 + $0x60] sm:$0xf]
  %v72 = vld [vmem:[%s1 + $0x64] sm:$0xf]
  %v73 = vld [vmem:[%s1 + $0x68] sm:$0xf]
  %v74 = vld [vmem:[%s1 + $0x6c] sm:$0xf]
  %v75 = vld [vmem:[%s1 + $0x70] sm:$0xf]
  %v76 = vld [vmem:[%s1 + $0x74] sm:$0xf]
  %v77 = vld [vmem:[%s1 + $0x78] sm:$0xf]
  %v78 = vld [vmem:[%s1 + $0x7c] sm:$0xf]
  %v79 = vld [vmem:[%s1 + $0x80] sm:$0xf]
  %v80 = vld [vmem:[%s1 + $0x84] sm:$0xf]
  %v81 = vld [vmem:[%s1 + $0x88] sm:$0xf]
  %v82 = vld [vmem:[%s1 + $0x8c] sm:$0xf]
  %v83 = vld [vmem:[%s1 + $0x90] sm:$0xf]
  %v84 = vld [vmem:[%s1 + $0x94] sm:$0xf]
  %v85 = vld [vmem:[%s1 + $0x98] sm:$0xf]
  %v86 = vld [vmem:[%s1 + $0x9c] sm:$0xf]
  %v87 = vld [vmem:[%s1 + $0xa0] sm:$0xf]
  %v88 = vld [vmem:[%s1 + $0xa4] sm:$0xf]
  %v89 = vld [vmem:[%s1 + $0xa8] sm:$0xf]
  %v90 = vld [vmem:[%s1 + $0xac] sm:$0xf]
  %v91 = vld [vmem:[%s1 + $0xb0] sm:$0xf]
  %v92 = vld [vmem:[%s1 + $0xb4] sm:$0xf]
  %v93 = vld [vmem:[%s1 + $0xb8] sm:$0xf]
  %v94 = vld [vmem:[%s1 + $0xbc] sm:$0xf]
  %v95 = vld [vmem:[%s1 + $0xc0] sm:$0xf]
  %v96 = vld [vmem:[%s1 + $0xc4] sm:$0xf]
  %v97 = vld [vmem:[%s1 + $0xc8] sm:$0xf]
  %v98 = vld [vmem:[%s1 + $0xcc] sm:$0xf]
  %v99 = vld [vmem:[%s1 + $0xd0] sm:$0xf]
  %v100 = vld [vmem:[%s1 + $0xd4] sm:$0xf]
  %v101 = vld [vmem:[%s1 + $0xd8] sm:$0xf]
  %v102 = vld [vmem:[%s1 + $0xdc] sm:$0xf]
  %v103 = vld [vmem:[%s1 + $0xe0] sm:$0xf]
  %v104 = vld [vmem:[%s1 + $0xe4] sm:$0xf]
  %v105 = vld [vmem:[%s1 + $0xe8] sm:$0xf]
  %v106 = vld [vmem:[%s1 + $0xec] sm:$0xf]
  %v107 = vld [vmem:[%s1 + $0xf0] sm:$0xf]
  %v108 = vld [vmem:[%s1 + $0xf4] sm:$0xf]
  %v109 = vld [vmem:[%s1 + $0xf8] sm:$0xf]
  %v110 = vld [vmem:[%s1 + $0xfc] sm:$0xf]
  %v111 = vld [vmem:[%s1 + $0x100] sm:$0xf]
  %v112 = vld [vmem:[%s1 + $0x104] sm:$0xf]
  %v113 = vld [vmem:[%s1 + $0x108] sm:$0xf]
  %v114 = vld [vmem:[%s1 + $0x10c] sm:$0xf]
  %v115 = vld [vmem:[%s1 + $0x110] sm:$0xf]
  %v116 = vld [vmem:[%s1 + $0x114] sm:$0xf]
  %v117 = vld [vmem:[%s1 + $0x118] sm:$0xf]
  %v118 = vld [vmem:[%s1 + $0x11c] sm:$0xf]
  %v119 = vld [vmem:[%s1 + $0x120] sm:$0xf]
  %v120 = vld [vmem:[%s1 + $0x124] sm:$0xf]
  %v121 = vld [vmem:[%s1 + $0x128] sm:$0xf]
  %v122 = vld [vmem:[%s1 + $0x12c] sm:$0xf]
  %v123 = vld [vmem:[%s1 + $0x130] sm:$0xf]
  %v124 = vld [vmem:[%s1 + $0x134] sm:$0xf]
  %v125 = vld [vmem:[%s1 + $0x138] sm:$0xf]
  %v126 = vld [vmem:[%s1 + $0x13c] sm:$0xf]
  %v127 = vld [vmem:[%s1 + $0x140] sm:$0xf]
  %v128 = vld [vmem:[%s1 + $0x144] sm:$0xf]
  %v129 = vld [vmem:[%s1 + $0x148] sm:$0xf]
  %v130 = vld [vmem:[%s1 + $0x14c] sm:$0xf]
  %v131 = vld [vmem:[%s1 + $0x150] sm:$0xf]
  %v132 = vld [vmem:[%s1 + $0x154] sm:$0xf]
  %v133 = vld [vmem:[%s1 + $0x158] sm:$0xf]
  %v134 = vld [vmem:[%s1 + $0x15c] sm:$0xf]
  %v135 = vld [vmem:[%s1 + $0x160] sm:$0xf]
  %v136 = vld [vmem:[%s1 + $0x164] sm:$0xf]
  %v137 = vld [vmem:[%s1 + $0x168] sm:$0xf]
  %v138 = vld [vmem:[%s1 + $0x16c] sm:$0xf]
  %v139 = vld [vmem:[%s1 + $0x170] sm:$0xf]
  %v140 = vld [vmem:[%s1 + $0x174] sm:$0xf]
  %v141 = vld [vmem:[%s1 + $0x178] sm:$0xf]
  %v142 = vld [vmem:[%s1 + $0x17c] sm:$0xf]
  %v143 = vld [vmem:[%s1 + $0x180] sm:$0xf]
  %v144 = vld [vmem:[%s1 + $0x184] sm:$0xf]
  %v145 = vld [vmem:[%s1 + $0x188] sm:$0xf]
  %v146 = vld [vmem:[%s1 + $0x18c] sm:$0xf]
  %v147 = vld [vmem:[%s1 + $0x190] sm:$0xf]
  %v148 = vld [vmem:[%s1 + $0x194] sm:$0xf]
  %v149 = vld [vmem:[%s1 + $0x198] sm:$0xf]
  %v150 = vld [vmem:[%s1 + $0x19c] sm:$0xf]
  %v151 = vld [vmem:[%s1 + $0x1a0] sm:$0xf]
  %v152 = vld [vmem:[%s1 + $0x1a4] sm:$0xf]
  %v153 = vld [vmem:[%s1 + $0x1a8] sm:$0xf]
  %v154 = vld [vmem:[%s1 + $0x1ac] sm:$0xf]
  %v155 = vld [vmem:[%s1 + $0x1b0] sm:$0xf]
  %v156 = vld [vmem:[%s1 + $0x1b4] sm:$0xf]
  %v157 = vld [vmem:[%s1 + $0x1b8] sm:$0xf]
  %v158 = vld [vmem:[%s1 + $0x1bc] sm:$0xf]
  %v159 = vld [vmem:[%s1 + $0x1c0] sm:$0xf]
  %v160 = vld [vmem:[%s1 + $0x1c4] sm:$0xf]
  %v161 = vld [vmem:[%s1 + $0x1c8] sm:$0xf]
  %v162 = vld [vmem:[%s1 + $0x1cc] sm:$0xf]
  %v163 = vld [vmem:[%s1 + $0x1d0] sm:$0xf]
  %v164 = vld [vmem:[%s1 + $0x1d4] sm:$0xf]
  %v165 = vld [vmem:[%s1 + $0x1d8] sm:$0xf]
  %v166 = vld [vmem:[%s1 + $0x1dc] sm:$0xf]
  %v167 = vld [vmem:[%s1 + $0x1e0] sm:$0xf]
  %v168 = vld [vmem:[%s1 + $0x1e4] sm:$0xf]
  %v169 = vld [vmem:[%s1 + $0x1e8] sm:$0xf]
  %v170 = vld [vmem:[%s1 + $0x1ec] sm:$0xf]
  %v171 = vld [vmem:[%s1 + $0x1f0] sm:$0xf]
  %v172 = vld [vmem:[%s1 + $0x1f4] sm:$0xf]
  %v173 = vld [vmem:[%s1 + $0x1f8] sm:$0xf]
  %v174 = vld [vmem:[%s1 + $0x1fc] sm:$0xf]
  %v175 = vld [vmem:[%s2] sm:$0x1]
  %v177 = vlaneseq
  %v178 = vshrl.u32 %v177, 7
  %v179 = vsub.s32 0, %v178
  %v180 = vrot.slane %v175, %v179
  %v214 = vunpack.c.l.b16 %v15
  %v215 = vunpack.c.h.b16 %v15
  %v216 = vunpack.c.l.b16 %v16
  %v217 = vunpack.c.h.b16 %v16
  %v218 = vunpack.c.l.b16 %v17
  %v219 = vunpack.c.h.b16 %v17
  %v220 = vunpack.c.l.b16 %v18
  %v221 = vunpack.c.h.b16 %v18
  %v222 = vunpack.c.l.b16 %v19
  %v223 = vunpack.c.h.b16 %v19
  %v224 = vunpack.c.l.b16 %v20
  %v225 = vunpack.c.h.b16 %v20
  %v226 = vunpack.c.l.b16 %v21
  %v227 = vunpack.c.h.b16 %v21
  %v228 = vunpack.c.l.b16 %v22
  %v229 = vunpack.c.h.b16 %v22
  %v230 = vunpack.c.l.b16 %v23
  %v231 = vunpack.c.h.b16 %v23
  %v232 = vunpack.c.l.b16 %v24
  %v233 = vunpack.c.h.b16 %v24
  %v234 = vunpack.c.l.b16 %v25
  %v235 = vunpack.c.h.b16 %v25
  %v236 = vunpack.c.l.b16 %v26
  %v237 = vunpack.c.h.b16 %v26
  %v238 = vunpack.c.l.b16 %v27
  %v239 = vunpack.c.h.b16 %v27
  %v240 = vunpack.c.l.b16 %v28
  %v241 = vunpack.c.h.b16 %v28
  %v242 = vunpack.c.l.b16 %v29
  %v243 = vunpack.c.h.b16 %v29
  %v244 = vunpack.c.l.b16 %v30
  %v245 = vunpack.c.h.b16 %v30
  %v246 = vunpack.c.l.b16 %v31
  %v247 = vunpack.c.h.b16 %v31
  %v248 = vunpack.c.l.b16 %v32
  %v249 = vunpack.c.h.b16 %v32
  %v250 = vunpack.c.l.b16 %v33
  %v251 = vunpack.c.h.b16 %v33
  %v252 = vunpack.c.l.b16 %v34
  %v253 = vunpack.c.h.b16 %v34
  %v254 = vunpack.c.l.b16 %v35
  %v255 = vunpack.c.h.b16 %v35
  %v256 = vunpack.c.l.b16 %v36
  %v257 = vunpack.c.h.b16 %v36
  %v258 = vunpack.c.l.b16 %v37
  %v259 = vunpack.c.h.b16 %v37
  %v260 = vunpack.c.l.b16 %v38
  %v261 = vunpack.c.h.b16 %v38
  %v262 = vunpack.c.l.b16 %v39
  %v263 = vunpack.c.h.b16 %v39
  %v264 = vunpack.c.l.b16 %v40
  %v265 = vunpack.c.h.b16 %v40
  %v266 = vunpack.c.l.b16 %v41
  %v267 = vunpack.c.h.b16 %v41
  %v268 = vunpack.c.l.b16 %v42
  %v269 = vunpack.c.h.b16 %v42
  %v270 = vunpack.c.l.b16 %v43
  %v271 = vunpack.c.h.b16 %v43
  %v272 = vunpack.c.l.b16 %v44
  %v273 = vunpack.c.h.b16 %v44
  %v274 = vunpack.c.l.b16 %v45
  %v275 = vunpack.c.h.b16 %v45
  %v276 = vunpack.c.l.b16 %v46
  %v277 = vunpack.c.h.b16 %v46
  %v278 = vpack.c.b16 %v222, %v214
  %v279 = vpack.c.b16 %v223, %v215
  %v280 = vpack.c.b16 %v224, %v216
  %v281 = vpack.c.b16 %v225, %v217
  %v282 = vpack.c.b16 %v226, %v218
  %v283 = vpack.c.b16 %v227, %v219
  %v284 = vpack.c.b16 %v228, %v220
  %v285 = vpack.c.b16 %v229, %v221
  %v286 = vpack.c.b16 %v238, %v230
  %v287 = vpack.c.b16 %v239, %v231
  %v288 = vpack.c.b16 %v240, %v232
  %v289 = vpack.c.b16 %v241, %v233
  %v290 = vpack.c.b16 %v242, %v234
  %v291 = vpack.c.b16 %v243, %v235
  %v292 = vpack.c.b16 %v244, %v236
  %v293 = vpack.c.b16 %v245, %v237
  %v294 = vpack.c.b16 %v254, %v246
  %v295 = vpack.c.b16 %v255, %v247
  %v296 = vpack.c.b16 %v256, %v248
  %v297 = vpack.c.b16 %v257, %v249
  %v298 = vpack.c.b16 %v258, %v250
  %v299 = vpack.c.b16 %v259, %v251
  %v300 = vpack.c.b16 %v260, %v252
  %v301 = vpack.c.b16 %v261, %v253
  %v302 = vpack.c.b16 %v270, %v262
  %v303 = vpack.c.b16 %v271, %v263
  %v304 = vpack.c.b16 %v272, %v264
  %v305 = vpack.c.b16 %v273, %v265
  %v306 = vpack.c.b16 %v274, %v266
  %v307 = vpack.c.b16 %v275, %v267
  %v308 = vpack.c.b16 %v276, %v268
  %v309 = vpack.c.b16 %v277, %v269
  %v470 = vunpack.c.l.b16 %v47
  %v471 = vunpack.c.l.b16 %v48
  %v472 = vunpack.c.l.b16 %v49
  %v473 = vunpack.c.l.b16 %v50
  %v474 = vunpack.c.l.b16 %v51
  %v475 = vunpack.c.l.b16 %v52
  %v476 = vunpack.c.l.b16 %v53
  %v477 = vunpack.c.l.b16 %v54
  %v478 = vunpack.c.l.b16 %v55
  %v479 = vunpack.c.l.b16 %v56
  %v480 = vunpack.c.l.b16 %v57
  %v481 = vunpack.c.l.b16 %v58
  %v482 = vunpack.c.l.b16 %v59
  %v483 = vunpack.c.l.b16 %v60
  %v484 = vunpack.c.l.b16 %v61
  %v485 = vunpack.c.l.b16 %v62
  %v486 = vunpack.c.l.b16 %v63
  %v487 = vunpack.c.l.b16 %v64
  %v488 = vunpack.c.l.b16 %v65
  %v489 = vunpack.c.l.b16 %v66
  %v490 = vunpack.c.l.b16 %v67
  %v491 = vunpack.c.l.b16 %v68
  %v492 = vunpack.c.l.b16 %v69
  %v493 = vunpack.c.l.b16 %v70
  %v494 = vunpack.c.l.b16 %v71
  %v495 = vunpack.c.l.b16 %v72
  %v496 = vunpack.c.l.b16 %v73
  %v497 = vunpack.c.l.b16 %v74
  %v498 = vunpack.c.l.b16 %v75
  %v499 = vunpack.c.l.b16 %v76
  %v500 = vunpack.c.l.b16 %v77
  %v501 = vunpack.c.l.b16 %v78
  %v502 = vunpack.c.l.b16 %v79
  %v503 = vunpack.c.l.b16 %v80
  %v504 = vunpack.c.l.b16 %v81
  %v505 = vunpack.c.l.b16 %v82
  %v506 = vunpack.c.l.b16 %v83
  %v507 = vunpack.c.l.b16 %v84
  %v508 = vunpack.c.l.b16 %v85
  %v509 = vunpack.c.l.b16 %v86
  %v510 = vunpack.c.l.b16 %v87
  %v511 = vunpack.c.l.b16 %v88
  %v512 = vunpack.c.l.b16 %v89
  %v513 = vunpack.c.l.b16 %v90
  %v514 = vunpack.c.l.b16 %v91
  %v515 = vunpack.c.l.b16 %v92
  %v516 = vunpack.c.l.b16 %v93
  %v517 = vunpack.c.l.b16 %v94
  %v518 = vunpack.c.l.b16 %v95
  %v519 = vunpack.c.l.b16 %v96
  %v520 = vunpack.c.l.b16 %v97
  %v521 = vunpack.c.l.b16 %v98
  %v522 = vunpack.c.l.b16 %v99
  %v523 = vunpack.c.l.b16 %v100
  %v524 = vunpack.c.l.b16 %v101
  %v525 = vunpack.c.l.b16 %v102
  %v526 = vunpack.c.l.b16 %v103
  %v527 = vunpack.c.l.b16 %v104
  %v528 = vunpack.c.l.b16 %v105
  %v529 = vunpack.c.l.b16 %v106
  %v530 = vunpack.c.l.b16 %v107
  %v531 = vunpack.c.l.b16 %v108
  %v532 = vunpack.c.l.b16 %v109
  %v533 = vunpack.c.l.b16 %v110
  %v534 = vunpack.c.l.b16 %v111
  %v535 = vunpack.c.l.b16 %v112
  %v536 = vunpack.c.l.b16 %v113
  %v537 = vunpack.c.l.b16 %v114
  %v538 = vunpack.c.l.b16 %v115
  %v539 = vunpack.c.l.b16 %v116
  %v540 = vunpack.c.l.b16 %v117
  %v541 = vunpack.c.l.b16 %v118
  %v542 = vunpack.c.l.b16 %v119
  %v543 = vunpack.c.l.b16 %v120
  %v544 = vunpack.c.l.b16 %v121
  %v545 = vunpack.c.l.b16 %v122
  %v546 = vunpack.c.l.b16 %v123
  %v547 = vunpack.c.l.b16 %v124
  %v548 = vunpack.c.l.b16 %v125
  %v549 = vunpack.c.l.b16 %v126
  %v550 = vunpack.c.l.b16 %v127
  %v551 = vunpack.c.l.b16 %v128
  %v552 = vunpack.c.l.b16 %v129
  %v553 = vunpack.c.l.b16 %v130
  %v554 = vunpack.c.l.b16 %v131
  %v555 = vunpack.c.l.b16 %v132
  %v556 = vunpack.c.l.b16 %v133
  %v557 = vunpack.c.l.b16 %v134
  %v558 = vunpack.c.l.b16 %v135
  %v559 = vunpack.c.l.b16 %v136
  %v560 = vunpack.c.l.b16 %v137
  %v561 = vunpack.c.l.b16 %v138
  %v562 = vunpack.c.l.b16 %v139
  %v563 = vunpack.c.l.b16 %v140
  %v564 = vunpack.c.l.b16 %v141
  %v565 = vunpack.c.l.b16 %v142
  %v566 = vunpack.c.l.b16 %v143
  %v567 = vunpack.c.l.b16 %v144
  %v568 = vunpack.c.l.b16 %v145
  %v569 = vunpack.c.l.b16 %v146
  %v570 = vunpack.c.l.b16 %v147
  %v571 = vunpack.c.l.b16 %v148
  %v572 = vunpack.c.l.b16 %v149
  %v573 = vunpack.c.l.b16 %v150
  %v574 = vunpack.c.l.b16 %v151
  %v575 = vunpack.c.l.b16 %v152
  %v576 = vunpack.c.l.b16 %v153
  %v577 = vunpack.c.l.b16 %v154
  %v578 = vunpack.c.l.b16 %v155
  %v579 = vunpack.c.l.b16 %v156
  %v580 = vunpack.c.l.b16 %v157
  %v581 = vunpack.c.l.b16 %v158
  %v582 = vunpack.c.l.b16 %v159
  %v583 = vunpack.c.l.b16 %v160
  %v584 = vunpack.c.l.b16 %v161
  %v585 = vunpack.c.l.b16 %v162
  %v586 = vunpack.c.l.b16 %v163
  %v587 = vunpack.c.l.b16 %v164
  %v588 = vunpack.c.l.b16 %v165
  %v589 = vunpack.c.l.b16 %v166
  %v590 = vunpack.c.l.b16 %v167
  %v591 = vunpack.c.l.b16 %v168
  %v592 = vunpack.c.l.b16 %v169
  %v593 = vunpack.c.l.b16 %v170
  %v594 = vunpack.c.l.b16 %v171
  %v595 = vunpack.c.l.b16 %v172
  %v596 = vunpack.c.l.b16 %v173
  %v597 = vunpack.c.l.b16 %v174
  %v598 = vpack.c.b16 %v471, %v470
  %v599 = vpack.c.b16 %v473, %v472
  %v600 = vpack.c.b16 %v475, %v474
  %v601 = vpack.c.b16 %v477, %v476
  %v602 = vpack.c.b16 %v479, %v478
  %v603 = vpack.c.b16 %v481, %v480
  %v604 = vpack.c.b16 %v483, %v482
  %v605 = vpack.c.b16 %v485, %v484
  %v606 = vpack.c.b16 %v487, %v486
  %v607 = vpack.c.b16 %v489, %v488
  %v608 = vpack.c.b16 %v491, %v490
  %v609 = vpack.c.b16 %v493, %v492
  %v610 = vpack.c.b16 %v495, %v494
  %v611 = vpack.c.b16 %v497, %v496
  %v612 = vpack.c.b16 %v499, %v498
  %v613 = vpack.c.b16 %v501, %v500
  %v614 = vpack.c.b16 %v503, %v502
  %v615 = vpack.c.b16 %v505, %v504
  %v616 = vpack.c.b16 %v507, %v506
  %v617 = vpack.c.b16 %v509, %v508
  %v618 = vpack.c.b16 %v511, %v510
  %v619 = vpack.c.b16 %v513, %v512
  %v620 = vpack.c.b16 %v515, %v514
  %v621 = vpack.c.b16 %v517, %v516
  %v622 = vpack.c.b16 %v519, %v518
  %v623 = vpack.c.b16 %v521, %v520
  %v624 = vpack.c.b16 %v523, %v522
  %v625 = vpack.c.b16 %v525, %v524
  %v626 = vpack.c.b16 %v527, %v526
  %v627 = vpack.c.b16 %v529, %v528
  %v628 = vpack.c.b16 %v531, %v530
  %v629 = vpack.c.b16 %v533, %v532
  %v630 = vpack.c.b16 %v535, %v534
  %v631 = vpack.c.b16 %v537, %v536
  %v632 = vpack.c.b16 %v539, %v538
  %v633 = vpack.c.b16 %v541, %v540
  %v634 = vpack.c.b16 %v543, %v542
  %v635 = vpack.c.b16 %v545, %v544
  %v636 = vpack.c.b16 %v547, %v546
  %v637 = vpack.c.b16 %v549, %v548
  %v638 = vpack.c.b16 %v551, %v550
  %v639 = vpack.c.b16 %v553, %v552
  %v640 = vpack.c.b16 %v555, %v554
  %v641 = vpack.c.b16 %v557, %v556
  %v642 = vpack.c.b16 %v559, %v558
  %v643 = vpack.c.b16 %v561, %v560
  %v644 = vpack.c.b16 %v563, %v562
  %v645 = vpack.c.b16 %v565, %v564
  %v646 = vpack.c.b16 %v567, %v566
  %v647 = vpack.c.b16 %v569, %v568
  %v648 = vpack.c.b16 %v571, %v570
  %v649 = vpack.c.b16 %v573, %v572
  %v650 = vpack.c.b16 %v575, %v574
  %v651 = vpack.c.b16 %v577, %v576
  %v652 = vpack.c.b16 %v579, %v578
  %v653 = vpack.c.b16 %v581, %v580
  %v654 = vpack.c.b16 %v583, %v582
  %v655 = vpack.c.b16 %v585, %v584
  %v656 = vpack.c.b16 %v587, %v586
  %v657 = vpack.c.b16 %v589, %v588
  %v658 = vpack.c.b16 %v591, %v590
  %v659 = vpack.c.b16 %v593, %v592
  %v660 = vpack.c.b16 %v595, %v594
  %v661 = vpack.c.b16 %v597, %v596
  %726 = vmatprep.subr.bf16.mxu0 0
  %727 = vmatpush1.bf16.msra.mxu0 %v605
  %728 = vmatprep.subr.bf16.mxu0 0
  %729 = vmatpush1.bf16.msra.mxu0 %v604
  %730 = vmatprep.subr.bf16.mxu0 0
  %731 = vmatpush1.bf16.msra.mxu0 %v603
  %732 = vmatprep.subr.bf16.mxu0 0
  %733 = vmatpush1.bf16.msra.mxu0 %v602
  %734 = vmatprep.subr.bf16.mxu0 0
  %735 = vmatpush1.bf16.msra.mxu0 %v601
  %736 = vmatprep.subr.bf16.mxu0 0
  %737 = vmatpush1.bf16.msra.mxu0 %v600
  %738 = vmatprep.subr.bf16.mxu0 0
  %739 = vmatpush1.bf16.msra.mxu0 %v599
  %740 = vmatprep.subr.bf16.mxu0 0
  %741 = vmatpush1.bf16.msra.mxu0 %v598
  %742 = vmatprep.subr.bf16.mxu0 0
  %743 = vmatpush2.bf16.msra.mxu0 %v613
  %744 = vmatprep.subr.bf16.mxu0 0
  %745 = vmatpush2.bf16.msra.mxu0 %v612
  %746 = vmatprep.subr.bf16.mxu0 0
  %747 = vmatpush2.bf16.msra.mxu0 %v611
  %748 = vmatprep.subr.bf16.mxu0 0
  %749 = vmatpush2.bf16.msra.mxu0 %v610
  %750 = vmatprep.subr.bf16.mxu0 0
  %751 = vmatpush2.bf16.msra.mxu0 %v609
  %752 = vmatprep.subr.bf16.mxu0 0
  %753 = vmatpush2.bf16.msra.mxu0 %v608
  %754 = vmatprep.subr.bf16.mxu0 0
  %755 = vmatpush2.bf16.msra.mxu0 %v607
  %756 = vmatprep.subr.bf16.mxu0 0
  %757 = vmatpush2.bf16.msra.mxu0 %v606
  %758 = vmatprep.mubr.bf16.mxu0 %v279
  %759 = vmatmul.mubr.bf16.gmra.mxu0 %v278
  %v760 = vpop.f32.mrf.mxu0
  %v761 = vadd.f32 %v180, %v760
  %v762 = vpop.f32.mrf.mxu0
  %v763 = vpop.f32.mrf.mxu0
  %v764 = vadd.f32 %v180, %v763
  %v765 = vpop.f32.mrf.mxu0
  %766 = vmatprep.mubr.bf16.mxu0 %v287
  %767 = vmatmul.mubr.bf16.gmra.mxu0 %v286
  %v768 = vpop.f32.mrf.mxu0
  %v769 = vadd.f32 %v180, %v768
  %v770 = vpop.f32.mrf.mxu0
  %v771 = vpop.f32.mrf.mxu0
  %v772 = vadd.f32 %v180, %v771
  %v773 = vpop.f32.mrf.mxu0
  %774 = vmatprep.mubr.bf16.mxu0 %v295
  %775 = vmatmul.mubr.bf16.gmra.mxu0 %v294
  %v776 = vpop.f32.mrf.mxu0
  %v777 = vadd.f32 %v180, %v776
  %v778 = vpop.f32.mrf.mxu0
  %v779 = vpop.f32.mrf.mxu0
  %v780 = vadd.f32 %v180, %v779
  %v781 = vpop.f32.mrf.mxu0
  %782 = vmatprep.mubr.bf16.mxu0 %v303
  %783 = vmatmul.mubr.bf16.gmra.mxu0 %v302
  %v784 = vpop.f32.mrf.mxu0
  %v785 = vadd.f32 %v180, %v784
  %v786 = vpop.f32.mrf.mxu0
  %v787 = vpop.f32.mrf.mxu0
  %v788 = vadd.f32 %v180, %v787
  %v789 = vpop.f32.mrf.mxu0
  %790 = vdwg.mxu0
  %791 = vmatprep.subr.bf16.mxu0 0
  %792 = vmatpush1.bf16.msra.mxu0 %v621
  %793 = vmatprep.subr.bf16.mxu0 0
  %794 = vmatpush1.bf16.msra.mxu0 %v620
  %795 = vmatprep.subr.bf16.mxu0 0
  %796 = vmatpush1.bf16.msra.mxu0 %v619
  %797 = vmatprep.subr.bf16.mxu0 0
  %798 = vmatpush1.bf16.msra.mxu0 %v618
  %799 = vmatprep.subr.bf16.mxu0 0
  %800 = vmatpush1.bf16.msra.mxu0 %v617
  %801 = vmatprep.subr.bf16.mxu0 0
  %802 = vmatpush1.bf16.msra.mxu0 %v616
  %803 = vmatprep.subr.bf16.mxu0 0
  %804 = vmatpush1.bf16.msra.mxu0 %v615
  %805 = vmatprep.subr.bf16.mxu0 0
  %806 = vmatpush1.bf16.msra.mxu0 %v614
  %807 = vmatprep.subr.bf16.mxu0 0
  %808 = vmatpush2.bf16.msra.mxu0 %v629
  %809 = vmatprep.subr.bf16.mxu0 0
  %810 = vmatpush2.bf16.msra.mxu0 %v628
  %811 = vmatprep.subr.bf16.mxu0 0
  %812 = vmatpush2.bf16.msra.mxu0 %v627
  %813 = vmatprep.subr.bf16.mxu0 0
  %814 = vmatpush2.bf16.msra.mxu0 %v626
  %815 = vmatprep.subr.bf16.mxu0 0
  %816 = vmatpush2.bf16.msra.mxu0 %v625
  %817 = vmatprep.subr.bf16.mxu0 0
  %818 = vmatpush2.bf16.msra.mxu0 %v624
  %819 = vmatprep.subr.bf16.mxu0 0
  %820 = vmatpush2.bf16.msra.mxu0 %v623
  %821 = vmatprep.subr.bf16.mxu0 0
  %822 = vmatpush2.bf16.msra.mxu0 %v622
  %823 = vmatprep.mubr.bf16.mxu0 %v281
  %824 = vmatmul.mubr.bf16.gmra.mxu0 %v280
  %v825 = vpop.f32.mrf.mxu0
  %v826 = vadd.f32 %v761, %v825
  %v827 = vpop.f32.mrf.mxu0
  %v828 = vpop.f32.mrf.mxu0
  %v829 = vadd.f32 %v764, %v828
  %v830 = vpop.f32.mrf.mxu0
  %831 = vmatprep.mubr.bf16.mxu0 %v289
  %832 = vmatmul.mubr.bf16.gmra.mxu0 %v288
  %v833 = vpop.f32.mrf.mxu0
  %v834 = vadd.f32 %v769, %v833
  %v835 = vpop.f32.mrf.mxu0
  %v836 = vpop.f32.mrf.mxu0
  %v837 = vadd.f32 %v772, %v836
  %v838 = vpop.f32.mrf.mxu0
  %839 = vmatprep.mubr.bf16.mxu0 %v297
  %840 = vmatmul.mubr.bf16.gmra.mxu0 %v296
  %v841 = vpop.f32.mrf.mxu0
  %v842 = vadd.f32 %v777, %v841
  %v843 = vpop.f32.mrf.mxu0
  %v844 = vpop.f32.mrf.mxu0
  %v845 = vadd.f32 %v780, %v844
  %v846 = vpop.f32.mrf.mxu0
  %847 = vmatprep.mubr.bf16.mxu0 %v305
  %848 = vmatmul.mubr.bf16.gmra.mxu0 %v304
  %v849 = vpop.f32.mrf.mxu0
  %v850 = vadd.f32 %v785, %v849
  %v851 = vpop.f32.mrf.mxu0
  %v852 = vpop.f32.mrf.mxu0
  %v853 = vadd.f32 %v788, %v852
  %v854 = vpop.f32.mrf.mxu0
  %855 = vdwg.mxu0
  %856 = vmatprep.subr.bf16.mxu0 0
  %857 = vmatpush1.bf16.msra.mxu0 %v637
  %858 = vmatprep.subr.bf16.mxu0 0
  %859 = vmatpush1.bf16.msra.mxu0 %v636
  %860 = vmatprep.subr.bf16.mxu0 0
  %861 = vmatpush1.bf16.msra.mxu0 %v635
  %862 = vmatprep.subr.bf16.mxu0 0
  %863 = vmatpush1.bf16.msra.mxu0 %v634
  %864 = vmatprep.subr.bf16.mxu0 0
  %865 = vmatpush1.bf16.msra.mxu0 %v633
  %866 = vmatprep.subr.bf16.mxu0 0
  %867 = vmatpush1.bf16.msra.mxu0 %v632
  %868 = vmatprep.subr.bf16.mxu0 0
  %869 = vmatpush1.bf16.msra.mxu0 %v631
  %870 = vmatprep.subr.bf16.mxu0 0
  %871 = vmatpush1.bf16.msra.mxu0 %v630
  %872 = vmatprep.subr.bf16.mxu0 0
  %873 = vmatpush2.bf16.msra.mxu0 %v645
  %874 = vmatprep.subr.bf16.mxu0 0
  %875 = vmatpush2.bf16.msra.mxu0 %v644
  %876 = vmatprep.subr.bf16.mxu0 0
  %877 = vmatpush2.bf16.msra.mxu0 %v643
  %878 = vmatprep.subr.bf16.mxu0 0
  %879 = vmatpush2.bf16.msra.mxu0 %v642
  %880 = vmatprep.subr.bf16.mxu0 0
  %881 = vmatpush2.bf16.msra.mxu0 %v641
  %882 = vmatprep.subr.bf16.mxu0 0
  %883 = vmatpush2.bf16.msra.mxu0 %v640
  %884 = vmatprep.subr.bf16.mxu0 0
  %885 = vmatpush2.bf16.msra.mxu0 %v639
  %886 = vmatprep.subr.bf16.mxu0 0
  %887 = vmatpush2.bf16.msra.mxu0 %v638
  %888 = vmatprep.mubr.bf16.mxu0 %v283
  %889 = vmatmul.mubr.bf16.gmra.mxu0 %v282
  %v890 = vpop.f32.mrf.mxu0
  %v891 = vadd.f32 %v826, %v890
  %v892 = vpop.f32.mrf.mxu0
  %v893 = vpop.f32.mrf.mxu0
  %v894 = vadd.f32 %v829, %v893
  %v895 = vpop.f32.mrf.mxu0
  %896 = vmatprep.mubr.bf16.mxu0 %v291
  %897 = vmatmul.mubr.bf16.gmra.mxu0 %v290
  %v898 = vpop.f32.mrf.mxu0
  %v899 = vadd.f32 %v834, %v898
  %v900 = vpop.f32.mrf.mxu0
  %v901 = vpop.f32.mrf.mxu0
  %v902 = vadd.f32 %v837, %v901
  %v903 = vpop.f32.mrf.mxu0
  %904 = vmatprep.mubr.bf16.mxu0 %v299
  %905 = vmatmul.mubr.bf16.gmra.mxu0 %v298
  %v906 = vpop.f32.mrf.mxu0
  %v907 = vadd.f32 %v842, %v906
  %v908 = vpop.f32.mrf.mxu0
  %v909 = vpop.f32.mrf.mxu0
  %v910 = vadd.f32 %v845, %v909
  %v911 = vpop.f32.mrf.mxu0
  %912 = vmatprep.mubr.bf16.mxu0 %v307
  %913 = vmatmul.mubr.bf16.gmra.mxu0 %v306
  %v914 = vpop.f32.mrf.mxu0
  %v915 = vadd.f32 %v850, %v914
  %v916 = vpop.f32.mrf.mxu0
  %v917 = vpop.f32.mrf.mxu0
  %v918 = vadd.f32 %v853, %v917
  %v919 = vpop.f32.mrf.mxu0
  %920 = vdwg.mxu0
  %921 = vmatprep.subr.bf16.mxu0 0
  %922 = vmatpush1.bf16.msra.mxu0 %v653
  %923 = vmatprep.subr.bf16.mxu0 0
  %924 = vmatpush1.bf16.msra.mxu0 %v652
  %925 = vmatprep.subr.bf16.mxu0 0
  %926 = vmatpush1.bf16.msra.mxu0 %v651
  %927 = vmatprep.subr.bf16.mxu0 0
  %928 = vmatpush1.bf16.msra.mxu0 %v650
  %929 = vmatprep.subr.bf16.mxu0 0
  %930 = vmatpush1.bf16.msra.mxu0 %v649
  %931 = vmatprep.subr.bf16.mxu0 0
  %932 = vmatpush1.bf16.msra.mxu0 %v648
  %933 = vmatprep.subr.bf16.mxu0 0
  %934 = vmatpush1.bf16.msra.mxu0 %v647
  %935 = vmatprep.subr.bf16.mxu0 0
  %936 = vmatpush1.bf16.msra.mxu0 %v646
  %937 = vmatprep.subr.bf16.mxu0 0
  %938 = vmatpush2.bf16.msra.mxu0 %v661
  %939 = vmatprep.subr.bf16.mxu0 0
  %940 = vmatpush2.bf16.msra.mxu0 %v660
  %941 = vmatprep.subr.bf16.mxu0 0
  %942 = vmatpush2.bf16.msra.mxu0 %v659
  %943 = vmatprep.subr.bf16.mxu0 0
  %944 = vmatpush2.bf16.msra.mxu0 %v658
  %945 = vmatprep.subr.bf16.mxu0 0
  %946 = vmatpush2.bf16.msra.mxu0 %v657
  %947 = vmatprep.subr.bf16.mxu0 0
  %948 = vmatpush2.bf16.msra.mxu0 %v656
  %949 = vmatprep.subr.bf16.mxu0 0
  %950 = vmatpush2.bf16.msra.mxu0 %v655
  %951 = vmatprep.subr.bf16.mxu0 0
  %952 = vmatpush2.bf16.msra.mxu0 %v654
  %953 = vmatprep.mubr.bf16.mxu0 %v285
  %954 = vmatmul.mubr.bf16.gmra.mxu0 %v284
  %v955 = vpop.f32.mrf.mxu0
  %v956 = vadd.f32 %v891, %v955
  %v957 = vpop.f32.mrf.mxu0
  %v958 = vpop.f32.mrf.mxu0
  %v959 = vadd.f32 %v894, %v958
  %v960 = vpop.f32.mrf.mxu0
  %961 = vmatprep.mubr.bf16.mxu0 %v293
  %962 = vmatmul.mubr.bf16.gmra.mxu0 %v292
  %v963 = vpop.f32.mrf.mxu0
  %v964 = vadd.f32 %v899, %v963
  %v965 = vpop.f32.mrf.mxu0
  %v966 = vpop.f32.mrf.mxu0
  %v967 = vadd.f32 %v902, %v966
  %v968 = vpop.f32.mrf.mxu0
  %969 = vmatprep.mubr.bf16.mxu0 %v301
  %970 = vmatmul.mubr.bf16.gmra.mxu0 %v300
  %v971 = vpop.f32.mrf.mxu0
  %v972 = vadd.f32 %v907, %v971
  %v973 = vpop.f32.mrf.mxu0
  %v974 = vpop.f32.mrf.mxu0
  %v975 = vadd.f32 %v910, %v974
  %v976 = vpop.f32.mrf.mxu0
  %977 = vmatprep.mubr.bf16.mxu0 %v309
  %978 = vmatmul.mubr.bf16.gmra.mxu0 %v308
  %v979 = vpop.f32.mrf.mxu0
  %v980 = vadd.f32 %v915, %v979
  %v981 = vpop.f32.mrf.mxu0
  %v982 = vpop.f32.mrf.mxu0
  %v983 = vadd.f32 %v918, %v982
  %v984 = vpop.f32.mrf.mxu0
  %985 = vdwg.mxu0
  %986 = vst [vmem:[%s3] sm:$0xff] %v956
  %987 = vst [vmem:[%s3 + $0x8] sm:$0xff] %v959
  %988 = vst [vmem:[%s3 + $0x10] sm:$0xff] %v964
  %989 = vst [vmem:[%s3 + $0x18] sm:$0xff] %v967
  %990 = vst [vmem:[%s3 + $0x20] sm:$0xff] %v972
  %991 = vst [vmem:[%s3 + $0x28] sm:$0xff] %v975
  %992 = vst [vmem:[%s3 + $0x30] sm:$0xff] %v980
  %993 = vst [vmem:[%s3 + $0x38] sm:$0xff] %v983
  // Predicated region
  $region14: #{classifier_forward.7} parent=0 // pred_check
    _
  $region15: #{classifier_forward.7} parent=0 // pred_check_branch
    %995 = sbr.rel (0) target = $region17
  $region16: #{classifier_forward.7} parent=0 // pred_region
    _
  $region17: #{classifier_forward.7} parent=0 // pred_fallthru
    _
  // Predicated region
  $region18: #{classifier_forward.7} parent=0 // pred_check
    _
  $region19: #{classifier_forward.7} parent=0 // pred_check_branch
    %997 = sbr.rel (0) target = $region21
  $region20: #{classifier_forward.7} parent=0 // pred_region
    _
  $region21: #{classifier_forward.7} parent=0 // pred_fallthru
    _

</llo_original>
